<compile_context>
chip_gen: v7x
topology: tpu7x:2x2x1
jax: 0.10.0
libtpu: 0.0.40
codegen_flags: <defaults>
</compile_context>

<pallas_src>
import functools

import jax
import jax.numpy as jnp
from jax.experimental import pallas as pl
from jax.experimental.pallas import tpu as pltpu

_LANES = 128
# True : 3 accumulating matmuls per conv with K = 3*C (good for v6e / v7x 256-deep MXU).
# False: 9 per-tap matmuls with K = C and zero concat staging (best on v5e 128-deep MXU).
_GROUP_KW_TAPS = True


def _round_up(x, m):
    return ((x + m - 1) // m) * m


def _pick_row_tile(h, target=32):
    best = 2
    for t in range(2, min(h, target) + 1, 2):
        if h % t == 0:
            best = t
    return best


def down_sample(x_nchw, w1, b1, w2, b2, *, row_tile=None, out_dtype=jnp.float32):
    """DoubleConv(3x3 pad=1, ReLU) x2 -> MaxPool2d(2,2).

    x_nchw: (B, Cin, H, W).  w1: (3,3,Cin,Cout) HWIO.  w2: (3,3,Cout,Cout) HWIO.
    Returns (down, pool) in NCHW: (B,Cout,H,W), (B,Cout,H/2,W/2).
    """
    B, Cin, H, W = x_nchw.shape
    Cout = w1.shape[-1]
    assert H % 2 == 0 and W % 2 == 0, "MaxPool2d(2,2) needs even H, W"
    T = row_tile if row_tile is not None else _pick_row_tile(H)
    assert T % 2 == 0 and H % T == 0, "row tile must be even and divide H"
    nT = H // T
    Ho, Wo, Ho_t = H // 2, W // 2, T // 2

    Cin_p = _round_up(Cin, _LANES)
    Cout_p = _round_up(Cout, _LANES)
    Wf = _round_up(W + 4, 8)           # padded slab width: 2-col halo each side, 8-aligned

    LIN = (T + 4) * Wf                 # per-tile input rows  (flattened (row, col))
    L1 = (T + 2) * Wf                  # conv1 / staging rows (tile rows + 2 halo rows)
    L2 = T * Wf                        # conv2 rows

    # ---- wrapper glue: NCHW -> flat, spatially padded NHWC; bf16 operands; 128-lane channels
    x_nhwc = jnp.transpose(x_nchw, (0, 2, 3, 1)).astype(jnp.float32)
    xp = jnp.pad(x_nhwc, ((0, 0), (2, 2), (2, Wf - W - 2), (0, Cin_p - Cin)))
    xflat = xp.astype(jnp.bfloat16).reshape(B * (H + 4) * Wf, Cin_p)

    w1p = jnp.pad(w1.astype(jnp.float32),
                  ((0, 0), (0, 0), (0, Cin_p - Cin), (0, Cout_p - Cout))).astype(jnp.bfloat16)
    w2p = jnp.pad(w2.astype(jnp.float32),
                  ((0, 0), (0, 0), (0, Cout_p - Cout), (0, Cout_p - Cout))).astype(jnp.bfloat16)
    if _GROUP_KW_TAPS:
        w1k = w1p.reshape(3, 3 * Cin_p, Cout_p)       # [kh] -> K ordered (kw, ci)
        w2k = w2p.reshape(3, 3 * Cout_p, Cout_p)
    else:
        w1k = w1p.reshape(9, Cin_p, Cout_p)           # [kh*3 + kw]
        w2k = w2p.reshape(9, Cout_p, Cout_p)
    b1p = jnp.pad(b1.astype(jnp.float32), (0, Cout_p - Cout)).reshape(1, Cout_p)
    b2p = jnp.pad(b2.astype(jnp.float32), (0, Cout_p - Cout)).reshape(1, Cout_p)

    # staging column mask: column c of the width-Wf slab is a real conv1 column iff 1 <= c <= W
    col = jnp.arange(L1, dtype=jnp.int32) % Wf
    cmask = ((col >= 1) & (col <= W)).astype(jnp.float32).reshape(L1, 1)

    def kernel(x_hbm, w1_ref, b1_ref, w2_ref, b2_ref, cm_ref,
               down_ref, pool_ref, xin_ref, h1p_ref, sem):
        b = pl.program_id(0)
        t = pl.program_id(1)

        # ---- fetch this tile's (T+4)-row halo window of the padded input (manual DMA) ----
        start = pl.multiple_of(b * ((H + 4) * Wf) + t * (T * Wf), 8)
        cp = pltpu.make_async_copy(x_hbm.at[pl.ds(start, LIN), :],
                                   xin_ref.at[pl.ds(0, LIN), :], sem)
        cp.start()
        cp.wait()
        # zero the small tails touched by the shifted tap reads (keeps them deterministic)
        xin_ref[pl.ds(LIN, 8), :] = jnp.zeros((8, Cin_p), xin_ref.dtype)
        h1p_ref[pl.ds(L1, 8), :] = jnp.zeros((8, Cout_p), h1p_ref.dtype)

        def conv3x3(src_ref, w_ref, rows):
            acc = jnp.zeros((rows, Cout_p), jnp.float32)
            if _GROUP_KW_TAPS:
                for kh in range(3):
                    patch = jnp.concatenate(
                        [src_ref[pl.ds(kh * Wf + kw, rows), :] for kw in range(3)], axis=-1)
                    acc = acc + jnp.dot(patch, w_ref[kh],
                                        preferred_element_type=jnp.float32)
            else:
                for kh in range(3):
                    for kw in range(3):
                        acc = acc + jnp.dot(src_ref[pl.ds(kh * Wf + kw, rows), :],
                                            w_ref[kh * 3 + kw],
                                            preferred_element_type=jnp.float32)
            return acc

        # ---- conv1 over tile rows + 2 halo rows, full padded width; bias + ReLU ----
        h1 = jnp.maximum(conv3x3(xin_ref, w1_ref, L1) + b1_ref[...], 0.0)
        # zero junk columns (conv2's left/right zero padding) -- where() kills any junk value
        h1 = jnp.where(cm_ref[...] > 0.5, h1, 0.0)
        h1p_ref[pl.ds(0, L1), :] = h1.astype(h1p_ref.dtype)       # one aligned full-slab store

        # conv2's top / bottom zero padding (only the image-boundary tiles)
        @pl.when(t == 0)
        def _():
            h1p_ref[pl.ds(0, Wf), :] = jnp.zeros((Wf, Cout_p), h1p_ref.dtype)

        @pl.when(t == nT - 1)
        def _():
            h1p_ref[pl.ds((T + 1) * Wf, Wf), :] = jnp.zeros((Wf, Cout_p), h1p_ref.dtype)

        # ---- conv2 + bias + ReLU -> `down` (lane-dense block store of the valid columns) ----
        d = jnp.maximum(conv3x3(h1p_ref, w2_ref, L2) + b2_ref[...], 0.0)   # (L2, Cout_p) f32
        d = d.reshape(T, Wf, Cout_p)[:, 0:W, :]
        down_ref[...] = d.reshape(1, T, W, Cout_p).astype(down_ref.dtype)

        # ---- MaxPool2d(2,2): W via stride-2 reads of the live down block, H via pair max ----
        dview = down_ref.at[0]                                     # (T, W, Cout_p) view
        wm = jnp.maximum(dview[:, pl.ds(0, Wo, 2), :],
                         dview[:, pl.ds(1, Wo, 2), :])             # (T, Wo, Cout_p)
        wm = wm.reshape(Ho_t, 2, Wo, Cout_p)
        pool = jnp.maximum(wm[:, 0], wm[:, 1])                     # (Ho_t, Wo, Cout_p)
        pool_ref[...] = pool.reshape(1, Ho_t, Wo, Cout_p).astype(pool_ref.dtype)

    grid_spec = pltpu.PrefetchScalarGridSpec(
        num_scalar_prefetch=0,
        grid=(B, nT),
        in_specs=[
            pl.BlockSpec(memory_space=pl.ANY),                       # padded input stays in HBM
            pl.BlockSpec(w1k.shape, lambda b, t: (0, 0, 0)),
            pl.BlockSpec((1, Cout_p), lambda b, t: (0, 0)),
            pl.BlockSpec(w2k.shape, lambda b, t: (0, 0, 0)),
            pl.BlockSpec((1, Cout_p), lambda b, t: (0, 0)),
            pl.BlockSpec((L1, 1), lambda b, t: (0, 0)),
        ],
        out_specs=[
            pl.BlockSpec((1, T, W, Cout_p), lambda b, t: (b, t, 0, 0)),
            pl.BlockSpec((1, Ho_t, Wo, Cout_p), lambda b, t: (b, t, 0, 0)),
        ],
        scratch_shapes=[
            pltpu.VMEM((LIN + 8, Cin_p), jnp.bfloat16),   # per-tile input slab (+ zero tail)
            pltpu.VMEM((L1 + 8, Cout_p), jnp.bfloat16),   # ReLU(conv1) staging (+ zero tail)
            pltpu.SemaphoreType.DMA(()),
        ],
    )

    down_p, pool_p = pl.pallas_call(
        kernel,
        out_shape=(jax.ShapeDtypeStruct((B, H, W, Cout_p), out_dtype),
                   jax.ShapeDtypeStruct((B, Ho, Wo, Cout_p), out_dtype)),
        grid_spec=grid_spec,
        compiler_params=pltpu.CompilerParams(
            dimension_semantics=("parallel", "parallel"),
            vmem_limit_bytes=48 * 1024 * 1024),
    )(xflat, w1k, b1p, w2k, b2p, cmask)

    down = jnp.transpose(down_p[..., :Cout], (0, 3, 1, 2))
    pool = jnp.transpose(pool_p[..., :Cout], (0, 3, 1, 2))
    return down, pool


def ref_down_sample(x_nchw, w1, b1, w2, b2):
    """Pure-JAX reference mirroring the kernel's precision policy:
    bf16 conv operands (input / weights / inter-conv activation), f32 accumulation."""
    def bf(t):
        return t.astype(jnp.bfloat16).astype(jnp.float32)

    x = jnp.transpose(x_nchw, (0, 2, 3, 1)).astype(jnp.float32)
    dn = ('NHWC', 'HWIO', 'NHWC')
    h = jax.lax.conv_general_dilated(bf(x), bf(w1), (1, 1), 'SAME', dimension_numbers=dn,
                                     precision=jax.lax.Precision.HIGHEST)
    h = jnp.maximum(h + b1.reshape(1, 1, 1, -1).astype(jnp.float32), 0.0)
    h = jax.lax.conv_general_dilated(bf(h), bf(w2), (1, 1), 'SAME', dimension_numbers=dn,
                                     precision=jax.lax.Precision.HIGHEST)
    down = jnp.maximum(h + b2.reshape(1, 1, 1, -1).astype(jnp.float32), 0.0)
    pool = jax.lax.reduce_window(down, -jnp.inf, jax.lax.max,
                                 (1, 2, 2, 1), (1, 2, 2, 1), 'VALID')
    return (jnp.transpose(down, (0, 3, 1, 2)), jnp.transpose(pool, (0, 3, 1, 2)))


if __name__ == "__main__":
    B, Cin, Cout, H, W = 2, 4, 8, 16, 16

    key = jax.random.PRNGKey(0)
    kx, kw1, kb1, kw2, kb2 = jax.random.split(key, 5)

    def bfr(t):   # round to bf16 so the kernel's bf16 operand cast is lossless
        return t.astype(jnp.bfloat16).astype(jnp.float32)

    x = bfr(jax.random.normal(kx, (B, Cin, H, W), jnp.float32))
    w1 = bfr(0.1 * jax.random.normal(kw1, (3, 3, Cin, Cout), jnp.float32))   # HWIO
    b1 = 0.1 * jax.random.normal(kb1, (Cout,), jnp.float32)
    w2 = bfr(0.1 * jax.random.normal(kw2, (3, 3, Cout, Cout), jnp.float32))
    b2 = 0.1 * jax.random.normal(kb2, (Cout,), jnp.float32)

    # row_tile=8 -> 2 row tiles per image: exercises the halo recompute AND both boundary tiles
    fn = jax.jit(functools.partial(down_sample, row_tile=8))
    down, pool = fn(x, w1, b1, w2, b2)
    jax.block_until_ready((down, pool))

    ref_down, ref_pool = ref_down_sample(x, w1, b1, w2, b2)
    assert down.shape == (B, Cout, H, W) and pool.shape == (B, Cout, H // 2, W // 2)
    assert jnp.allclose(down, ref_down, rtol=2e-3, atol=3e-3), \
        float(jnp.max(jnp.abs(down - ref_down)))
    assert jnp.allclose(pool, ref_pool, rtol=2e-3, atol=3e-3), \
        float(jnp.max(jnp.abs(pool - ref_pool)))

    print("KERNEL_OK")
</pallas_src>

<mosaic_0001>
module attributes {stable_mosaic.version = 11 : i64} {
  func.func @kernel(%arg0: i32, %arg1: i32, %arg2: memref<960x128xbf16, #tpu.memory_space<any>>, %arg3: memref<3x384x128xbf16, #tpu.memory_space<vmem>>, %arg4: memref<1x128xf32, #tpu.memory_space<vmem>>, %arg5: memref<3x384x128xbf16, #tpu.memory_space<vmem>>, %arg6: memref<1x128xf32, #tpu.memory_space<vmem>>, %arg7: memref<240x1xf32, #tpu.memory_space<vmem>>, %arg8: memref<1x8x16x128xf32, #tpu.memory_space<vmem>>, %arg9: memref<1x4x8x128xf32, #tpu.memory_space<vmem>>, %arg10: memref<296x128xbf16, #tpu.memory_space<vmem>>, %arg11: memref<248x128xbf16, #tpu.memory_space<vmem>>, %arg12: memref<!tpu.dma_semaphore, #tpu.memory_space<semaphore_mem>>) attributes {dimension_semantics = [#tpu.dimension_semantics<parallel>, #tpu.dimension_semantics<parallel>], iteration_bounds = array<i64: 2, 2>, scalar_prefetch = 0 : i64, scratch_operands = 3 : i64, tpu.core_type = #tpu.core_type<tc>, window_params = [{}, {pipeline_mode = #tpu.pipeline_mode<synchronous>, transform_indices = @transform_1, window_bounds = array<i64: 3, 384, 128>}, {pipeline_mode = #tpu.pipeline_mode<synchronous>, transform_indices = @transform_2, window_bounds = array<i64: 1, 128>}, {pipeline_mode = #tpu.pipeline_mode<synchronous>, transform_indices = @transform_3, window_bounds = array<i64: 3, 384, 128>}, {pipeline_mode = #tpu.pipeline_mode<synchronous>, transform_indices = @transform_4, window_bounds = array<i64: 1, 128>}, {pipeline_mode = #tpu.pipeline_mode<synchronous>, transform_indices = @transform_5, window_bounds = array<i64: 240, 1>}, {transform_indices = @transform_6, window_bounds = array<i64: 1, 8, 16, 128>}, {transform_indices = @transform_7, window_bounds = array<i64: 1, 4, 8, 128>}]} {
    %c480_i32 = arith.constant 480 : i32
    %0 = arith.muli %arg0, %c480_i32 : i32
    %c192_i32 = arith.constant 192 : i32
    %1 = arith.muli %arg1, %c192_i32 : i32
    %2 = arith.addi %0, %1 : i32
    %3 = tpu.assume_multiple %2, 8 : i32
    %c0_i32 = arith.constant 0 : i32
    %4 = tpu.memref_slice %arg2[%3, %c0_i32] : memref<960x128xbf16, #tpu.memory_space<any>> -> memref<288x128xbf16, #tpu.memory_space<any>>
    %c0_i32_0 = arith.constant 0 : i32
    %c0_i32_1 = arith.constant 0 : i32
    %5 = tpu.memref_slice %arg10[%c0_i32_0, %c0_i32_1] : memref<296x128xbf16, #tpu.memory_space<vmem>> -> memref<288x128xbf16, #tpu.memory_space<vmem>>
    tpu.enqueue_dma source(%4 : memref<288x128xbf16, #tpu.memory_space<any>>) target(%5 : memref<288x128xbf16, #tpu.memory_space<vmem>>) target_semaphore(%arg12 : memref<!tpu.dma_semaphore, #tpu.memory_space<semaphore_mem>>)
    %c0_i32_2 = arith.constant 0 : i32
    %6 = tpu.memref_slice %arg2[%3, %c0_i32_2] : memref<960x128xbf16, #tpu.memory_space<any>> -> memref<288x128xbf16, #tpu.memory_space<any>>
    %c0_i32_3 = arith.constant 0 : i32
    %c0_i32_4 = arith.constant 0 : i32
    %7 = tpu.memref_slice %arg10[%c0_i32_3, %c0_i32_4] : memref<296x128xbf16, #tpu.memory_space<vmem>> -> memref<288x128xbf16, #tpu.memory_space<vmem>>
    tpu.wait_dma2 semaphore(%arg12 : memref<!tpu.dma_semaphore, #tpu.memory_space<semaphore_mem>>) src(%6 : memref<288x128xbf16, #tpu.memory_space<any>>) dst(%7 : memref<288x128xbf16, #tpu.memory_space<vmem>>)
    %cst = arith.constant 0.000000e+00 : bf16
    %8 = vector.broadcast %cst : bf16 to vector<8x128xbf16>
    %c288 = arith.constant 288 : index
    %c0 = arith.constant 0 : index
    %9 = vector.load %arg10[%c288, %c0] : memref<296x128xbf16, #tpu.memory_space<vmem>>, vector<8x128xbf16>
    tpu.vector_store %arg10[%c288, %c0], %8 {strides = array<i32>} : memref<296x128xbf16, #tpu.memory_space<vmem>>, vector<8x128xbf16>,
    %cst_5 = arith.constant 0.000000e+00 : bf16
    %10 = vector.broadcast %cst_5 : bf16 to vector<8x128xbf16>
    %c240 = arith.constant 240 : index
    %c0_6 = arith.constant 0 : index
    %11 = vector.load %arg11[%c240, %c0_6] : memref<248x128xbf16, #tpu.memory_space<vmem>>, vector<8x128xbf16>
    tpu.vector_store %arg11[%c240, %c0_6], %10 {strides = array<i32>} : memref<248x128xbf16, #tpu.memory_space<vmem>>, vector<8x128xbf16>,
    %cst_7 = arith.constant 0.000000e+00 : f32
    %12 = vector.broadcast %cst_7 : f32 to vector<240x128xf32>
    %c0_8 = arith.constant 0 : index
    %c0_9 = arith.constant 0 : index
    %13 = vector.load %arg10[%c0_8, %c0_9] : memref<296x128xbf16, #tpu.memory_space<vmem>>, vector<240x128xbf16>
    %c1 = arith.constant 1 : index
    %c0_10 = arith.constant 0 : index
    %14 = vector.load %arg10[%c1, %c0_10] : memref<296x128xbf16, #tpu.memory_space<vmem>>, vector<240x128xbf16>
    %c2 = arith.constant 2 : index
    %c0_11 = arith.constant 0 : index
    %15 = vector.load %arg10[%c2, %c0_11] : memref<296x128xbf16, #tpu.memory_space<vmem>>, vector<240x128xbf16>
    %16 = tpu.concatenate %13, %14, %15 in 1 : vector<240x128xbf16>, vector<240x128xbf16>, vector<240x128xbf16> -> vector<240x384xbf16>
    %c0_12 = arith.constant 0 : index
    %c0_13 = arith.constant 0 : index
    %c0_14 = arith.constant 0 : index
    %17 = vector.load %arg3[%c0_12, %c0_13, %c0_14] : memref<3x384x128xbf16, #tpu.memory_space<vmem>>, vector<1x384x128xbf16>
    %18 = vector.shape_cast %17 : vector<1x384x128xbf16> to vector<384x128xbf16>
    %cst_15 = arith.constant dense<0.000000e+00> : vector<240x128xf32>
    %19 = tpu.matmul %16, %18, %cst_15 {dimension_numbers = #tpu.dot_dimension_numbers<[1], [0], [0], [1], [0, 0, 1, 1], [], []>} : vector<240x384xbf16>, vector<384x128xbf16>, vector<240x128xf32> -> vector<240x128xf32>
    %20 = arith.addf %12, %19 : vector<240x128xf32>
    %c24 = arith.constant 24 : index
    %c0_16 = arith.constant 0 : index
    %21 = vector.load %arg10[%c24, %c0_16] : memref<296x128xbf16, #tpu.memory_space<vmem>>, vector<240x128xbf16>
    %c25 = arith.constant 25 : index
    %c0_17 = arith.constant 0 : index
    %22 = vector.load %arg10[%c25, %c0_17] : memref<296x128xbf16, #tpu.memory_space<vmem>>, vector<240x128xbf16>
    %c26 = arith.constant 26 : index
    %c0_18 = arith.constant 0 : index
    %23 = vector.load %arg10[%c26, %c0_18] : memref<296x128xbf16, #tpu.memory_space<vmem>>, vector<240x128xbf16>
    %24 = tpu.concatenate %21, %22, %23 in 1 : vector<240x128xbf16>, vector<240x128xbf16>, vector<240x128xbf16> -> vector<240x384xbf16>
    %c1_19 = arith.constant 1 : index
    %c0_20 = arith.constant 0 : index
    %c0_21 = arith.constant 0 : index
    %25 = vector.load %arg3[%c1_19, %c0_20, %c0_21] : memref<3x384x128xbf16, #tpu.memory_space<vmem>>, vector<1x384x128xbf16>
    %26 = vector.shape_cast %25 : vector<1x384x128xbf16> to vector<384x128xbf16>
    %cst_22 = arith.constant dense<0.000000e+00> : vector<240x128xf32>
    %27 = tpu.matmul %24, %26, %cst_22 {dimension_numbers = #tpu.dot_dimension_numbers<[1], [0], [0], [1], [0, 0, 1, 1], [], []>} : vector<240x384xbf16>, vector<384x128xbf16>, vector<240x128xf32> -> vector<240x128xf32>
    %28 = arith.addf %20, %27 : vector<240x128xf32>
    %c48 = arith.constant 48 : index
    %c0_23 = arith.constant 0 : index
    %29 = vector.load %arg10[%c48, %c0_23] : memref<296x128xbf16, #tpu.memory_space<vmem>>, vector<240x128xbf16>
    %c49 = arith.constant 49 : index
    %c0_24 = arith.constant 0 : index
    %30 = vector.load %arg10[%c49, %c0_24] : memref<296x128xbf16, #tpu.memory_space<vmem>>, vector<240x128xbf16>
    %c50 = arith.constant 50 : index
    %c0_25 = arith.constant 0 : index
    %31 = vector.load %arg10[%c50, %c0_25] : memref<296x128xbf16, #tpu.memory_space<vmem>>, vector<240x128xbf16>
    %32 = tpu.concatenate %29, %30, %31 in 1 : vector<240x128xbf16>, vector<240x128xbf16>, vector<240x128xbf16> -> vector<240x384xbf16>
    %c2_26 = arith.constant 2 : index
    %c0_27 = arith.constant 0 : index
    %c0_28 = arith.constant 0 : index
    %33 = vector.load %arg3[%c2_26, %c0_27, %c0_28] : memref<3x384x128xbf16, #tpu.memory_space<vmem>>, vector<1x384x128xbf16>
    %34 = vector.shape_cast %33 : vector<1x384x128xbf16> to vector<384x128xbf16>
    %cst_29 = arith.constant dense<0.000000e+00> : vector<240x128xf32>
    %35 = tpu.matmul %32, %34, %cst_29 {dimension_numbers = #tpu.dot_dimension_numbers<[1], [0], [0], [1], [0, 0, 1, 1], [], []>} : vector<240x384xbf16>, vector<384x128xbf16>, vector<240x128xf32> -> vector<240x128xf32>
    %36 = arith.addf %28, %35 : vector<240x128xf32>
    %c0_30 = arith.constant 0 : index
    %c0_31 = arith.constant 0 : index
    %37 = vector.load %arg4[%c0_30, %c0_31] : memref<1x128xf32, #tpu.memory_space<vmem>>, vector<1x128xf32>
    %38 = vector.broadcast %37 : vector<1x128xf32> to vector<240x128xf32>
    %39 = arith.addf %36, %38 : vector<240x128xf32>
    %cst_32 = arith.constant 0.000000e+00 : f32
    %40 = vector.broadcast %cst_32 : f32 to vector<240x128xf32>
    %41 = arith.maximumf %39, %40 : vector<240x128xf32>
    %c0_33 = arith.constant 0 : index
    %c0_34 = arith.constant 0 : index
    %42 = vector.load %arg7[%c0_33, %c0_34] : memref<240x1xf32, #tpu.memory_space<vmem>>, vector<240x1xf32>
    %cst_35 = arith.constant 5.000000e-01 : f32
    %43 = vector.broadcast %cst_35 : f32 to vector<240x1xf32>
    %44 = arith.cmpf ogt, %42, %43 : vector<240x1xf32>
    %cst_36 = arith.constant 0.000000e+00 : f32
    %45 = vector.shape_cast %44 : vector<240x1xi1> to vector<240x1xi1>
    %46 = vector.broadcast %45 : vector<240x1xi1> to vector<240x128xi1>
    %47 = vector.broadcast %cst_36 : f32 to vector<240x128xf32>
    %48 = arith.select %46, %41, %47 : vector<240x128xi1>, vector<240x128xf32>
    %49 = arith.truncf %48 : vector<240x128xf32> to vector<240x128xbf16>
    %c0_37 = arith.constant 0 : index
    %c0_38 = arith.constant 0 : index
    %50 = vector.load %arg11[%c0_37, %c0_38] : memref<248x128xbf16, #tpu.memory_space<vmem>>, vector<240x128xbf16>
    tpu.vector_store %arg11[%c0_37, %c0_38], %49 {strides = array<i32>} : memref<248x128xbf16, #tpu.memory_space<vmem>>, vector<240x128xbf16>,
    %c0_i32_39 = arith.constant 0 : i32
    %51 = arith.cmpi eq, %arg1, %c0_i32_39 : i32
    %52 = arith.extui %51 : i1 to i32
    %c0_i32_40 = arith.constant 0 : i32
    %53 = arith.cmpi ne, %52, %c0_i32_40 : i32
    scf.if %53 {
      %cst_98 = arith.constant 0.000000e+00 : bf16
      %106 = vector.broadcast %cst_98 : bf16 to vector<24x128xbf16>
      %c0_99 = arith.constant 0 : index
      %c0_100 = arith.constant 0 : index
      %107 = vector.load %arg11[%c0_99, %c0_100] : memref<248x128xbf16, #tpu.memory_space<vmem>>, vector<24x128xbf16>
      tpu.vector_store %arg11[%c0_99, %c0_100], %106 {strides = array<i32>} : memref<248x128xbf16, #tpu.memory_space<vmem>>, vector<24x128xbf16>,
    } else {
    }
    %c1_i32 = arith.constant 1 : i32
    %54 = arith.cmpi eq, %arg1, %c1_i32 : i32
    %55 = arith.extui %54 : i1 to i32
    %c0_i32_41 = arith.constant 0 : i32
    %56 = arith.cmpi ne, %55, %c0_i32_41 : i32
    scf.if %56 {
      %cst_98 = arith.constant 0.000000e+00 : bf16
      %106 = vector.broadcast %cst_98 : bf16 to vector<24x128xbf16>
      %c216 = arith.constant 216 : index
      %c0_99 = arith.constant 0 : index
      %107 = vector.load %arg11[%c216, %c0_99] : memref<248x128xbf16, #tpu.memory_space<vmem>>, vector<24x128xbf16>
      tpu.vector_store %arg11[%c216, %c0_99], %106 {strides = array<i32>} : memref<248x128xbf16, #tpu.memory_space<vmem>>, vector<24x128xbf16>,
    } else {
    }
    %cst_42 = arith.constant 0.000000e+00 : f32
    %57 = vector.broadcast %cst_42 : f32 to vector<192x128xf32>
    %c0_43 = arith.constant 0 : index
    %c0_44 = arith.constant 0 : index
    %58 = vector.load %arg11[%c0_43, %c0_44] : memref<248x128xbf16, #tpu.memory_space<vmem>>, vector<192x128xbf16>
    %c1_45 = arith.constant 1 : index
    %c0_46 = arith.constant 0 : index
    %59 = vector.load %arg11[%c1_45, %c0_46] : memref<248x128xbf16, #tpu.memory_space<vmem>>, vector<192x128xbf16>
    %c2_47 = arith.constant 2 : index
    %c0_48 = arith.constant 0 : index
    %60 = vector.load %arg11[%c2_47, %c0_48] : memref<248x128xbf16, #tpu.memory_space<vmem>>, vector<192x128xbf16>
    %61 = tpu.concatenate %58, %59, %60 in 1 : vector<192x128xbf16>, vector<192x128xbf16>, vector<192x128xbf16> -> vector<192x384xbf16>
    %c0_49 = arith.constant 0 : index
    %c0_50 = arith.constant 0 : index
    %c0_51 = arith.constant 0 : index
    %62 = vector.load %arg5[%c0_49, %c0_50, %c0_51] : memref<3x384x128xbf16, #tpu.memory_space<vmem>>, vector<1x384x128xbf16>
    %63 = vector.shape_cast %62 : vector<1x384x128xbf16> to vector<384x128xbf16>
    %cst_52 = arith.constant dense<0.000000e+00> : vector<192x128xf32>
    %64 = tpu.matmul %61, %63, %cst_52 {dimension_numbers = #tpu.dot_dimension_numbers<[1], [0], [0], [1], [0, 0, 1, 1], [], []>} : vector<192x384xbf16>, vector<384x128xbf16>, vector<192x128xf32> -> vector<192x128xf32>
    %65 = arith.addf %57, %64 : vector<192x128xf32>
    %c24_53 = arith.constant 24 : index
    %c0_54 = arith.constant 0 : index
    %66 = vector.load %arg11[%c24_53, %c0_54] : memref<248x128xbf16, #tpu.memory_space<vmem>>, vector<192x128xbf16>
    %c25_55 = arith.constant 25 : index
    %c0_56 = arith.constant 0 : index
    %67 = vector.load %arg11[%c25_55, %c0_56] : memref<248x128xbf16, #tpu.memory_space<vmem>>, vector<192x128xbf16>
    %c26_57 = arith.constant 26 : index
    %c0_58 = arith.constant 0 : index
    %68 = vector.load %arg11[%c26_57, %c0_58] : memref<248x128xbf16, #tpu.memory_space<vmem>>, vector<192x128xbf16>
    %69 = tpu.concatenate %66, %67, %68 in 1 : vector<192x128xbf16>, vector<192x128xbf16>, vector<192x128xbf16> -> vector<192x384xbf16>
    %c1_59 = arith.constant 1 : index
    %c0_60 = arith.constant 0 : index
    %c0_61 = arith.constant 0 : index
    %70 = vector.load %arg5[%c1_59, %c0_60, %c0_61] : memref<3x384x128xbf16, #tpu.memory_space<vmem>>, vector<1x384x128xbf16>
    %71 = vector.shape_cast %70 : vector<1x384x128xbf16> to vector<384x128xbf16>
    %cst_62 = arith.constant dense<0.000000e+00> : vector<192x128xf32>
    %72 = tpu.matmul %69, %71, %cst_62 {dimension_numbers = #tpu.dot_dimension_numbers<[1], [0], [0], [1], [0, 0, 1, 1], [], []>} : vector<192x384xbf16>, vector<384x128xbf16>, vector<192x128xf32> -> vector<192x128xf32>
    %73 = arith.addf %65, %72 : vector<192x128xf32>
    %c48_63 = arith.constant 48 : index
    %c0_64 = arith.constant 0 : index
    %74 = vector.load %arg11[%c48_63, %c0_64] : memref<248x128xbf16, #tpu.memory_space<vmem>>, vector<192x128xbf16>
    %c49_65 = arith.constant 49 : index
    %c0_66 = arith.constant 0 : index
    %75 = vector.load %arg11[%c49_65, %c0_66] : memref<248x128xbf16, #tpu.memory_space<vmem>>, vector<192x128xbf16>
    %c50_67 = arith.constant 50 : index
    %c0_68 = arith.constant 0 : index
    %76 = vector.load %arg11[%c50_67, %c0_68] : memref<248x128xbf16, #tpu.memory_space<vmem>>, vector<192x128xbf16>
    %77 = tpu.concatenate %74, %75, %76 in 1 : vector<192x128xbf16>, vector<192x128xbf16>, vector<192x128xbf16> -> vector<192x384xbf16>
    %c2_69 = arith.constant 2 : index
    %c0_70 = arith.constant 0 : index
    %c0_71 = arith.constant 0 : index
    %78 = vector.load %arg5[%c2_69, %c0_70, %c0_71] : memref<3x384x128xbf16, #tpu.memory_space<vmem>>, vector<1x384x128xbf16>
    %79 = vector.shape_cast %78 : vector<1x384x128xbf16> to vector<384x128xbf16>
    %cst_72 = arith.constant dense<0.000000e+00> : vector<192x128xf32>
    %80 = tpu.matmul %77, %79, %cst_72 {dimension_numbers = #tpu.dot_dimension_numbers<[1], [0], [0], [1], [0, 0, 1, 1], [], []>} : vector<192x384xbf16>, vector<384x128xbf16>, vector<192x128xf32> -> vector<192x128xf32>
    %81 = arith.addf %73, %80 : vector<192x128xf32>
    %c0_73 = arith.constant 0 : index
    %c0_74 = arith.constant 0 : index
    %82 = vector.load %arg6[%c0_73, %c0_74] : memref<1x128xf32, #tpu.memory_space<vmem>>, vector<1x128xf32>
    %83 = vector.broadcast %82 : vector<1x128xf32> to vector<192x128xf32>
    %84 = arith.addf %81, %83 : vector<192x128xf32>
    %cst_75 = arith.constant 0.000000e+00 : f32
    %85 = vector.broadcast %cst_75 : f32 to vector<192x128xf32>
    %86 = arith.maximumf %84, %85 : vector<192x128xf32>
    %87 = vector.shape_cast %86 : vector<192x128xf32> to vector<8x24x128xf32>
    %88 = vector.extract_strided_slice %87 {offsets = [0, 0, 0], sizes = [8, 16, 128], strides = [1, 1, 1]} : vector<8x24x128xf32> to vector<8x16x128xf32>
    %89 = vector.shape_cast %88 : vector<8x16x128xf32> to vector<1x8x16x128xf32>
    %c0_76 = arith.constant 0 : index
    %c0_77 = arith.constant 0 : index
    %c0_78 = arith.constant 0 : index
    %c0_79 = arith.constant 0 : index
    %90 = vector.load %arg8[%c0_76, %c0_77, %c0_78, %c0_79] : memref<1x8x16x128xf32, #tpu.memory_space<vmem>>, vector<1x8x16x128xf32>
    tpu.vector_store %arg8[%c0_76, %c0_77, %c0_78, %c0_79], %89 {strides = array<i32>} : memref<1x8x16x128xf32, #tpu.memory_space<vmem>>, vector<1x8x16x128xf32>,
    %c0_i32_80 = arith.constant 0 : i32
    %c0_i32_81 = arith.constant 0 : i32
    %c0_i32_82 = arith.constant 0 : i32
    %c0_i32_83 = arith.constant 0 : i32
    %91 = tpu.memref_slice %arg8[%c0_i32_80, %c0_i32_81, %c0_i32_82, %c0_i32_83] : memref<1x8x16x128xf32, #tpu.memory_space<vmem>> -> memref<1x8x16x128xf32, #tpu.memory_space<vmem>>
    %92 = tpu.memref_squeeze %91 : memref<1x8x16x128xf32, #tpu.memory_space<vmem>> -> memref<8x16x128xf32, #tpu.memory_space<vmem>>
    %c0_84 = arith.constant 0 : index
    %c0_85 = arith.constant 0 : index
    %c0_86 = arith.constant 0 : index
    %93 = tpu.strided_load %92[%c0_84, %c0_85, %c0_86] {strides = array<i32: 1, 2, 1>} : memref<8x16x128xf32, #tpu.memory_space<vmem>>, vector<8x8x128xf32>
    %c0_i32_87 = arith.constant 0 : i32
    %c0_i32_88 = arith.constant 0 : i32
    %c0_i32_89 = arith.constant 0 : i32
    %c0_i32_90 = arith.constant 0 : i32
    %94 = tpu.memref_slice %arg8[%c0_i32_87, %c0_i32_88, %c0_i32_89, %c0_i32_90] : memref<1x8x16x128xf32, #tpu.memory_space<vmem>> -> memref<1x8x16x128xf32, #tpu.memory_space<vmem>>
    %95 = tpu.memref_squeeze %94 : memref<1x8x16x128xf32, #tpu.memory_space<vmem>> -> memref<8x16x128xf32, #tpu.memory_space<vmem>>
    %c0_91 = arith.constant 0 : index
    %c1_92 = arith.constant 1 : index
    %c0_93 = arith.constant 0 : index
    %96 = tpu.strided_load %95[%c0_91, %c1_92, %c0_93] {strides = array<i32: 1, 2, 1>} : memref<8x16x128xf32, #tpu.memory_space<vmem>>, vector<8x8x128xf32>
    %97 = arith.maximumf %93, %96 : vector<8x8x128xf32>
    %98 = vector.shape_cast %97 : vector<8x8x128xf32> to vector<4x2x8x128xf32>
    %99 = vector.extract_strided_slice %98 {offsets = [0, 0, 0, 0], sizes = [4, 1, 8, 128], strides = [1, 1, 1, 1]} : vector<4x2x8x128xf32> to vector<4x1x8x128xf32>
    %100 = vector.shape_cast %99 : vector<4x1x8x128xf32> to vector<4x8x128xf32>
    %101 = vector.extract_strided_slice %98 {offsets = [0, 1, 0, 0], sizes = [4, 1, 8, 128], strides = [1, 1, 1, 1]} : vector<4x2x8x128xf32> to vector<4x1x8x128xf32>
    %102 = vector.shape_cast %101 : vector<4x1x8x128xf32> to vector<4x8x128xf32>
    %103 = arith.maximumf %100, %102 : vector<4x8x128xf32>
    %104 = vector.shape_cast %103 : vector<4x8x128xf32> to vector<1x4x8x128xf32>
    %c0_94 = arith.constant 0 : index
    %c0_95 = arith.constant 0 : index
    %c0_96 = arith.constant 0 : index
    %c0_97 = arith.constant 0 : index
    %105 = vector.load %arg9[%c0_94, %c0_95, %c0_96, %c0_97] : memref<1x4x8x128xf32, #tpu.memory_space<vmem>>, vector<1x4x8x128xf32>
    tpu.vector_store %arg9[%c0_94, %c0_95, %c0_96, %c0_97], %104 {strides = array<i32>} : memref<1x4x8x128xf32, #tpu.memory_space<vmem>>, vector<1x4x8x128xf32>,
    return
  }
  func.func @transform_1(%arg0: i32, %arg1: i32) -> (i32, i32, i32) {
    %c0_i32 = arith.constant 0 : i32
    %c0_i32_0 = arith.constant 0 : i32
    %c0_i32_1 = arith.constant 0 : i32
    %c0_i32_2 = arith.constant 0 : i32
    return %c0_i32, %c0_i32_0, %c0_i32_1 : i32, i32, i32
  }
  func.func @transform_2(%arg0: i32, %arg1: i32) -> (i32, i32) {
    %c0_i32 = arith.constant 0 : i32
    %c0_i32_0 = arith.constant 0 : i32
    %c0_i32_1 = arith.constant 0 : i32
    return %c0_i32, %c0_i32_0 : i32, i32
  }
  func.func @transform_3(%arg0: i32, %arg1: i32) -> (i32, i32, i32) {
    %c0_i32 = arith.constant 0 : i32
    %c0_i32_0 = arith.constant 0 : i32
    %c0_i32_1 = arith.constant 0 : i32
    %c0_i32_2 = arith.constant 0 : i32
    return %c0_i32, %c0_i32_0, %c0_i32_1 : i32, i32, i32
  }
  func.func @transform_4(%arg0: i32, %arg1: i32) -> (i32, i32) {
    %c0_i32 = arith.constant 0 : i32
    %c0_i32_0 = arith.constant 0 : i32
    %c0_i32_1 = arith.constant 0 : i32
    return %c0_i32, %c0_i32_0 : i32, i32
  }
  func.func @transform_5(%arg0: i32, %arg1: i32) -> (i32, i32) {
    %c0_i32 = arith.constant 0 : i32
    %c0_i32_0 = arith.constant 0 : i32
    %c0_i32_1 = arith.constant 0 : i32
    return %c0_i32, %c0_i32_0 : i32, i32
  }
  func.func @transform_6(%arg0: i32, %arg1: i32) -> (i32, i32, i32, i32) {
    %c0_i32 = arith.constant 0 : i32
    %c0_i32_0 = arith.constant 0 : i32
    %c0_i32_1 = arith.constant 0 : i32
    return %arg0, %arg1, %c0_i32, %c0_i32_0 : i32, i32, i32, i32
  }
  func.func @transform_7(%arg0: i32, %arg1: i32) -> (i32, i32, i32, i32) {
    %c0_i32 = arith.constant 0 : i32
    %c0_i32_0 = arith.constant 0 : i32
    %c0_i32_1 = arith.constant 0 : i32
    return %arg0, %arg1, %c0_i32, %c0_i32_0 : i32, i32, i32, i32
  }
}

</mosaic_0001>

<llo_original>
// kernel: down_sample.1
$region0: #{down_sample.1}
  #allocation0 [shape = 'u32[]', space=smem, size = 0x4, offset = 0x4, fixed_abs, tag = 'smem constant byte address 0x4 - core index']
  #allocation1 [shape = 'u32[144,128]{1,0:T(1,128)}', space=vmem, size = 0x12000, scoped, tag = 'internal scratch']
  #allocation2 [shape = 'bf16[296,128]{1,0:T(8,128)(2,1)}', space=vmem, size = 0x12800, scoped, tag = 'scratch operand']
  #allocation3 [shape = 'bf16[248,128]{1,0:T(8,128)(2,1)}', space=vmem, size = 0xf800, scoped, tag = 'scratch operand']
  #allocation4 [shape = 's32[1]{0}', space=sflag, size = 0x4, scoped, tag = 'scratch operand']
  #allocation5 [shape = 's32[]', space=sflag, size = 0x4, offset = 0, fixed_abs, tag = 'sflag constant byte address 0x0 - dummy sync flag']
  %s0 = inlined_call_operand.vmem [shape: bf16[960,128], index: 0, kind: input, shape index: {}]
  %s1 = inlined_call_operand.vmem [shape: bf16[3,384,128], index: 1, kind: input, shape index: {}]
  %s2 = inlined_call_operand.vmem [shape: f32[1,128], index: 2, kind: input, shape index: {}]
  %s3 = inlined_call_operand.vmem [shape: bf16[3,384,128], index: 3, kind: input, shape index: {}]
  %s4 = inlined_call_operand.vmem [shape: f32[1,128], index: 4, kind: input, shape index: {}]
  %s5 = inlined_call_operand.vmem [shape: f32[240,1], index: 5, kind: input, shape index: {}]
  %s6 = inlined_call_operand.vmem [shape: f32[2,16,16,128], index: 6, kind: output, shape index: {0}]
  %s7 = inlined_call_operand.vmem [shape: f32[2,8,8,128], index: 7, kind: output, shape index: {1}]
  %8 = xla_tuple %s6, %s7
  %s9 = sld [smem:[#allocation0]]
  $region103: #{down_sample.1} parent=0
    _
  %s11 = ssub.s32 1, %s9
  %s12 = scalar_select 0, %s11, %s9
  loop: start=0, step=1, limit=6
  $region2: #{down_sample.1} parent=0 // loop_pre_header
    _
  $region3: #{down_sample.1} parent=0 // loop_header
    %s14 = sphi 0, %s18
    %p15 = scmp.ge.s32.totalorder %s14, 6
    %s21 = sphi 0, %s33
    %s22 = sphi 0, %s29
    %s23 = sphi 0, %s21
    %s24 = sphi 0, %s22
    %s25 = sphi 0, %s23
    %s26 = sphi 0, %s24
    %s34 = sphi 0, %s34
    %s36 = sphi 0, %s34
    %s37 = sphi 0, %s36
    %s51 = sphi 0, %s37
    %s55 = sphi 0, %s55
    %s57 = sphi 0, %s55
    %s58 = sphi 0, %s57
    %s72 = sphi 0, %s58
    %s76 = sphi 0, %s76
    %s78 = sphi 0, %s76
    %s79 = sphi 0, %s78
    %s93 = sphi 0, %s79
    %s97 = sphi 0, %s97
    %s99 = sphi 0, %s97
    %s100 = sphi 0, %s99
    %s114 = sphi 0, %s100
    %s118 = sphi 0, %s118
    %s120 = sphi 0, %s118
    %s121 = sphi 0, %s120
    %s135 = sphi 0, %s121
    %s143 = sphi 0, %s145
    %s146 = sphi 0, %s143
    %s147 = sphi 0, %s146
    %s163 = sphi 0, %s147
    %s171 = sphi 0, %s173
    %s174 = sphi 0, %s171
    %s175 = sphi 0, %s174
    %s191 = sphi 0, %s175
  $region4: #{down_sample.1} parent=0 // loop_header_branch
    %17 = sbr.rel (%p15) target = $region8
  $region5: #{down_sample.1} parent=0 // loop_body
    %s19 = ssub.s32 %s14, 1
    %s20 = ssub.s32 %s14, 2
    %s27 = sadd.s32 1, %s22
    %p28 = scmp.ge.s32.totalorder %s27, 2
    %s29 = scalar_select %p28, 0, %s27
    %s30 = sadd.s32 1, %s21
    %s31 = scalar_select %p28, %s30, %s21
    %p32 = scmp.ge.s32.totalorder %s31, 2
    %s33 = scalar_select %p32, 0, %s31
    %s35 = sadd.s32 %s34, 1
    %p38 = scmp.eq.s32.totalorder %s14, 3
    %p39 = scmp.ne.s32.totalorder %s34, %s36
    %p40 = scmp.eq.s32.totalorder %s14, 0
    %p41 = por %p39, %p40
    %p42 = scmp.ne.s32.totalorder %s34, %s36
    %p43 = scmp.eq.s32.totalorder %s19, 3
    %p44 = por %p42, %p43
    %p45 = scmp.ne.s32.totalorder %s36, %s37
    %p46 = scmp.eq.s32.totalorder %s19, 0
    %p47 = por %p45, %p46
    %p48 = scmp.ne.s32.totalorder %s36, %s37
    %p49 = scmp.eq.s32.totalorder %s20, 3
    %p50 = por %p48, %p49
    %p52 = scmp.ne.s32.totalorder %s37, %s51
    %p53 = scmp.eq.s32.totalorder %s20, 0
    %p54 = por %p52, %p53
    %s56 = sadd.s32 %s55, 1
    %p59 = scmp.eq.s32.totalorder %s14, 3
    %p60 = scmp.ne.s32.totalorder %s55, %s57
    %p61 = scmp.eq.s32.totalorder %s14, 0
    %p62 = por %p60, %p61
    %p63 = scmp.ne.s32.totalorder %s55, %s57
    %p64 = scmp.eq.s32.totalorder %s19, 3
    %p65 = por %p63, %p64
    %p66 = scmp.ne.s32.totalorder %s57, %s58
    %p67 = scmp.eq.s32.totalorder %s19, 0
    %p68 = por %p66, %p67
    %p69 = scmp.ne.s32.totalorder %s57, %s58
    %p70 = scmp.eq.s32.totalorder %s20, 3
    %p71 = por %p69, %p70
    %p73 = scmp.ne.s32.totalorder %s58, %s72
    %p74 = scmp.eq.s32.totalorder %s20, 0
    %p75 = por %p73, %p74
    %s77 = sadd.s32 %s76, 1
    %p80 = scmp.eq.s32.totalorder %s14, 3
    %p81 = scmp.ne.s32.totalorder %s76, %s78
    %p82 = scmp.eq.s32.totalorder %s14, 0
    %p83 = por %p81, %p82
    %p84 = scmp.ne.s32.totalorder %s76, %s78
    %p85 = scmp.eq.s32.totalorder %s19, 3
    %p86 = por %p84, %p85
    %p87 = scmp.ne.s32.totalorder %s78, %s79
    %p88 = scmp.eq.s32.totalorder %s19, 0
    %p89 = por %p87, %p88
    %p90 = scmp.ne.s32.totalorder %s78, %s79
    %p91 = scmp.eq.s32.totalorder %s20, 3
    %p92 = por %p90, %p91
    %p94 = scmp.ne.s32.totalorder %s79, %s93
    %p95 = scmp.eq.s32.totalorder %s20, 0
    %p96 = por %p94, %p95
    %s98 = sadd.s32 %s97, 1
    %p101 = scmp.eq.s32.totalorder %s14, 3
    %p102 = scmp.ne.s32.totalorder %s97, %s99
    %p103 = scmp.eq.s32.totalorder %s14, 0
    %p104 = por %p102, %p103
    %p105 = scmp.ne.s32.totalorder %s97, %s99
    %p106 = scmp.eq.s32.totalorder %s19, 3
    %p107 = por %p105, %p106
    %p108 = scmp.ne.s32.totalorder %s99, %s100
    %p109 = scmp.eq.s32.totalorder %s19, 0
    %p110 = por %p108, %p109
    %p111 = scmp.ne.s32.totalorder %s99, %s100
    %p112 = scmp.eq.s32.totalorder %s20, 3
    %p113 = por %p111, %p112
    %p115 = scmp.ne.s32.totalorder %s100, %s114
    %p116 = scmp.eq.s32.totalorder %s20, 0
    %p117 = por %p115, %p116
    %s119 = sadd.s32 %s118, 1
    %p122 = scmp.eq.s32.totalorder %s14, 3
    %p123 = scmp.ne.s32.totalorder %s118, %s120
    %p124 = scmp.eq.s32.totalorder %s14, 0
    %p125 = por %p123, %p124
    %p126 = scmp.ne.s32.totalorder %s118, %s120
    %p127 = scmp.eq.s32.totalorder %s19, 3
    %p128 = por %p126, %p127
    %p129 = scmp.ne.s32.totalorder %s120, %s121
    %p130 = scmp.eq.s32.totalorder %s19, 0
    %p131 = por %p129, %p130
    %p132 = scmp.ne.s32.totalorder %s120, %s121
    %p133 = scmp.eq.s32.totalorder %s20, 3
    %p134 = por %p132, %p133
    %p136 = scmp.ne.s32.totalorder %s121, %s135
    %p137 = scmp.eq.s32.totalorder %s20, 0
    %p138 = por %p136, %p137
    %s139 = ssub.s32 %s21, %s33
    %s140 = ssub.s32 %s22, %s29
    %s141 = sor.u32 %s139, %s140
    %p142 = scmp.eq.s32.totalorder %s141, 0
    %s144 = sadd.s32 %s143, 1
    %s145 = scalar_select %p142, %s143, %s144
    %p148 = pneg %p142
    %p149 = scmp.eq.s32.totalorder %s14, 3
    %p150 = por %p148, %p149
    %p151 = scmp.ne.s32.totalorder %s143, %s146
    %p152 = scmp.eq.s32.totalorder %s14, 0
    %p153 = por %p151, %p152
    %p154 = scmp.ne.s32.totalorder %s143, %s146
    %p155 = scmp.eq.s32.totalorder %s19, 3
    %p156 = por %p154, %p155
    %p157 = scmp.ne.s32.totalorder %s146, %s147
    %p158 = scmp.eq.s32.totalorder %s19, 0
    %p159 = por %p157, %p158
    %p160 = scmp.ne.s32.totalorder %s146, %s147
    %p161 = scmp.eq.s32.totalorder %s20, 3
    %p162 = por %p160, %p161
    %p164 = scmp.ne.s32.totalorder %s147, %s163
    %p165 = scmp.eq.s32.totalorder %s20, 0
    %p166 = por %p164, %p165
    %s167 = ssub.s32 %s21, %s33
    %s168 = ssub.s32 %s22, %s29
    %s169 = sor.u32 %s167, %s168
    %p170 = scmp.eq.s32.totalorder %s169, 0
    %s172 = sadd.s32 %s171, 1
    %s173 = scalar_select %p170, %s171, %s172
    %p176 = pneg %p170
    %p177 = scmp.eq.s32.totalorder %s14, 3
    %p178 = por %p176, %p177
    %p179 = scmp.ne.s32.totalorder %s171, %s174
    %p180 = scmp.eq.s32.totalorder %s14, 0
    %p181 = por %p179, %p180
    %p182 = scmp.ne.s32.totalorder %s171, %s174
    %p183 = scmp.eq.s32.totalorder %s19, 3
    %p184 = por %p182, %p183
    %p185 = scmp.ne.s32.totalorder %s174, %s175
    %p186 = scmp.eq.s32.totalorder %s19, 0
    %p187 = por %p185, %p186
    %p188 = scmp.ne.s32.totalorder %s174, %s175
    %p189 = scmp.eq.s32.totalorder %s20, 3
    %p190 = por %p188, %p189
    %p192 = scmp.ne.s32.totalorder %s175, %s191
    %p193 = scmp.eq.s32.totalorder %s20, 0
    %p194 = por %p192, %p193
    %p195 = scmp.le.s32.totalorder 1, %s14
    %p196 = scmp.lt.s32.totalorder %s14, 5
    %p197 = pnand %p195, %p196
    %p198 = pneg %p197
    // Predicated region
    $region9: #{down_sample.1} parent=5 // pred_check
      _
    $region10: #{down_sample.1} parent=5 // pred_check_branch
      %200 = sbr.rel (%p197) target = $region12
    $region11: #{down_sample.1} parent=5 // pred_region
      %s201 = ssub.s32 %s14, 1
      // Predicated region
      $region13: #{down_sample.1} parent=11 // pred_check
        %p202 = pneg %p47
      $region14: #{down_sample.1} parent=11 // pred_check_branch
        %204 = sbr.rel (%p202) target = $region16
      $region15: #{down_sample.1} parent=11 // pred_region
        _
      $region16: #{down_sample.1} parent=11 // pred_fallthru
        _
      // Predicated region
      $region17: #{down_sample.1} parent=11 // pred_check
        %p205 = pneg %p68
      $region18: #{down_sample.1} parent=11 // pred_check_branch
        %207 = sbr.rel (%p205) target = $region20
      $region19: #{down_sample.1} parent=11 // pred_region
        _
      $region20: #{down_sample.1} parent=11 // pred_fallthru
        _
      // Predicated region
      $region21: #{down_sample.1} parent=11 // pred_check
        %p208 = pneg %p89
      $region22: #{down_sample.1} parent=11 // pred_check_branch
        %210 = sbr.rel (%p208) target = $region24
      $region23: #{down_sample.1} parent=11 // pred_region
        _
      $region24: #{down_sample.1} parent=11 // pred_fallthru
        _
      // Predicated region
      $region25: #{down_sample.1} parent=11 // pred_check
        %p211 = pneg %p110
      $region26: #{down_sample.1} parent=11 // pred_check_branch
        %213 = sbr.rel (%p211) target = $region28
      $region27: #{down_sample.1} parent=11 // pred_region
        _
      $region28: #{down_sample.1} parent=11 // pred_fallthru
        _
      // Predicated region
      $region29: #{down_sample.1} parent=11 // pred_check
        %p214 = pneg %p131
      $region30: #{down_sample.1} parent=11 // pred_check_branch
        %216 = sbr.rel (%p214) target = $region32
      $region31: #{down_sample.1} parent=11 // pred_region
        _
      $region32: #{down_sample.1} parent=11 // pred_fallthru
        _
    $region12: #{down_sample.1} parent=5 // pred_fallthru
      _
    %p217 = scmp.lt.s32.totalorder %s14, 4
    // Predicated region
    $region33: #{down_sample.1} parent=5 // pred_check
      %p218 = pneg %p217
    $region34: #{down_sample.1} parent=5 // pred_check_branch
      %220 = sbr.rel (%p218) target = $region36
    $region35: #{down_sample.1} parent=5 // pred_region
      _
    $region36: #{down_sample.1} parent=5 // pred_fallthru
      _
    %p221 = scmp.le.s32.totalorder 1, %s14
    %p222 = scmp.lt.s32.totalorder %s14, 5
    %p223 = pnand %p221, %p222
    %p224 = pneg %p223
    // Predicated region
    $region37: #{down_sample.1} parent=5 // pred_check
      _
    $region38: #{down_sample.1} parent=5 // pred_check_branch
      %226 = sbr.rel (%p223) target = $region40
    $region39: #{down_sample.1} parent=5 // pred_region
      %s227 = ssub.s32 %s14, 1
      %p228 = pneg %p47
      %p229 = pneg %p44
      %p230 = pneg %p68
      %p231 = pneg %p65
      %p232 = pneg %p89
      %p233 = pneg %p86
      %p234 = pneg %p110
      %p235 = pneg %p107
      %p236 = pneg %p131
      %p237 = pneg %p128
      %p238 = pneg %p159
      %p239 = pneg %p156
      %s240 = smul.u32 8, %s24
      %p241 = scmp.lt.s32.totalorder %s23, 1
      %s242 = scalar_select %p241, %s23, 1
      %p243 = scmp.lt.s32.totalorder %s240, 15
      %s244 = scalar_select %p243, %s240, 15
      %s245 = smul.addr %s244, 2
      %s246 = smul.addr %s242, 32
      %s247 = sadd.s32 %s245, %s246
      %s248 = smul.addr %s247, 8
      %s249 = scalar_lea.vmem %s6, %s248
      %p250 = pneg %p187
      %p251 = pneg %p184
      %s252 = smul.u32 4, %s24
      %p253 = scmp.lt.s32.totalorder %s23, 1
      %s254 = scalar_select %p253, %s23, 1
      %p255 = scmp.lt.s32.totalorder %s252, 7
      %s256 = scalar_select %p255, %s252, 7
      %s257 = smul.addr %s254, 8
      %s258 = sadd.s32 %s256, %s257
      %s259 = smul.addr %s258, 8
      %s260 = scalar_lea.vmem %s7, %s259
      %s261 = smul.u32 8, %s24
      %p262 = scmp.lt.s32.totalorder %s23, 1
      %s263 = scalar_select %p262, %s23, 1
      %p264 = scmp.lt.s32.totalorder %s261, 15
      %s265 = scalar_select %p264, %s261, 15
      %s266 = smul.addr %s265, 2
      %s267 = smul.addr %s263, 32
      %s268 = sadd.s32 %s266, %s267
      %s269 = smul.addr %s268, 8
      %s270 = scalar_lea.vmem %s6, %s269
      %s271 = smul.u32 8, %s24
      %s272 = smul.u32 4, %s24
      %p273 = scmp.lt.s32.totalorder %s23, 1
      %s274 = scalar_select %p273, %s23, 1
      %p275 = scmp.lt.s32.totalorder %s272, 7
      %s276 = scalar_select %p275, %s272, 7
      %s277 = smul.addr %s274, 8
      %s278 = sadd.s32 %s276, %s277
      %s279 = smul.addr %s278, 8
      %s280 = scalar_lea.vmem %s7, %s279
      %s281 = smul.u32 4, %s24
      %s283 = smul.u32 %s23, 480
      %s284 = smul.u32 %s24, 192
      %s285 = sadd.s32 %s283, %s284
      %s286 = sshra.s32 %s285, 3
      %s287 = sand.u32 %s285, 7
      %s288 = smul.addr %s286, 4
      %s289 = scalar_lea.vmem %s0, %s288
      %p291 = scmp.lt.u32.totalorder 144, 8
      %p292 = pneg %p291
      // Predicated region
      $region41: #{down_sample.1} parent=39 // pred_check
        _
      $region42: #{down_sample.1} parent=39 // pred_check_branch
        %294 = sbr.rel (%p291) target = $region44
      $region43: #{down_sample.1} parent=39 // pred_region
        %s309 = sand.u32 144, 7
        %p310 = scmp.eq.s32.totalorder %s309, 0
        // Predicated region
        $region56: #{down_sample.1} parent=43 // pred_check
          %p311 = pneg %p310
        $region57: #{down_sample.1} parent=43 // pred_check_branch
          %313 = sbr.rel (%p311) target = $region59
        $region58: #{down_sample.1} parent=43 // pred_region
          loop: start=0, step=1, limit=1
          $region60: #{down_sample.1} parent=58 // loop_pre_header
            _
          $region61: #{down_sample.1} parent=58 // loop_header
            %s315 = sphi 0, %s319
            %p316 = scmp.ge.s32.totalorder %s315, 1
            %s320 = sphi %s289, %s289
            %s321 = sphi [#allocation2], [#allocation2]
          $region62: #{down_sample.1} parent=58 // loop_header_branch
            %318 = sbr.rel (%p316) target = $region66
          $region63: #{down_sample.1} parent=58 // loop_body
            %v322 = vld [vmem:[%s320] sm:$0xff]
            %323 = vst [vmem:[%s321] sm:$0xff] %v322
            %v324 = vld [vmem:[%s320 + $0x8] sm:$0xff]
            %325 = vst [vmem:[%s321 + $0x8] sm:$0xff] %v324
            %v326 = vld [vmem:[%s320 + $0x10] sm:$0xff]
            %327 = vst [vmem:[%s321 + $0x10] sm:$0xff] %v326
            %v328 = vld [vmem:[%s320 + $0x18] sm:$0xff]
            %329 = vst [vmem:[%s321 + $0x18] sm:$0xff] %v328
            %v330 = vld [vmem:[%s320 + $0x20] sm:$0xff]
            %331 = vst [vmem:[%s321 + $0x20] sm:$0xff] %v330
            %v332 = vld [vmem:[%s320 + $0x28] sm:$0xff]
            %333 = vst [vmem:[%s321 + $0x28] sm:$0xff] %v332
            %v334 = vld [vmem:[%s320 + $0x30] sm:$0xff]
            %335 = vst [vmem:[%s321 + $0x30] sm:$0xff] %v334
            %v336 = vld [vmem:[%s320 + $0x38] sm:$0xff]
            %337 = vst [vmem:[%s321 + $0x38] sm:$0xff] %v336
            %v338 = vld [vmem:[%s320 + $0x40] sm:$0xff]
            %339 = vst [vmem:[%s321 + $0x40] sm:$0xff] %v338
            %v340 = vld [vmem:[%s320 + $0x48] sm:$0xff]
            %341 = vst [vmem:[%s321 + $0x48] sm:$0xff] %v340
            %v342 = vld [vmem:[%s320 + $0x50] sm:$0xff]
            %343 = vst [vmem:[%s321 + $0x50] sm:$0xff] %v342
            %v344 = vld [vmem:[%s320 + $0x58] sm:$0xff]
            %345 = vst [vmem:[%s321 + $0x58] sm:$0xff] %v344
            %v346 = vld [vmem:[%s320 + $0x60] sm:$0xff]
            %347 = vst [vmem:[%s321 + $0x60] sm:$0xff] %v346
            %v348 = vld [vmem:[%s320 + $0x68] sm:$0xff]
            %349 = vst [vmem:[%s321 + $0x68] sm:$0xff] %v348
            %v350 = vld [vmem:[%s320 + $0x70] sm:$0xff]
            %351 = vst [vmem:[%s321 + $0x70] sm:$0xff] %v350
            %v352 = vld [vmem:[%s320 + $0x78] sm:$0xff]
            %353 = vst [vmem:[%s321 + $0x78] sm:$0xff] %v352
            %v354 = vld [vmem:[%s320 + $0x80] sm:$0xff]
            %355 = vst [vmem:[%s321 + $0x80] sm:$0xff] %v354
            %v356 = vld [vmem:[%s320 + $0x88] sm:$0xff]
            %357 = vst [vmem:[%s321 + $0x88] sm:$0xff] %v356
          $region64: #{down_sample.1} parent=58 // loop_footer
            %s319 = sadd.s32 1, %s315
          $region65: #{down_sample.1} parent=58 // loop_footer_branch
            %314 = sbr.rel target = $region61
          $region66: #{down_sample.1} parent=58 // loop_exit
            _
        $region59: #{down_sample.1} parent=43 // pred_fallthru
          _
        %p358 = pneg %p310
        // Predicated region
        $region67: #{down_sample.1} parent=43 // pred_check
          _
        $region68: #{down_sample.1} parent=43 // pred_check_branch
          %360 = sbr.rel (%p310) target = $region70
        $region69: #{down_sample.1} parent=43 // pred_region
          %s361 = sand.u32 144, 7
        $region70: #{down_sample.1} parent=43 // pred_fallthru
          _
      $region44: #{down_sample.1} parent=39 // pred_fallthru
        _
      // Predicated region
      $region45: #{down_sample.1} parent=39 // pred_check
        %p295 = pneg %p291
      $region46: #{down_sample.1} parent=39 // pred_check_branch
        %297 = sbr.rel (%p295) target = $region48
      $region47: #{down_sample.1} parent=39 // pred_region
        %s298 = sshllo.u32 0, 144
        loop: start=0, step=1, limit=1
        $region49: #{down_sample.1} parent=47 // loop_pre_header
          _
        $region50: #{down_sample.1} parent=47 // loop_header
          %s300 = sphi 0, %s304
          %p301 = scmp.ge.s32.totalorder %s300, 1
          %s305 = sphi %s289, %s289
          %s306 = sphi [#allocation2], [#allocation2]
        $region51: #{down_sample.1} parent=47 // loop_header_branch
          %303 = sbr.rel (%p301) target = $region55
        $region52: #{down_sample.1} parent=47 // loop_body
          %v307 = vld [vmem:[%s305] sm:%s298]
          %308 = vst [vmem:[%s306] sm:%s298] %v307
        $region53: #{down_sample.1} parent=47 // loop_footer
          %s304 = sadd.s32 1, %s300
        $region54: #{down_sample.1} parent=47 // loop_footer_branch
          %299 = sbr.rel target = $region50
        $region55: #{down_sample.1} parent=47 // loop_exit
          _
      $region48: #{down_sample.1} parent=39 // pred_fallthru
        _
      // Predicated region
      $region71: #{down_sample.1} parent=39 // pred_check
        _
      $region72: #{down_sample.1} parent=39 // pred_check_branch
        %364 = sbr.rel (0) target = $region74
      $region73: #{down_sample.1} parent=39 // pred_region
        %365 = vsyncadd [#allocation4], 2304
      $region74: #{down_sample.1} parent=39 // pred_fallthru
        _
      %s366 = smul.u32 4, 36
      %s367 = smul.u32 %s366, 1
      %s368 = sshll.u32 %s367, 4
      %369 = dma.done [#allocation4], %s368
      %370 = vst [vmem:[#allocation2 + $0x90] sm:$0xf] 0
      %371 = vst [vmem:[#allocation3 + $0x78] sm:$0xf] 0
      %v372 = vld [vmem:[#allocation2] sm:$0xf]
      %v373 = vld [vmem:[#allocation2 + $0x4] sm:$0xf]
      %v374 = vld [vmem:[#allocation2 + $0x8] sm:$0xf]
      %v375 = vld [vmem:[#allocation2 + $0xc] sm:$0xf]
      %v376 = vld [vmem:[#allocation2 + $0x10] sm:$0xf]
      %v377 = vld [vmem:[#allocation2 + $0x14] sm:$0xf]
      %v378 = vld [vmem:[#allocation2 + $0x18] sm:$0xf]
      %v379 = vld [vmem:[#allocation2 + $0x1c] sm:$0xf]
      %v380 = vld [vmem:[#allocation2 + $0x20] sm:$0xf]
      %v381 = vld [vmem:[#allocation2 + $0x24] sm:$0xf]
      %v382 = vld [vmem:[#allocation2 + $0x28] sm:$0xf]
      %v383 = vld [vmem:[#allocation2 + $0x2c] sm:$0xf]
      %v384 = vld [vmem:[#allocation2 + $0x30] sm:$0xf]
      %v385 = vld [vmem:[#allocation2 + $0x34] sm:$0xf]
      %v386 = vld [vmem:[#allocation2 + $0x38] sm:$0xf]
      %v387 = vld [vmem:[#allocation2 + $0x3c] sm:$0xf]
      %v388 = vld [vmem:[#allocation2 + $0x40] sm:$0xf]
      %v389 = vld [vmem:[#allocation2 + $0x44] sm:$0xf]
      %v390 = vld [vmem:[#allocation2 + $0x48] sm:$0xf]
      %v391 = vld [vmem:[#allocation2 + $0x4c] sm:$0xf]
      %v392 = vld [vmem:[#allocation2 + $0x50] sm:$0xf]
      %v393 = vld [vmem:[#allocation2 + $0x54] sm:$0xf]
      %v394 = vld [vmem:[#allocation2 + $0x58] sm:$0xf]
      %v395 = vld [vmem:[#allocation2 + $0x5c] sm:$0xf]
      %v396 = vld [vmem:[#allocation2 + $0x60] sm:$0xf]
      %v397 = vld [vmem:[#allocation2 + $0x64] sm:$0xf]
      %v398 = vld [vmem:[#allocation2 + $0x68] sm:$0xf]
      %v399 = vld [vmem:[#allocation2 + $0x6c] sm:$0xf]
      %v400 = vld [vmem:[#allocation2 + $0x70] sm:$0xf]
      %v401 = vld [vmem:[#allocation2 + $0x74] sm:$0xf]
      %v402 = vld [vmem:[#allocation2 + $0x78] sm:$0x1]
      %v403 = vld [vmem:[#allocation2] sm:$0xe]
      %v434 = vunpack.c.l.b16 %v372
      %v435 = vunpack.c.l.b16 %v373
      %v436 = vunpack.c.l.b16 %v374
      %v437 = vunpack.c.l.b16 %v375
      %v438 = vunpack.c.l.b16 %v376
      %v439 = vunpack.c.l.b16 %v377
      %v440 = vunpack.c.l.b16 %v378
      %v441 = vunpack.c.l.b16 %v379
      %v442 = vunpack.c.l.b16 %v380
      %v443 = vunpack.c.l.b16 %v381
      %v444 = vunpack.c.l.b16 %v382
      %v445 = vunpack.c.l.b16 %v383
      %v446 = vunpack.c.l.b16 %v384
      %v447 = vunpack.c.l.b16 %v385
      %v448 = vunpack.c.l.b16 %v386
      %v449 = vunpack.c.l.b16 %v387
      %v450 = vunpack.c.l.b16 %v388
      %v451 = vunpack.c.l.b16 %v389
      %v452 = vunpack.c.l.b16 %v390
      %v453 = vunpack.c.l.b16 %v391
      %v454 = vunpack.c.l.b16 %v392
      %v455 = vunpack.c.l.b16 %v393
      %v456 = vunpack.c.l.b16 %v394
      %v457 = vunpack.c.l.b16 %v395
      %v458 = vunpack.c.l.b16 %v396
      %v459 = vunpack.c.l.b16 %v397
      %v460 = vunpack.c.l.b16 %v398
      %v461 = vunpack.c.l.b16 %v399
      %v462 = vunpack.c.l.b16 %v400
      %v463 = vunpack.c.l.b16 %v401
      %v464 = vpack.c.b16 %v435, %v434
      %v465 = vpack.c.b16 %v437, %v436
      %v466 = vpack.c.b16 %v439, %v438
      %v467 = vpack.c.b16 %v441, %v440
      %v468 = vpack.c.b16 %v443, %v442
      %v469 = vpack.c.b16 %v445, %v444
      %v470 = vpack.c.b16 %v447, %v446
      %v471 = vpack.c.b16 %v449, %v448
      %v472 = vpack.c.b16 %v451, %v450
      %v473 = vpack.c.b16 %v453, %v452
      %v474 = vpack.c.b16 %v455, %v454
      %v475 = vpack.c.b16 %v457, %v456
      %v476 = vpack.c.b16 %v459, %v458
      %v477 = vpack.c.b16 %v461, %v460
      %v478 = vpack.c.b16 %v463, %v462
      %v495 = vunpack.c.l.b16 %v402
      %v496 = vpack.c.b16 %v495, %v495
      %vm497 = vsmask.f32 7424
      %v499 = vshrl.u32 %v464, 16
      %v501 = vshll.u32 %v464, 16
      %v503 = vrot.slane %v501, 1
      %v504 = vor.u32 %v499, %v503
      %v506 = vshll.u32 %v465, 16
      %v508 = vrot.slane %v506, 1
      %v509 = vsel %vm497, %v504, %v508
      %v510 = vshrl.u32 %v465, 16
      %v512 = vor.u32 %v510, %v508
      %v514 = vshll.u32 %v466, 16
      %v516 = vrot.slane %v514, 1
      %v517 = vsel %vm497, %v512, %v516
      %v518 = vshrl.u32 %v466, 16
      %v520 = vor.u32 %v518, %v516
      %v522 = vshll.u32 %v467, 16
      %v524 = vrot.slane %v522, 1
      %v525 = vsel %vm497, %v520, %v524
      %v526 = vshrl.u32 %v467, 16
      %v528 = vor.u32 %v526, %v524
      %v530 = vshll.u32 %v468, 16
      %v532 = vrot.slane %v530, 1
      %v533 = vsel %vm497, %v528, %v532
      %v534 = vshrl.u32 %v468, 16
      %v536 = vor.u32 %v534, %v532
      %v538 = vshll.u32 %v469, 16
      %v540 = vrot.slane %v538, 1
      %v541 = vsel %vm497, %v536, %v540
      %v542 = vshrl.u32 %v469, 16
      %v544 = vor.u32 %v542, %v540
      %v546 = vshll.u32 %v470, 16
      %v548 = vrot.slane %v546, 1
      %v549 = vsel %vm497, %v544, %v548
      %v550 = vshrl.u32 %v470, 16
      %v552 = vor.u32 %v550, %v548
      %v554 = vshll.u32 %v471, 16
      %v556 = vrot.slane %v554, 1
      %v557 = vsel %vm497, %v552, %v556
      %v558 = vshrl.u32 %v471, 16
      %v560 = vor.u32 %v558, %v556
      %v562 = vshll.u32 %v472, 16
      %v564 = vrot.slane %v562, 1
      %v565 = vsel %vm497, %v560, %v564
      %v566 = vshrl.u32 %v472, 16
      %v568 = vor.u32 %v566, %v564
      %v570 = vshll.u32 %v473, 16
      %v572 = vrot.slane %v570, 1
      %v573 = vsel %vm497, %v568, %v572
      %v574 = vshrl.u32 %v473, 16
      %v576 = vor.u32 %v574, %v572
      %v578 = vshll.u32 %v474, 16
      %v580 = vrot.slane %v578, 1
      %v581 = vsel %vm497, %v576, %v580
      %v582 = vshrl.u32 %v474, 16
      %v584 = vor.u32 %v582, %v580
      %v586 = vshll.u32 %v475, 16
      %v588 = vrot.slane %v586, 1
      %v589 = vsel %vm497, %v584, %v588
      %v590 = vshrl.u32 %v475, 16
      %v592 = vor.u32 %v590, %v588
      %v594 = vshll.u32 %v476, 16
      %v596 = vrot.slane %v594, 1
      %v597 = vsel %vm497, %v592, %v596
      %v598 = vshrl.u32 %v476, 16
      %v600 = vor.u32 %v598, %v596
      %v602 = vshll.u32 %v477, 16
      %v604 = vrot.slane %v602, 1
      %v605 = vsel %vm497, %v600, %v604
      %v606 = vshrl.u32 %v477, 16
      %v608 = vor.u32 %v606, %v604
      %v610 = vshll.u32 %v478, 16
      %v612 = vrot.slane %v610, 1
      %v613 = vsel %vm497, %v608, %v612
      %v614 = vshrl.u32 %v478, 16
      %v616 = vor.u32 %v614, %v612
      %v618 = vshll.u32 %v496, 16
      %v620 = vrot.slane %v618, 1
      %v621 = vsel %vm497, %v616, %v620
      %v638 = vunpack.c.l.b16 %v403
      %v639 = vpack.c.b16 %v435, %v638
      %vm640 = vcmask 1046528
      %v641 = vrot.slane %v639, 1
      %v642 = vrot.slane %v465, 1
      %v643 = vsel %vm640, %v641, %v642
      %v644 = vrot.slane %v466, 1
      %v645 = vsel %vm640, %v642, %v644
      %v646 = vrot.slane %v467, 1
      %v647 = vsel %vm640, %v644, %v646
      %v648 = vrot.slane %v468, 1
      %v649 = vsel %vm640, %v646, %v648
      %v650 = vrot.slane %v469, 1
      %v651 = vsel %vm640, %v648, %v650
      %v652 = vrot.slane %v470, 1
      %v653 = vsel %vm640, %v650, %v652
      %v654 = vrot.slane %v471, 1
      %v655 = vsel %vm640, %v652, %v654
      %v656 = vrot.slane %v472, 1
      %v657 = vsel %vm640, %v654, %v656
      %v658 = vrot.slane %v473, 1
      %v659 = vsel %vm640, %v656, %v658
      %v660 = vrot.slane %v474, 1
      %v661 = vsel %vm640, %v658, %v660
      %v662 = vrot.slane %v475, 1
      %v663 = vsel %vm640, %v660, %v662
      %v664 = vrot.slane %v476, 1
      %v665 = vsel %vm640, %v662, %v664
      %v666 = vrot.slane %v477, 1
      %v667 = vsel %vm640, %v664, %v666
      %v668 = vrot.slane %v478, 1
      %v669 = vsel %vm640, %v666, %v668
      %v670 = vrot.slane %v496, 1
      %v671 = vsel %vm640, %v668, %v670
      %v687 = vld [vmem:[%s1] sm:$0xf]
      %v688 = vld [vmem:[%s1 + $0x4] sm:$0xf]
      %v689 = vld [vmem:[%s1 + $0x8] sm:$0xf]
      %v690 = vld [vmem:[%s1 + $0xc] sm:$0xf]
      %v691 = vld [vmem:[%s1 + $0x10] sm:$0xf]
      %v692 = vld [vmem:[%s1 + $0x14] sm:$0xf]
      %v693 = vld [vmem:[%s1 + $0x18] sm:$0xf]
      %v694 = vld [vmem:[%s1 + $0x1c] sm:$0xf]
      %v695 = vld [vmem:[%s1 + $0x20] sm:$0xf]
      %v696 = vld [vmem:[%s1 + $0x24] sm:$0xf]
      %v697 = vld [vmem:[%s1 + $0x28] sm:$0xf]
      %v698 = vld [vmem:[%s1 + $0x2c] sm:$0xf]
      %v699 = vld [vmem:[%s1 + $0x30] sm:$0xf]
      %v700 = vld [vmem:[%s1 + $0x34] sm:$0xf]
      %v701 = vld [vmem:[%s1 + $0x38] sm:$0xf]
      %v702 = vld [vmem:[%s1 + $0x3c] sm:$0xf]
      %v703 = vld [vmem:[%s1 + $0x40] sm:$0xf]
      %v704 = vld [vmem:[%s1 + $0x44] sm:$0xf]
      %v705 = vld [vmem:[%s1 + $0x48] sm:$0xf]
      %v706 = vld [vmem:[%s1 + $0x4c] sm:$0xf]
      %v707 = vld [vmem:[%s1 + $0x50] sm:$0xf]
      %v708 = vld [vmem:[%s1 + $0x54] sm:$0xf]
      %v709 = vld [vmem:[%s1 + $0x58] sm:$0xf]
      %v710 = vld [vmem:[%s1 + $0x5c] sm:$0xf]
      %v711 = vld [vmem:[%s1 + $0x60] sm:$0xf]
      %v712 = vld [vmem:[%s1 + $0x64] sm:$0xf]
      %v713 = vld [vmem:[%s1 + $0x68] sm:$0xf]
      %v714 = vld [vmem:[%s1 + $0x6c] sm:$0xf]
      %v715 = vld [vmem:[%s1 + $0x70] sm:$0xf]
      %v716 = vld [vmem:[%s1 + $0x74] sm:$0xf]
      %v717 = vld [vmem:[%s1 + $0x78] sm:$0xf]
      %v718 = vld [vmem:[%s1 + $0x7c] sm:$0xf]
      %v719 = vld [vmem:[%s1 + $0x80] sm:$0xf]
      %v720 = vld [vmem:[%s1 + $0x84] sm:$0xf]
      %v721 = vld [vmem:[%s1 + $0x88] sm:$0xf]
      %v722 = vld [vmem:[%s1 + $0x8c] sm:$0xf]
      %v723 = vld [vmem:[%s1 + $0x90] sm:$0xf]
      %v724 = vld [vmem:[%s1 + $0x94] sm:$0xf]
      %v725 = vld [vmem:[%s1 + $0x98] sm:$0xf]
      %v726 = vld [vmem:[%s1 + $0x9c] sm:$0xf]
      %v727 = vld [vmem:[%s1 + $0xa0] sm:$0xf]
      %v728 = vld [vmem:[%s1 + $0xa4] sm:$0xf]
      %v729 = vld [vmem:[%s1 + $0xa8] sm:$0xf]
      %v730 = vld [vmem:[%s1 + $0xac] sm:$0xf]
      %v731 = vld [vmem:[%s1 + $0xb0] sm:$0xf]
      %v732 = vld [vmem:[%s1 + $0xb4] sm:$0xf]
      %v733 = vld [vmem:[%s1 + $0xb8] sm:$0xf]
      %v734 = vld [vmem:[%s1 + $0xbc] sm:$0xf]
      %v735 = vld [vmem:[#allocation2 + $0x78] sm:$0xf]
      %v736 = vld [vmem:[#allocation2 + $0x7c] sm:$0xf]
      %v737 = vld [vmem:[#allocation2 + $0x80] sm:$0xf]
      %v738 = vld [vmem:[#allocation2 + $0x84] sm:$0x1]
      %v739 = vld [vmem:[#allocation2 + $0xc] sm:$0xe]
      %v743 = vunpack.c.l.b16 %v735
      %v744 = vunpack.c.l.b16 %v736
      %v745 = vunpack.c.l.b16 %v737
      %v746 = vpack.c.b16 %v438, %v437
      %v747 = vpack.c.b16 %v440, %v439
      %v748 = vpack.c.b16 %v442, %v441
      %v749 = vpack.c.b16 %v444, %v443
      %v750 = vpack.c.b16 %v446, %v445
      %v751 = vpack.c.b16 %v448, %v447
      %v752 = vpack.c.b16 %v450, %v449
      %v753 = vpack.c.b16 %v452, %v451
      %v754 = vpack.c.b16 %v454, %v453
      %v755 = vpack.c.b16 %v456, %v455
      %v756 = vpack.c.b16 %v458, %v457
      %v757 = vpack.c.b16 %v460, %v459
      %v758 = vpack.c.b16 %v462, %v461
      %v759 = vpack.c.b16 %v743, %v463
      %v760 = vpack.c.b16 %v745, %v744
      %v777 = vunpack.c.l.b16 %v738
      %v778 = vpack.c.b16 %v777, %v777
      %v780 = vshrl.u32 %v746, 16
      %v782 = vshll.u32 %v746, 16
      %v784 = vrot.slane %v782, 1
      %v785 = vor.u32 %v780, %v784
      %v787 = vshll.u32 %v747, 16
      %v789 = vrot.slane %v787, 1
      %v790 = vsel %vm497, %v785, %v789
      %v791 = vshrl.u32 %v747, 16
      %v793 = vor.u32 %v791, %v789
      %v795 = vshll.u32 %v748, 16
      %v797 = vrot.slane %v795, 1
      %v798 = vsel %vm497, %v793, %v797
      %v799 = vshrl.u32 %v748, 16
      %v801 = vor.u32 %v799, %v797
      %v803 = vshll.u32 %v749, 16
      %v805 = vrot.slane %v803, 1
      %v806 = vsel %vm497, %v801, %v805
      %v807 = vshrl.u32 %v749, 16
      %v809 = vor.u32 %v807, %v805
      %v811 = vshll.u32 %v750, 16
      %v813 = vrot.slane %v811, 1
      %v814 = vsel %vm497, %v809, %v813
      %v815 = vshrl.u32 %v750, 16
      %v817 = vor.u32 %v815, %v813
      %v819 = vshll.u32 %v751, 16
      %v821 = vrot.slane %v819, 1
      %v822 = vsel %vm497, %v817, %v821
      %v823 = vshrl.u32 %v751, 16
      %v825 = vor.u32 %v823, %v821
      %v827 = vshll.u32 %v752, 16
      %v829 = vrot.slane %v827, 1
      %v830 = vsel %vm497, %v825, %v829
      %v831 = vshrl.u32 %v752, 16
      %v833 = vor.u32 %v831, %v829
      %v835 = vshll.u32 %v753, 16
      %v837 = vrot.slane %v835, 1
      %v838 = vsel %vm497, %v833, %v837
      %v839 = vshrl.u32 %v753, 16
      %v841 = vor.u32 %v839, %v837
      %v843 = vshll.u32 %v754, 16
      %v845 = vrot.slane %v843, 1
      %v846 = vsel %vm497, %v841, %v845
      %v847 = vshrl.u32 %v754, 16
      %v849 = vor.u32 %v847, %v845
      %v851 = vshll.u32 %v755, 16
      %v853 = vrot.slane %v851, 1
      %v854 = vsel %vm497, %v849, %v853
      %v855 = vshrl.u32 %v755, 16
      %v857 = vor.u32 %v855, %v853
      %v859 = vshll.u32 %v756, 16
      %v861 = vrot.slane %v859, 1
      %v862 = vsel %vm497, %v857, %v861
      %v863 = vshrl.u32 %v756, 16
      %v865 = vor.u32 %v863, %v861
      %v867 = vshll.u32 %v757, 16
      %v869 = vrot.slane %v867, 1
      %v870 = vsel %vm497, %v865, %v869
      %v871 = vshrl.u32 %v757, 16
      %v873 = vor.u32 %v871, %v869
      %v875 = vshll.u32 %v758, 16
      %v877 = vrot.slane %v875, 1
      %v878 = vsel %vm497, %v873, %v877
      %v879 = vshrl.u32 %v758, 16
      %v881 = vor.u32 %v879, %v877
      %v883 = vshll.u32 %v759, 16
      %v885 = vrot.slane %v883, 1
      %v886 = vsel %vm497, %v881, %v885
      %v887 = vshrl.u32 %v759, 16
      %v889 = vor.u32 %v887, %v885
      %v891 = vshll.u32 %v760, 16
      %v893 = vrot.slane %v891, 1
      %v894 = vsel %vm497, %v889, %v893
      %v895 = vshrl.u32 %v760, 16
      %v897 = vor.u32 %v895, %v893
      %v899 = vshll.u32 %v778, 16
      %v901 = vrot.slane %v899, 1
      %v902 = vsel %vm497, %v897, %v901
      %v919 = vunpack.c.l.b16 %v739
      %v920 = vpack.c.b16 %v438, %v919
      %v921 = vrot.slane %v920, 1
      %v922 = vrot.slane %v747, 1
      %v923 = vsel %vm640, %v921, %v922
      %v924 = vrot.slane %v748, 1
      %v925 = vsel %vm640, %v922, %v924
      %v926 = vrot.slane %v749, 1
      %v927 = vsel %vm640, %v924, %v926
      %v928 = vrot.slane %v750, 1
      %v929 = vsel %vm640, %v926, %v928
      %v930 = vrot.slane %v751, 1
      %v931 = vsel %vm640, %v928, %v930
      %v932 = vrot.slane %v752, 1
      %v933 = vsel %vm640, %v930, %v932
      %v934 = vrot.slane %v753, 1
      %v935 = vsel %vm640, %v932, %v934
      %v936 = vrot.slane %v754, 1
      %v937 = vsel %vm640, %v934, %v936
      %v938 = vrot.slane %v755, 1
      %v939 = vsel %vm640, %v936, %v938
      %v940 = vrot.slane %v756, 1
      %v941 = vsel %vm640, %v938, %v940
      %v942 = vrot.slane %v757, 1
      %v943 = vsel %vm640, %v940, %v942
      %v944 = vrot.slane %v758, 1
      %v945 = vsel %vm640, %v942, %v944
      %v946 = vrot.slane %v759, 1
      %v947 = vsel %vm640, %v944, %v946
      %v948 = vrot.slane %v760, 1
      %v949 = vsel %vm640, %v946, %v948
      %v950 = vrot.slane %v778, 1
      %v951 = vsel %vm640, %v948, %v950
      %s967 = scalar_lea.vmem %s1, 192
      %v968 = vld [vmem:[%s967] sm:$0xf]
      %v969 = vld [vmem:[%s967 + $0x4] sm:$0xf]
      %v970 = vld [vmem:[%s967 + $0x8] sm:$0xf]
      %v971 = vld [vmem:[%s967 + $0xc] sm:$0xf]
      %v972 = vld [vmem:[%s967 + $0x10] sm:$0xf]
      %v973 = vld [vmem:[%s967 + $0x14] sm:$0xf]
      %v974 = vld [vmem:[%s967 + $0x18] sm:$0xf]
      %v975 = vld [vmem:[%s967 + $0x1c] sm:$0xf]
      %v976 = vld [vmem:[%s967 + $0x20] sm:$0xf]
      %v977 = vld [vmem:[%s967 + $0x24] sm:$0xf]
      %v978 = vld [vmem:[%s967 + $0x28] sm:$0xf]
      %v979 = vld [vmem:[%s967 + $0x2c] sm:$0xf]
      %v980 = vld [vmem:[%s967 + $0x30] sm:$0xf]
      %v981 = vld [vmem:[%s967 + $0x34] sm:$0xf]
      %v982 = vld [vmem:[%s967 + $0x38] sm:$0xf]
      %v983 = vld [vmem:[%s967 + $0x3c] sm:$0xf]
      %v984 = vld [vmem:[%s967 + $0x40] sm:$0xf]
      %v985 = vld [vmem:[%s967 + $0x44] sm:$0xf]
      %v986 = vld [vmem:[%s967 + $0x48] sm:$0xf]
      %v987 = vld [vmem:[%s967 + $0x4c] sm:$0xf]
      %v988 = vld [vmem:[%s967 + $0x50] sm:$0xf]
      %v989 = vld [vmem:[%s967 + $0x54] sm:$0xf]
      %v990 = vld [vmem:[%s967 + $0x58] sm:$0xf]
      %v991 = vld [vmem:[%s967 + $0x5c] sm:$0xf]
      %v992 = vld [vmem:[%s967 + $0x60] sm:$0xf]
      %v993 = vld [vmem:[%s967 + $0x64] sm:$0xf]
      %v994 = vld [vmem:[%s967 + $0x68] sm:$0xf]
      %v995 = vld [vmem:[%s967 + $0x6c] sm:$0xf]
      %v996 = vld [vmem:[%s967 + $0x70] sm:$0xf]
      %v997 = vld [vmem:[%s967 + $0x74] sm:$0xf]
      %v998 = vld [vmem:[%s967 + $0x78] sm:$0xf]
      %v999 = vld [vmem:[%s967 + $0x7c] sm:$0xf]
      %v1000 = vld [vmem:[%s967 + $0x80] sm:$0xf]
      %v1001 = vld [vmem:[%s967 + $0x84] sm:$0xf]
      %v1002 = vld [vmem:[%s967 + $0x88] sm:$0xf]
      %v1003 = vld [vmem:[%s967 + $0x8c] sm:$0xf]
      %v1004 = vld [vmem:[%s967 + $0x90] sm:$0xf]
      %v1005 = vld [vmem:[%s967 + $0x94] sm:$0xf]
      %v1006 = vld [vmem:[%s967 + $0x98] sm:$0xf]
      %v1007 = vld [vmem:[%s967 + $0x9c] sm:$0xf]
      %v1008 = vld [vmem:[%s967 + $0xa0] sm:$0xf]
      %v1009 = vld [vmem:[%s967 + $0xa4] sm:$0xf]
      %v1010 = vld [vmem:[%s967 + $0xa8] sm:$0xf]
      %v1011 = vld [vmem:[%s967 + $0xac] sm:$0xf]
      %v1012 = vld [vmem:[%s967 + $0xb0] sm:$0xf]
      %v1013 = vld [vmem:[%s967 + $0xb4] sm:$0xf]
      %v1014 = vld [vmem:[%s967 + $0xb8] sm:$0xf]
      %v1015 = vld [vmem:[%s967 + $0xbc] sm:$0xf]
      %v1064 = vunpack.c.l.b16 %v968
      %v1065 = vunpack.c.l.b16 %v969
      %v1066 = vunpack.c.l.b16 %v970
      %v1067 = vunpack.c.l.b16 %v971
      %v1068 = vunpack.c.l.b16 %v972
      %v1069 = vunpack.c.l.b16 %v973
      %v1070 = vunpack.c.l.b16 %v974
      %v1071 = vunpack.c.l.b16 %v975
      %v1072 = vunpack.c.l.b16 %v976
      %v1073 = vunpack.c.l.b16 %v977
      %v1074 = vunpack.c.l.b16 %v978
      %v1075 = vunpack.c.l.b16 %v979
      %v1076 = vunpack.c.l.b16 %v980
      %v1077 = vunpack.c.l.b16 %v981
      %v1078 = vunpack.c.l.b16 %v982
      %v1079 = vunpack.c.l.b16 %v983
      %v1080 = vunpack.c.l.b16 %v984
      %v1081 = vunpack.c.l.b16 %v985
      %v1082 = vunpack.c.l.b16 %v986
      %v1083 = vunpack.c.l.b16 %v987
      %v1084 = vunpack.c.l.b16 %v988
      %v1085 = vunpack.c.l.b16 %v989
      %v1086 = vunpack.c.l.b16 %v990
      %v1087 = vunpack.c.l.b16 %v991
      %v1088 = vunpack.c.l.b16 %v992
      %v1089 = vunpack.c.l.b16 %v993
      %v1090 = vunpack.c.l.b16 %v994
      %v1091 = vunpack.c.l.b16 %v995
      %v1092 = vunpack.c.l.b16 %v996
      %v1093 = vunpack.c.l.b16 %v997
      %v1094 = vunpack.c.l.b16 %v998
      %v1095 = vunpack.c.l.b16 %v999
      %v1096 = vunpack.c.l.b16 %v1000
      %v1097 = vunpack.c.l.b16 %v1001
      %v1098 = vunpack.c.l.b16 %v1002
      %v1099 = vunpack.c.l.b16 %v1003
      %v1100 = vunpack.c.l.b16 %v1004
      %v1101 = vunpack.c.l.b16 %v1005
      %v1102 = vunpack.c.l.b16 %v1006
      %v1103 = vunpack.c.l.b16 %v1007
      %v1104 = vunpack.c.l.b16 %v1008
      %v1105 = vunpack.c.l.b16 %v1009
      %v1106 = vunpack.c.l.b16 %v1010
      %v1107 = vunpack.c.l.b16 %v1011
      %v1108 = vunpack.c.l.b16 %v1012
      %v1109 = vunpack.c.l.b16 %v1013
      %v1110 = vunpack.c.l.b16 %v1014
      %v1111 = vunpack.c.l.b16 %v1015
      %v1112 = vpack.c.b16 %v1065, %v1064
      %v1113 = vpack.c.b16 %v1067, %v1066
      %v1114 = vpack.c.b16 %v1069, %v1068
      %v1115 = vpack.c.b16 %v1071, %v1070
      %v1116 = vpack.c.b16 %v1073, %v1072
      %v1117 = vpack.c.b16 %v1075, %v1074
      %v1118 = vpack.c.b16 %v1077, %v1076
      %v1119 = vpack.c.b16 %v1079, %v1078
      %v1120 = vpack.c.b16 %v1081, %v1080
      %v1121 = vpack.c.b16 %v1083, %v1082
      %v1122 = vpack.c.b16 %v1085, %v1084
      %v1123 = vpack.c.b16 %v1087, %v1086
      %v1124 = vpack.c.b16 %v1089, %v1088
      %v1125 = vpack.c.b16 %v1091, %v1090
      %v1126 = vpack.c.b16 %v1093, %v1092
      %v1127 = vpack.c.b16 %v1095, %v1094
      %v1128 = vpack.c.b16 %v1097, %v1096
      %v1129 = vpack.c.b16 %v1099, %v1098
      %v1130 = vpack.c.b16 %v1101, %v1100
      %v1131 = vpack.c.b16 %v1103, %v1102
      %v1132 = vpack.c.b16 %v1105, %v1104
      %v1133 = vpack.c.b16 %v1107, %v1106
      %v1134 = vpack.c.b16 %v1109, %v1108
      %v1135 = vpack.c.b16 %v1111, %v1110
      %1160 = vmatprep.subr.bf16.mxu0 0
      %1161 = vmatpush1.bf16.msra.mxu0 %v1112
      %1162 = vmatprep.subr.bf16.mxu0 0
      %1163 = vmatpush1.bf16.msra.mxu0 %v1113
      %1164 = vmatprep.subr.bf16.mxu0 0
      %1165 = vmatpush1.bf16.msra.mxu0 %v1114
      %1166 = vmatprep.subr.bf16.mxu0 0
      %1167 = vmatpush1.bf16.msra.mxu0 %v1115
      %1168 = vmatprep.subr.bf16.mxu0 0
      %1169 = vmatpush1.bf16.msra.mxu0 %v1116
      %1170 = vmatprep.subr.bf16.mxu0 0
      %1171 = vmatpush1.bf16.msra.mxu0 %v1117
      %1172 = vmatprep.subr.bf16.mxu0 0
      %1173 = vmatpush1.bf16.msra.mxu0 %v1118
      %1174 = vmatprep.subr.bf16.mxu0 0
      %1175 = vmatpush1.bf16.msra.mxu0 %v1119
      %1176 = vmatprep.subr.bf16.mxu0 0
      %1177 = vmatpush1.bf16.msra.mxu0 %v1120
      %1178 = vmatprep.subr.bf16.mxu0 0
      %1179 = vmatpush1.bf16.msra.mxu0 %v1121
      %1180 = vmatprep.subr.bf16.mxu0 0
      %1181 = vmatpush1.bf16.msra.mxu0 %v1122
      %1182 = vmatprep.subr.bf16.mxu0 0
      %1183 = vmatpush1.bf16.msra.mxu0 %v1123
      %1184 = vmatprep.subr.bf16.mxu0 0
      %1185 = vmatpush1.bf16.msra.mxu0 %v1124
      %1186 = vmatprep.subr.bf16.mxu0 0
      %1187 = vmatpush1.bf16.msra.mxu0 %v1125
      %1188 = vmatprep.subr.bf16.mxu0 0
      %1189 = vmatpush1.bf16.msra.mxu0 %v1126
      %1190 = vmatprep.subr.bf16.mxu0 0
      %1191 = vmatpush1.bf16.msra.mxu0 %v1127
      %1192 = vmatprep.mubr.bf16.mxu0 %v790
      %1193 = vmatmul.mubr.bf16.gmra.mrb[0].mxu0 %v746
      %v1194 = vpop.f32.mrb[0].mxu0
      %v1195 = vadd.f32 0.0, %v1194
      %v1196 = vpop.f32.mrb[0].mxu0
      %v1197 = vpop.f32.mrb[0].mxu0
      %v1198 = vadd.f32 0.0, %v1197
      %v1199 = vpop.f32.mrb[0].mxu0
      %1200 = vmatprep.mubr.bf16.mxu0 %v798
      %1201 = vmatmul.mubr.bf16.gmra.mrb[0].mxu0 %v747
      %v1202 = vpop.f32.mrb[0].mxu0
      %v1203 = vadd.f32 0.0, %v1202
      %v1204 = vpop.f32.mrb[0].mxu0
      %v1205 = vpop.f32.mrb[0].mxu0
      %v1206 = vadd.f32 0.0, %v1205
      %v1207 = vpop.f32.mrb[0].mxu0
      %1208 = vmatprep.mubr.bf16.mxu0 %v806
      %1209 = vmatmul.mubr.bf16.gmra.mrb[0].mxu0 %v748
      %v1210 = vpop.f32.mrb[0].mxu0
      %v1211 = vadd.f32 0.0, %v1210
      %v1212 = vpop.f32.mrb[0].mxu0
      %v1213 = vpop.f32.mrb[0].mxu0
      %v1214 = vadd.f32 0.0, %v1213
      %v1215 = vpop.f32.mrb[0].mxu0
      %1216 = vmatprep.mubr.bf16.mxu0 %v814
      %1217 = vmatmul.mubr.bf16.gmra.mrb[0].mxu0 %v749
      %v1218 = vpop.f32.mrb[0].mxu0
      %v1219 = vadd.f32 0.0, %v1218
      %v1220 = vpop.f32.mrb[0].mxu0
      %v1221 = vpop.f32.mrb[0].mxu0
      %v1222 = vadd.f32 0.0, %v1221
      %v1223 = vpop.f32.mrb[0].mxu0
      %1224 = vmatprep.mubr.bf16.mxu0 %v822
      %1225 = vmatmul.mubr.bf16.gmra.mrb[0].mxu0 %v750
      %v1226 = vpop.f32.mrb[0].mxu0
      %v1227 = vadd.f32 0.0, %v1226
      %v1228 = vpop.f32.mrb[0].mxu0
      %v1229 = vpop.f32.mrb[0].mxu0
      %v1230 = vadd.f32 0.0, %v1229
      %v1231 = vpop.f32.mrb[0].mxu0
      %1232 = vmatprep.mubr.bf16.mxu0 %v830
      %1233 = vmatmul.mubr.bf16.gmra.mrb[0].mxu0 %v751
      %v1234 = vpop.f32.mrb[0].mxu0
      %v1235 = vadd.f32 0.0, %v1234
      %v1236 = vpop.f32.mrb[0].mxu0
      %v1237 = vpop.f32.mrb[0].mxu0
      %v1238 = vadd.f32 0.0, %v1237
      %v1239 = vpop.f32.mrb[0].mxu0
      %1240 = vmatprep.mubr.bf16.mxu0 %v838
      %1241 = vmatmul.mubr.bf16.gmra.mrb[0].mxu0 %v752
      %v1242 = vpop.f32.mrb[0].mxu0
      %v1243 = vadd.f32 0.0, %v1242
      %v1244 = vpop.f32.mrb[0].mxu0
      %v1245 = vpop.f32.mrb[0].mxu0
      %v1246 = vadd.f32 0.0, %v1245
      %v1247 = vpop.f32.mrb[0].mxu0
      %1248 = vmatprep.mubr.bf16.mxu0 %v846
      %1249 = vmatmul.mubr.bf16.gmra.mrb[0].mxu0 %v753
      %v1250 = vpop.f32.mrb[0].mxu0
      %v1251 = vadd.f32 0.0, %v1250
      %v1252 = vpop.f32.mrb[0].mxu0
      %v1253 = vpop.f32.mrb[0].mxu0
      %v1254 = vadd.f32 0.0, %v1253
      %v1255 = vpop.f32.mrb[0].mxu0
      %1256 = vmatprep.mubr.bf16.mxu0 %v854
      %1257 = vmatmul.mubr.bf16.gmra.mrb[0].mxu0 %v754
      %v1258 = vpop.f32.mrb[0].mxu0
      %v1259 = vadd.f32 0.0, %v1258
      %v1260 = vpop.f32.mrb[0].mxu0
      %v1261 = vpop.f32.mrb[0].mxu0
      %v1262 = vadd.f32 0.0, %v1261
      %v1263 = vpop.f32.mrb[0].mxu0
      %1264 = vmatprep.mubr.bf16.mxu0 %v862
      %1265 = vmatmul.mubr.bf16.gmra.mrb[0].mxu0 %v755
      %v1266 = vpop.f32.mrb[0].mxu0
      %v1267 = vadd.f32 0.0, %v1266
      %v1268 = vpop.f32.mrb[0].mxu0
      %v1269 = vpop.f32.mrb[0].mxu0
      %v1270 = vadd.f32 0.0, %v1269
      %v1271 = vpop.f32.mrb[0].mxu0
      %1272 = vmatprep.mubr.bf16.mxu0 %v870
      %1273 = vmatmul.mubr.bf16.gmra.mrb[0].mxu0 %v756
      %v1274 = vpop.f32.mrb[0].mxu0
      %v1275 = vadd.f32 0.0, %v1274
      %v1276 = vpop.f32.mrb[0].mxu0
      %v1277 = vpop.f32.mrb[0].mxu0
      %v1278 = vadd.f32 0.0, %v1277
      %v1279 = vpop.f32.mrb[0].mxu0
      %1280 = vmatprep.mubr.bf16.mxu0 %v878
      %1281 = vmatmul.mubr.bf16.gmra.mrb[0].mxu0 %v757
      %v1282 = vpop.f32.mrb[0].mxu0
      %v1283 = vadd.f32 0.0, %v1282
      %v1284 = vpop.f32.mrb[0].mxu0
      %v1285 = vpop.f32.mrb[0].mxu0
      %v1286 = vadd.f32 0.0, %v1285
      %v1287 = vpop.f32.mrb[0].mxu0
      %1288 = vmatprep.mubr.bf16.mxu0 %v886
      %1289 = vmatmul.mubr.bf16.gmra.mrb[0].mxu0 %v758
      %v1290 = vpop.f32.mrb[0].mxu0
      %v1291 = vadd.f32 0.0, %v1290
      %v1292 = vpop.f32.mrb[0].mxu0
      %v1293 = vpop.f32.mrb[0].mxu0
      %v1294 = vadd.f32 0.0, %v1293
      %v1295 = vpop.f32.mrb[0].mxu0
      %1296 = vmatprep.mubr.bf16.mxu0 %v894
      %1297 = vmatmul.mubr.bf16.gmra.mrb[0].mxu0 %v759
      %v1298 = vpop.f32.mrb[0].mxu0
      %v1299 = vadd.f32 0.0, %v1298
      %v1300 = vpop.f32.mrb[0].mxu0
      %v1301 = vpop.f32.mrb[0].mxu0
      %v1302 = vadd.f32 0.0, %v1301
      %v1303 = vpop.f32.mrb[0].mxu0
      %1304 = vmatprep.mubr.bf16.mxu0 %v902
      %1305 = vmatmul.mubr.bf16.gmra.mrb[0].mxu0 %v760
      %v1306 = vpop.f32.mrb[0].mxu0
      %v1307 = vadd.f32 0.0, %v1306
      %v1308 = vpop.f32.mrb[0].mxu0
      %v1309 = vpop.f32.mrb[0].mxu0
      %v1310 = vadd.f32 0.0, %v1309
      %v1311 = vpop.f32.mrb[0].mxu0
      %1312 = vdwg.mxu0
      %1313 = vmatprep.subr.bf16.mxu0 0
      %1314 = vmatpush1.bf16.msra.mxu0 %v1128
      %1315 = vmatprep.subr.bf16.mxu0 0
      %1316 = vmatpush1.bf16.msra.mxu0 %v1129
      %1317 = vmatprep.subr.bf16.mxu0 0
      %1318 = vmatpush1.bf16.msra.mxu0 %v1130
      %1319 = vmatprep.subr.bf16.mxu0 0
      %1320 = vmatpush1.bf16.msra.mxu0 %v1131
      %1321 = vmatprep.subr.bf16.mxu0 0
      %1322 = vmatpush1.bf16.msra.mxu0 %v1132
      %1323 = vmatprep.subr.bf16.mxu0 0
      %1324 = vmatpush1.bf16.msra.mxu0 %v1133
      %1325 = vmatprep.subr.bf16.mxu0 0
      %1326 = vmatpush1.bf16.msra.mxu0 %v1134
      %1327 = vmatprep.subr.bf16.mxu0 0
      %1328 = vmatpush1.bf16.msra.mxu0 %v1135
      %1329 = vmatprep.subr.bf16.mxu0 0
      %1330 = vmatpush1.bf16.msra.mxu0 0
      %1331 = vmatprep.subr.bf16.mxu0 0
      %1332 = vmatpush1.bf16.msra.mxu0 0
      %1333 = vmatprep.subr.bf16.mxu0 0
      %1334 = vmatpush1.bf16.msra.mxu0 0
      %1335 = vmatprep.subr.bf16.mxu0 0
      %1336 = vmatpush1.bf16.msra.mxu0 0
      %1337 = vmatprep.subr.bf16.mxu0 0
      %1338 = vmatpush1.bf16.msra.mxu0 0
      %1339 = vmatprep.subr.bf16.mxu0 0
      %1340 = vmatpush1.bf16.msra.mxu0 0
      %1341 = vmatprep.subr.bf16.mxu0 0
      %1342 = vmatpush1.bf16.msra.mxu0 0
      %1343 = vmatprep.subr.bf16.mxu0 0
      %1344 = vmatpush1.bf16.msra.mxu0 0
      %1345 = vmatprep.mubr.bf16.mxu0 0
      %1346 = vmatmul.mubr.bf16.gmra.mrb[0].mxu0 %v923
      %v1347 = vpop.f32.mrb[0].mxu0
      %v1348 = vadd.f32 %v1195, %v1347
      %v1349 = vpop.f32.mrb[0].mxu0
      %v1350 = vpop.f32.mrb[0].mxu0
      %v1351 = vadd.f32 %v1198, %v1350
      %v1352 = vpop.f32.mrb[0].mxu0
      %1353 = vmatprep.mubr.bf16.mxu0 0
      %1354 = vmatmul.mubr.bf16.gmra.mrb[0].mxu0 %v925
      %v1355 = vpop.f32.mrb[0].mxu0
      %v1356 = vadd.f32 %v1203, %v1355
      %v1357 = vpop.f32.mrb[0].mxu0
      %v1358 = vpop.f32.mrb[0].mxu0
      %v1359 = vadd.f32 %v1206, %v1358
      %v1360 = vpop.f32.mrb[0].mxu0
      %1361 = vmatprep.mubr.bf16.mxu0 0
      %1362 = vmatmul.mubr.bf16.gmra.mrb[0].mxu0 %v927
      %v1363 = vpop.f32.mrb[0].mxu0
      %v1364 = vadd.f32 %v1211, %v1363
      %v1365 = vpop.f32.mrb[0].mxu0
      %v1366 = vpop.f32.mrb[0].mxu0
      %v1367 = vadd.f32 %v1214, %v1366
      %v1368 = vpop.f32.mrb[0].mxu0
      %1369 = vmatprep.mubr.bf16.mxu0 0
      %1370 = vmatmul.mubr.bf16.gmra.mrb[0].mxu0 %v929
      %v1371 = vpop.f32.mrb[0].mxu0
      %v1372 = vadd.f32 %v1219, %v1371
      %v1373 = vpop.f32.mrb[0].mxu0
      %v1374 = vpop.f32.mrb[0].mxu0
      %v1375 = vadd.f32 %v1222, %v1374
      %v1376 = vpop.f32.mrb[0].mxu0
      %1377 = vmatprep.mubr.bf16.mxu0 0
      %1378 = vmatmul.mubr.bf16.gmra.mrb[0].mxu0 %v931
      %v1379 = vpop.f32.mrb[0].mxu0
      %v1380 = vadd.f32 %v1227, %v1379
      %v1381 = vpop.f32.mrb[0].mxu0
      %v1382 = vpop.f32.mrb[0].mxu0
      %v1383 = vadd.f32 %v1230, %v1382
      %v1384 = vpop.f32.mrb[0].mxu0
      %1385 = vmatprep.mubr.bf16.mxu0 0
      %1386 = vmatmul.mubr.bf16.gmra.mrb[0].mxu0 %v933
      %v1387 = vpop.f32.mrb[0].mxu0
      %v1388 = vadd.f32 %v1235, %v1387
      %v1389 = vpop.f32.mrb[0].mxu0
      %v1390 = vpop.f32.mrb[0].mxu0
      %v1391 = vadd.f32 %v1238, %v1390
      %v1392 = vpop.f32.mrb[0].mxu0
      %1393 = vmatprep.mubr.bf16.mxu0 0
      %1394 = vmatmul.mubr.bf16.gmra.mrb[0].mxu0 %v935
      %v1395 = vpop.f32.mrb[0].mxu0
      %v1396 = vadd.f32 %v1243, %v1395
      %v1397 = vpop.f32.mrb[0].mxu0
      %v1398 = vpop.f32.mrb[0].mxu0
      %v1399 = vadd.f32 %v1246, %v1398
      %v1400 = vpop.f32.mrb[0].mxu0
      %1401 = vmatprep.mubr.bf16.mxu0 0
      %1402 = vmatmul.mubr.bf16.gmra.mrb[0].mxu0 %v937
      %v1403 = vpop.f32.mrb[0].mxu0
      %v1404 = vadd.f32 %v1251, %v1403
      %v1405 = vpop.f32.mrb[0].mxu0
      %v1406 = vpop.f32.mrb[0].mxu0
      %v1407 = vadd.f32 %v1254, %v1406
      %v1408 = vpop.f32.mrb[0].mxu0
      %1409 = vmatprep.mubr.bf16.mxu0 0
      %1410 = vmatmul.mubr.bf16.gmra.mrb[0].mxu0 %v939
      %v1411 = vpop.f32.mrb[0].mxu0
      %v1412 = vadd.f32 %v1259, %v1411
      %v1413 = vpop.f32.mrb[0].mxu0
      %v1414 = vpop.f32.mrb[0].mxu0
      %v1415 = vadd.f32 %v1262, %v1414
      %v1416 = vpop.f32.mrb[0].mxu0
      %1417 = vmatprep.mubr.bf16.mxu0 0
      %1418 = vmatmul.mubr.bf16.gmra.mrb[0].mxu0 %v941
      %v1419 = vpop.f32.mrb[0].mxu0
      %v1420 = vadd.f32 %v1267, %v1419
      %v1421 = vpop.f32.mrb[0].mxu0
      %v1422 = vpop.f32.mrb[0].mxu0
      %v1423 = vadd.f32 %v1270, %v1422
      %v1424 = vpop.f32.mrb[0].mxu0
      %1425 = vmatprep.mubr.bf16.mxu0 0
      %1426 = vmatmul.mubr.bf16.gmra.mrb[0].mxu0 %v943
      %v1427 = vpop.f32.mrb[0].mxu0
      %v1428 = vadd.f32 %v1275, %v1427
      %v1429 = vpop.f32.mrb[0].mxu0
      %v1430 = vpop.f32.mrb[0].mxu0
      %v1431 = vadd.f32 %v1278, %v1430
      %v1432 = vpop.f32.mrb[0].mxu0
      %1433 = vmatprep.mubr.bf16.mxu0 0
      %1434 = vmatmul.mubr.bf16.gmra.mrb[0].mxu0 %v945
      %v1435 = vpop.f32.mrb[0].mxu0
      %v1436 = vadd.f32 %v1283, %v1435
      %v1437 = vpop.f32.mrb[0].mxu0
      %v1438 = vpop.f32.mrb[0].mxu0
      %v1439 = vadd.f32 %v1286, %v1438
      %v1440 = vpop.f32.mrb[0].mxu0
      %1441 = vmatprep.mubr.bf16.mxu0 0
      %1442 = vmatmul.mubr.bf16.gmra.mrb[0].mxu0 %v947
      %v1443 = vpop.f32.mrb[0].mxu0
      %v1444 = vadd.f32 %v1291, %v1443
      %v1445 = vpop.f32.mrb[0].mxu0
      %v1446 = vpop.f32.mrb[0].mxu0
      %v1447 = vadd.f32 %v1294, %v1446
      %v1448 = vpop.f32.mrb[0].mxu0
      %1449 = vmatprep.mubr.bf16.mxu0 0
      %1450 = vmatmul.mubr.bf16.gmra.mrb[0].mxu0 %v949
      %v1451 = vpop.f32.mrb[0].mxu0
      %v1452 = vadd.f32 %v1299, %v1451
      %v1453 = vpop.f32.mrb[0].mxu0
      %v1454 = vpop.f32.mrb[0].mxu0
      %v1455 = vadd.f32 %v1302, %v1454
      %v1456 = vpop.f32.mrb[0].mxu0
      %1457 = vmatprep.mubr.bf16.mxu0 0
      %1458 = vmatmul.mubr.bf16.gmra.mrb[0].mxu0 %v951
      %v1459 = vpop.f32.mrb[0].mxu0
      %v1460 = vadd.f32 %v1307, %v1459
      %v1461 = vpop.f32.mrb[0].mxu0
      %v1462 = vpop.f32.mrb[0].mxu0
      %v1463 = vadd.f32 %v1310, %v1462
      %v1464 = vpop.f32.mrb[0].mxu0
      %1465 = vdwg.mxu0
      %v1514 = vunpack.c.l.b16 %v687
      %v1515 = vunpack.c.l.b16 %v688
      %v1516 = vunpack.c.l.b16 %v689
      %v1517 = vunpack.c.l.b16 %v690
      %v1518 = vunpack.c.l.b16 %v691
      %v1519 = vunpack.c.l.b16 %v692
      %v1520 = vunpack.c.l.b16 %v693
      %v1521 = vunpack.c.l.b16 %v694
      %v1522 = vunpack.c.l.b16 %v695
      %v1523 = vunpack.c.l.b16 %v696
      %v1524 = vunpack.c.l.b16 %v697
      %v1525 = vunpack.c.l.b16 %v698
      %v1526 = vunpack.c.l.b16 %v699
      %v1527 = vunpack.c.l.b16 %v700
      %v1528 = vunpack.c.l.b16 %v701
      %v1529 = vunpack.c.l.b16 %v702
      %v1530 = vunpack.c.l.b16 %v703
      %v1531 = vunpack.c.l.b16 %v704
      %v1532 = vunpack.c.l.b16 %v705
      %v1533 = vunpack.c.l.b16 %v706
      %v1534 = vunpack.c.l.b16 %v707
      %v1535 = vunpack.c.l.b16 %v708
      %v1536 = vunpack.c.l.b16 %v709
      %v1537 = vunpack.c.l.b16 %v710
      %v1538 = vunpack.c.l.b16 %v711
      %v1539 = vunpack.c.l.b16 %v712
      %v1540 = vunpack.c.l.b16 %v713
      %v1541 = vunpack.c.l.b16 %v714
      %v1542 = vunpack.c.l.b16 %v715
      %v1543 = vunpack.c.l.b16 %v716
      %v1544 = vunpack.c.l.b16 %v717
      %v1545 = vunpack.c.l.b16 %v718
      %v1546 = vunpack.c.l.b16 %v719
      %v1547 = vunpack.c.l.b16 %v720
      %v1548 = vunpack.c.l.b16 %v721
      %v1549 = vunpack.c.l.b16 %v722
      %v1550 = vunpack.c.l.b16 %v723
      %v1551 = vunpack.c.l.b16 %v724
      %v1552 = vunpack.c.l.b16 %v725
      %v1553 = vunpack.c.l.b16 %v726
      %v1554 = vunpack.c.l.b16 %v727
      %v1555 = vunpack.c.l.b16 %v728
      %v1556 = vunpack.c.l.b16 %v729
      %v1557 = vunpack.c.l.b16 %v730
      %v1558 = vunpack.c.l.b16 %v731
      %v1559 = vunpack.c.l.b16 %v732
      %v1560 = vunpack.c.l.b16 %v733
      %v1561 = vunpack.c.l.b16 %v734
      %v1562 = vpack.c.b16 %v1515, %v1514
      %v1563 = vpack.c.b16 %v1517, %v1516
      %v1564 = vpack.c.b16 %v1519, %v1518
      %v1565 = vpack.c.b16 %v1521, %v1520
      %v1566 = vpack.c.b16 %v1523, %v1522
      %v1567 = vpack.c.b16 %v1525, %v1524
      %v1568 = vpack.c.b16 %v1527, %v1526
      %v1569 = vpack.c.b16 %v1529, %v1528
      %v1570 = vpack.c.b16 %v1531, %v1530
      %v1571 = vpack.c.b16 %v1533, %v1532
      %v1572 = vpack.c.b16 %v1535, %v1534
      %v1573 = vpack.c.b16 %v1537, %v1536
      %v1574 = vpack.c.b16 %v1539, %v1538
      %v1575 = vpack.c.b16 %v1541, %v1540
      %v1576 = vpack.c.b16 %v1543, %v1542
      %v1577 = vpack.c.b16 %v1545, %v1544
      %v1578 = vpack.c.b16 %v1547, %v1546
      %v1579 = vpack.c.b16 %v1549, %v1548
      %v1580 = vpack.c.b16 %v1551, %v1550
      %v1581 = vpack.c.b16 %v1553, %v1552
      %v1582 = vpack.c.b16 %v1555, %v1554
      %v1583 = vpack.c.b16 %v1557, %v1556
      %v1584 = vpack.c.b16 %v1559, %v1558
      %v1585 = vpack.c.b16 %v1561, %v1560
      %1610 = vmatprep.subr.bf16.mxu0 0
      %1611 = vmatpush1.bf16.msra.mxu0 %v1562
      %1612 = vmatprep.subr.bf16.mxu0 0
      %1613 = vmatpush1.bf16.msra.mxu0 %v1563
      %1614 = vmatprep.subr.bf16.mxu0 0
      %1615 = vmatpush1.bf16.msra.mxu0 %v1564
      %1616 = vmatprep.subr.bf16.mxu0 0
      %1617 = vmatpush1.bf16.msra.mxu0 %v1565
      %1618 = vmatprep.subr.bf16.mxu0 0
      %1619 = vmatpush1.bf16.msra.mxu0 %v1566
      %1620 = vmatprep.subr.bf16.mxu0 0
      %1621 = vmatpush1.bf16.msra.mxu0 %v1567
      %1622 = vmatprep.subr.bf16.mxu0 0
      %1623 = vmatpush1.bf16.msra.mxu0 %v1568
      %1624 = vmatprep.subr.bf16.mxu0 0
      %1625 = vmatpush1.bf16.msra.mxu0 %v1569
      %1626 = vmatprep.subr.bf16.mxu0 0
      %1627 = vmatpush1.bf16.msra.mxu0 %v1570
      %1628 = vmatprep.subr.bf16.mxu0 0
      %1629 = vmatpush1.bf16.msra.mxu0 %v1571
      %1630 = vmatprep.subr.bf16.mxu0 0
      %1631 = vmatpush1.bf16.msra.mxu0 %v1572
      %1632 = vmatprep.subr.bf16.mxu0 0
      %1633 = vmatpush1.bf16.msra.mxu0 %v1573
      %1634 = vmatprep.subr.bf16.mxu0 0
      %1635 = vmatpush1.bf16.msra.mxu0 %v1574
      %1636 = vmatprep.subr.bf16.mxu0 0
      %1637 = vmatpush1.bf16.msra.mxu0 %v1575
      %1638 = vmatprep.subr.bf16.mxu0 0
      %1639 = vmatpush1.bf16.msra.mxu0 %v1576
      %1640 = vmatprep.subr.bf16.mxu0 0
      %1641 = vmatpush1.bf16.msra.mxu0 %v1577
      %1642 = vmatprep.mubr.bf16.mxu0 %v509
      %1643 = vmatmul.mubr.bf16.gmra.mrb[0].mxu0 %v464
      %v1644 = vpop.f32.mrb[0].mxu0
      %v1645 = vadd.f32 %v1348, %v1644
      %v1646 = vpop.f32.mrb[0].mxu0
      %v1647 = vpop.f32.mrb[0].mxu0
      %v1648 = vadd.f32 %v1351, %v1647
      %v1649 = vpop.f32.mrb[0].mxu0
      %1650 = vmatprep.mubr.bf16.mxu0 %v517
      %1651 = vmatmul.mubr.bf16.gmra.mrb[0].mxu0 %v465
      %v1652 = vpop.f32.mrb[0].mxu0
      %v1653 = vadd.f32 %v1356, %v1652
      %v1654 = vpop.f32.mrb[0].mxu0
      %v1655 = vpop.f32.mrb[0].mxu0
      %v1656 = vadd.f32 %v1359, %v1655
      %v1657 = vpop.f32.mrb[0].mxu0
      %1658 = vmatprep.mubr.bf16.mxu0 %v525
      %1659 = vmatmul.mubr.bf16.gmra.mrb[0].mxu0 %v466
      %v1660 = vpop.f32.mrb[0].mxu0
      %v1661 = vadd.f32 %v1364, %v1660
      %v1662 = vpop.f32.mrb[0].mxu0
      %v1663 = vpop.f32.mrb[0].mxu0
      %v1664 = vadd.f32 %v1367, %v1663
      %v1665 = vpop.f32.mrb[0].mxu0
      %1666 = vmatprep.mubr.bf16.mxu0 %v533
      %1667 = vmatmul.mubr.bf16.gmra.mrb[0].mxu0 %v467
      %v1668 = vpop.f32.mrb[0].mxu0
      %v1669 = vadd.f32 %v1372, %v1668
      %v1670 = vpop.f32.mrb[0].mxu0
      %v1671 = vpop.f32.mrb[0].mxu0
      %v1672 = vadd.f32 %v1375, %v1671
      %v1673 = vpop.f32.mrb[0].mxu0
      %1674 = vmatprep.mubr.bf16.mxu0 %v541
      %1675 = vmatmul.mubr.bf16.gmra.mrb[0].mxu0 %v468
      %v1676 = vpop.f32.mrb[0].mxu0
      %v1677 = vadd.f32 %v1380, %v1676
      %v1678 = vpop.f32.mrb[0].mxu0
      %v1679 = vpop.f32.mrb[0].mxu0
      %v1680 = vadd.f32 %v1383, %v1679
      %v1681 = vpop.f32.mrb[0].mxu0
      %1682 = vmatprep.mubr.bf16.mxu0 %v549
      %1683 = vmatmul.mubr.bf16.gmra.mrb[0].mxu0 %v469
      %v1684 = vpop.f32.mrb[0].mxu0
      %v1685 = vadd.f32 %v1388, %v1684
      %v1686 = vpop.f32.mrb[0].mxu0
      %v1687 = vpop.f32.mrb[0].mxu0
      %v1688 = vadd.f32 %v1391, %v1687
      %v1689 = vpop.f32.mrb[0].mxu0
      %1690 = vmatprep.mubr.bf16.mxu0 %v557
      %1691 = vmatmul.mubr.bf16.gmra.mrb[0].mxu0 %v470
      %v1692 = vpop.f32.mrb[0].mxu0
      %v1693 = vadd.f32 %v1396, %v1692
      %v1694 = vpop.f32.mrb[0].mxu0
      %v1695 = vpop.f32.mrb[0].mxu0
      %v1696 = vadd.f32 %v1399, %v1695
      %v1697 = vpop.f32.mrb[0].mxu0
      %1698 = vmatprep.mubr.bf16.mxu0 %v565
      %1699 = vmatmul.mubr.bf16.gmra.mrb[0].mxu0 %v471
      %v1700 = vpop.f32.mrb[0].mxu0
      %v1701 = vadd.f32 %v1404, %v1700
      %v1702 = vpop.f32.mrb[0].mxu0
      %v1703 = vpop.f32.mrb[0].mxu0
      %v1704 = vadd.f32 %v1407, %v1703
      %v1705 = vpop.f32.mrb[0].mxu0
      %1706 = vmatprep.mubr.bf16.mxu0 %v573
      %1707 = vmatmul.mubr.bf16.gmra.mrb[0].mxu0 %v472
      %v1708 = vpop.f32.mrb[0].mxu0
      %v1709 = vadd.f32 %v1412, %v1708
      %v1710 = vpop.f32.mrb[0].mxu0
      %v1711 = vpop.f32.mrb[0].mxu0
      %v1712 = vadd.f32 %v1415, %v1711
      %v1713 = vpop.f32.mrb[0].mxu0
      %1714 = vmatprep.mubr.bf16.mxu0 %v581
      %1715 = vmatmul.mubr.bf16.gmra.mrb[0].mxu0 %v473
      %v1716 = vpop.f32.mrb[0].mxu0
      %v1717 = vadd.f32 %v1420, %v1716
      %v1718 = vpop.f32.mrb[0].mxu0
      %v1719 = vpop.f32.mrb[0].mxu0
      %v1720 = vadd.f32 %v1423, %v1719
      %v1721 = vpop.f32.mrb[0].mxu0
      %1722 = vmatprep.mubr.bf16.mxu0 %v589
      %1723 = vmatmul.mubr.bf16.gmra.mrb[0].mxu0 %v474
      %v1724 = vpop.f32.mrb[0].mxu0
      %v1725 = vadd.f32 %v1428, %v1724
      %v1726 = vpop.f32.mrb[0].mxu0
      %v1727 = vpop.f32.mrb[0].mxu0
      %v1728 = vadd.f32 %v1431, %v1727
      %v1729 = vpop.f32.mrb[0].mxu0
      %1730 = vmatprep.mubr.bf16.mxu0 %v597
      %1731 = vmatmul.mubr.bf16.gmra.mrb[0].mxu0 %v475
      %v1732 = vpop.f32.mrb[0].mxu0
      %v1733 = vadd.f32 %v1436, %v1732
      %v1734 = vpop.f32.mrb[0].mxu0
      %v1735 = vpop.f32.mrb[0].mxu0
      %v1736 = vadd.f32 %v1439, %v1735
      %v1737 = vpop.f32.mrb[0].mxu0
      %1738 = vmatprep.mubr.bf16.mxu0 %v605
      %1739 = vmatmul.mubr.bf16.gmra.mrb[0].mxu0 %v476
      %v1740 = vpop.f32.mrb[0].mxu0
      %v1741 = vadd.f32 %v1444, %v1740
      %v1742 = vpop.f32.mrb[0].mxu0
      %v1743 = vpop.f32.mrb[0].mxu0
      %v1744 = vadd.f32 %v1447, %v1743
      %v1745 = vpop.f32.mrb[0].mxu0
      %1746 = vmatprep.mubr.bf16.mxu0 %v613
      %1747 = vmatmul.mubr.bf16.gmra.mrb[0].mxu0 %v477
      %v1748 = vpop.f32.mrb[0].mxu0
      %v1749 = vadd.f32 %v1452, %v1748
      %v1750 = vpop.f32.mrb[0].mxu0
      %v1751 = vpop.f32.mrb[0].mxu0
      %v1752 = vadd.f32 %v1455, %v1751
      %v1753 = vpop.f32.mrb[0].mxu0
      %1754 = vmatprep.mubr.bf16.mxu0 %v621
      %1755 = vmatmul.mubr.bf16.gmra.mrb[0].mxu0 %v478
      %v1756 = vpop.f32.mrb[0].mxu0
      %v1757 = vadd.f32 %v1460, %v1756
      %v1758 = vpop.f32.mrb[0].mxu0
      %v1759 = vpop.f32.mrb[0].mxu0
      %v1760 = vadd.f32 %v1463, %v1759
      %v1761 = vpop.f32.mrb[0].mxu0
      %1762 = vdwg.mxu0
      %1763 = vmatprep.subr.bf16.mxu0 0
      %1764 = vmatpush1.bf16.msra.mxu0 %v1578
      %1765 = vmatprep.subr.bf16.mxu0 0
      %1766 = vmatpush1.bf16.msra.mxu0 %v1579
      %1767 = vmatprep.subr.bf16.mxu0 0
      %1768 = vmatpush1.bf16.msra.mxu0 %v1580
      %1769 = vmatprep.subr.bf16.mxu0 0
      %1770 = vmatpush1.bf16.msra.mxu0 %v1581
      %1771 = vmatprep.subr.bf16.mxu0 0
      %1772 = vmatpush1.bf16.msra.mxu0 %v1582
      %1773 = vmatprep.subr.bf16.mxu0 0
      %1774 = vmatpush1.bf16.msra.mxu0 %v1583
      %1775 = vmatprep.subr.bf16.mxu0 0
      %1776 = vmatpush1.bf16.msra.mxu0 %v1584
      %1777 = vmatprep.subr.bf16.mxu0 0
      %1778 = vmatpush1.bf16.msra.mxu0 %v1585
      %1779 = vmatprep.subr.bf16.mxu0 0
      %1780 = vmatpush1.bf16.msra.mxu0 0
      %1781 = vmatprep.subr.bf16.mxu0 0
      %1782 = vmatpush1.bf16.msra.mxu0 0
      %1783 = vmatprep.subr.bf16.mxu0 0
      %1784 = vmatpush1.bf16.msra.mxu0 0
      %1785 = vmatprep.subr.bf16.mxu0 0
      %1786 = vmatpush1.bf16.msra.mxu0 0
      %1787 = vmatprep.subr.bf16.mxu0 0
      %1788 = vmatpush1.bf16.msra.mxu0 0
      %1789 = vmatprep.subr.bf16.mxu0 0
      %1790 = vmatpush1.bf16.msra.mxu0 0
      %1791 = vmatprep.subr.bf16.mxu0 0
      %1792 = vmatpush1.bf16.msra.mxu0 0
      %1793 = vmatprep.subr.bf16.mxu0 0
      %1794 = vmatpush1.bf16.msra.mxu0 0
      %1795 = vmatprep.mubr.bf16.mxu0 0
      %1796 = vmatmul.mubr.bf16.gmra.mrb[0].mxu0 %v643
      %v1797 = vpop.f32.mrb[0].mxu0
      %v1798 = vadd.f32 %v1645, %v1797
      %v1799 = vpop.f32.mrb[0].mxu0
      %v1800 = vpop.f32.mrb[0].mxu0
      %v1801 = vadd.f32 %v1648, %v1800
      %v1802 = vpop.f32.mrb[0].mxu0
      %1803 = vmatprep.mubr.bf16.mxu0 0
      %1804 = vmatmul.mubr.bf16.gmra.mrb[0].mxu0 %v645
      %v1805 = vpop.f32.mrb[0].mxu0
      %v1806 = vadd.f32 %v1653, %v1805
      %v1807 = vpop.f32.mrb[0].mxu0
      %v1808 = vpop.f32.mrb[0].mxu0
      %v1809 = vadd.f32 %v1656, %v1808
      %v1810 = vpop.f32.mrb[0].mxu0
      %1811 = vmatprep.mubr.bf16.mxu0 0
      %1812 = vmatmul.mubr.bf16.gmra.mrb[0].mxu0 %v647
      %v1813 = vpop.f32.mrb[0].mxu0
      %v1814 = vadd.f32 %v1661, %v1813
      %v1815 = vpop.f32.mrb[0].mxu0
      %v1816 = vpop.f32.mrb[0].mxu0
      %v1817 = vadd.f32 %v1664, %v1816
      %v1818 = vpop.f32.mrb[0].mxu0
      %1819 = vmatprep.mubr.bf16.mxu0 0
      %1820 = vmatmul.mubr.bf16.gmra.mrb[0].mxu0 %v649
      %v1821 = vpop.f32.mrb[0].mxu0
      %v1822 = vadd.f32 %v1669, %v1821
      %v1823 = vpop.f32.mrb[0].mxu0
      %v1824 = vpop.f32.mrb[0].mxu0
      %v1825 = vadd.f32 %v1672, %v1824
      %v1826 = vpop.f32.mrb[0].mxu0
      %1827 = vmatprep.mubr.bf16.mxu0 0
      %1828 = vmatmul.mubr.bf16.gmra.mrb[0].mxu0 %v651
      %v1829 = vpop.f32.mrb[0].mxu0
      %v1830 = vadd.f32 %v1677, %v1829
      %v1831 = vpop.f32.mrb[0].mxu0
      %v1832 = vpop.f32.mrb[0].mxu0
      %v1833 = vadd.f32 %v1680, %v1832
      %v1834 = vpop.f32.mrb[0].mxu0
      %1835 = vmatprep.mubr.bf16.mxu0 0
      %1836 = vmatmul.mubr.bf16.gmra.mrb[0].mxu0 %v653
      %v1837 = vpop.f32.mrb[0].mxu0
      %v1838 = vadd.f32 %v1685, %v1837
      %v1839 = vpop.f32.mrb[0].mxu0
      %v1840 = vpop.f32.mrb[0].mxu0
      %v1841 = vadd.f32 %v1688, %v1840
      %v1842 = vpop.f32.mrb[0].mxu0
      %1843 = vmatprep.mubr.bf16.mxu0 0
      %1844 = vmatmul.mubr.bf16.gmra.mrb[0].mxu0 %v655
      %v1845 = vpop.f32.mrb[0].mxu0
      %v1846 = vadd.f32 %v1693, %v1845
      %v1847 = vpop.f32.mrb[0].mxu0
      %v1848 = vpop.f32.mrb[0].mxu0
      %v1849 = vadd.f32 %v1696, %v1848
      %v1850 = vpop.f32.mrb[0].mxu0
      %1851 = vmatprep.mubr.bf16.mxu0 0
      %1852 = vmatmul.mubr.bf16.gmra.mrb[0].mxu0 %v657
      %v1853 = vpop.f32.mrb[0].mxu0
      %v1854 = vadd.f32 %v1701, %v1853
      %v1855 = vpop.f32.mrb[0].mxu0
      %v1856 = vpop.f32.mrb[0].mxu0
      %v1857 = vadd.f32 %v1704, %v1856
      %v1858 = vpop.f32.mrb[0].mxu0
      %1859 = vmatprep.mubr.bf16.mxu0 0
      %1860 = vmatmul.mubr.bf16.gmra.mrb[0].mxu0 %v659
      %v1861 = vpop.f32.mrb[0].mxu0
      %v1862 = vadd.f32 %v1709, %v1861
      %v1863 = vpop.f32.mrb[0].mxu0
      %v1864 = vpop.f32.mrb[0].mxu0
      %v1865 = vadd.f32 %v1712, %v1864
      %v1866 = vpop.f32.mrb[0].mxu0
      %1867 = vmatprep.mubr.bf16.mxu0 0
      %1868 = vmatmul.mubr.bf16.gmra.mrb[0].mxu0 %v661
      %v1869 = vpop.f32.mrb[0].mxu0
      %v1870 = vadd.f32 %v1717, %v1869
      %v1871 = vpop.f32.mrb[0].mxu0
      %v1872 = vpop.f32.mrb[0].mxu0
      %v1873 = vadd.f32 %v1720, %v1872
      %v1874 = vpop.f32.mrb[0].mxu0
      %1875 = vmatprep.mubr.bf16.mxu0 0
      %1876 = vmatmul.mubr.bf16.gmra.mrb[0].mxu0 %v663
      %v1877 = vpop.f32.mrb[0].mxu0
      %v1878 = vadd.f32 %v1725, %v1877
      %v1879 = vpop.f32.mrb[0].mxu0
      %v1880 = vpop.f32.mrb[0].mxu0
      %v1881 = vadd.f32 %v1728, %v1880
      %v1882 = vpop.f32.mrb[0].mxu0
      %1883 = vmatprep.mubr.bf16.mxu0 0
      %1884 = vmatmul.mubr.bf16.gmra.mrb[0].mxu0 %v665
      %v1885 = vpop.f32.mrb[0].mxu0
      %v1886 = vadd.f32 %v1733, %v1885
      %v1887 = vpop.f32.mrb[0].mxu0
      %v1888 = vpop.f32.mrb[0].mxu0
      %v1889 = vadd.f32 %v1736, %v1888
      %v1890 = vpop.f32.mrb[0].mxu0
      %1891 = vmatprep.mubr.bf16.mxu0 0
      %1892 = vmatmul.mubr.bf16.gmra.mrb[0].mxu0 %v667
      %v1893 = vpop.f32.mrb[0].mxu0
      %v1894 = vadd.f32 %v1741, %v1893
      %v1895 = vpop.f32.mrb[0].mxu0
      %v1896 = vpop.f32.mrb[0].mxu0
      %v1897 = vadd.f32 %v1744, %v1896
      %v1898 = vpop.f32.mrb[0].mxu0
      %1899 = vmatprep.mubr.bf16.mxu0 0
      %1900 = vmatmul.mubr.bf16.gmra.mrb[0].mxu0 %v669
      %v1901 = vpop.f32.mrb[0].mxu0
      %v1902 = vadd.f32 %v1749, %v1901
      %v1903 = vpop.f32.mrb[0].mxu0
      %v1904 = vpop.f32.mrb[0].mxu0
      %v1905 = vadd.f32 %v1752, %v1904
      %v1906 = vpop.f32.mrb[0].mxu0
      %1907 = vmatprep.mubr.bf16.mxu0 0
      %1908 = vmatmul.mubr.bf16.gmra.mrb[0].mxu0 %v671
      %v1909 = vpop.f32.mrb[0].mxu0
      %v1910 = vadd.f32 %v1757, %v1909
      %v1911 = vpop.f32.mrb[0].mxu0
      %v1912 = vpop.f32.mrb[0].mxu0
      %v1913 = vadd.f32 %v1760, %v1912
      %v1914 = vpop.f32.mrb[0].mxu0
      %1915 = vdwg.mxu0
      %v1916 = vld [vmem:[#allocation2 + $0x18] sm:$0xf]
      %v1917 = vld [vmem:[#allocation2 + $0x1c] sm:$0xf]
      %v1918 = vld [vmem:[#allocation2 + $0x20] sm:$0xf]
      %v1919 = vld [vmem:[#allocation2 + $0x24] sm:$0xf]
      %v1920 = vld [vmem:[#allocation2 + $0x28] sm:$0xf]
      %v1921 = vld [vmem:[#allocation2 + $0x2c] sm:$0xf]
      %v1922 = vld [vmem:[#allocation2 + $0x30] sm:$0xf]
      %v1923 = vld [vmem:[#allocation2 + $0x34] sm:$0xf]
      %v1924 = vld [vmem:[#allocation2 + $0x38] sm:$0xf]
      %v1925 = vld [vmem:[#allocation2 + $0x3c] sm:$0xf]
      %v1926 = vld [vmem:[#allocation2 + $0x40] sm:$0xf]
      %v1927 = vld [vmem:[#allocation2 + $0x44] sm:$0xf]
      %v1928 = vld [vmem:[#allocation2 + $0x48] sm:$0xf]
      %v1929 = vld [vmem:[#allocation2 + $0x4c] sm:$0xf]
      %v1930 = vld [vmem:[#allocation2 + $0x50] sm:$0xf]
      %v1931 = vld [vmem:[#allocation2 + $0x54] sm:$0xf]
      %v1932 = vld [vmem:[#allocation2 + $0x58] sm:$0xf]
      %v1933 = vld [vmem:[#allocation2 + $0x5c] sm:$0xf]
      %v1934 = vld [vmem:[#allocation2 + $0x60] sm:$0xf]
      %v1935 = vld [vmem:[#allocation2 + $0x64] sm:$0xf]
      %v1936 = vld [vmem:[#allocation2 + $0x68] sm:$0xf]
      %v1937 = vld [vmem:[#allocation2 + $0x6c] sm:$0xf]
      %v1938 = vld [vmem:[#allocation2 + $0x70] sm:$0xf]
      %v1939 = vld [vmem:[#allocation2 + $0x74] sm:$0xf]
      %v1940 = vld [vmem:[#allocation2 + $0x78] sm:$0xf]
      %v1941 = vld [vmem:[#allocation2 + $0x7c] sm:$0xf]
      %v1942 = vld [vmem:[#allocation2 + $0x80] sm:$0xf]
      %v1943 = vld [vmem:[#allocation2 + $0x84] sm:$0xf]
      %v1944 = vld [vmem:[#allocation2 + $0x88] sm:$0xf]
      %v1945 = vld [vmem:[#allocation2 + $0x8c] sm:$0xf]
      %v1946 = vld [vmem:[#allocation2 + $0x18] sm:$0xf]
      %v1947 = vld [vmem:[#allocation2 + $0x1c] sm:$0xf]
      %v1948 = vld [vmem:[#allocation2 + $0x20] sm:$0xf]
      %v1949 = vld [vmem:[#allocation2 + $0x24] sm:$0xf]
      %v1950 = vld [vmem:[#allocation2 + $0x28] sm:$0xf]
      %v1951 = vld [vmem:[#allocation2 + $0x2c] sm:$0xf]
      %v1952 = vld [vmem:[#allocation2 + $0x30] sm:$0xf]
      %v1953 = vld [vmem:[#allocation2 + $0x34] sm:$0xf]
      %v1954 = vld [vmem:[#allocation2 + $0x38] sm:$0xf]
      %v1955 = vld [vmem:[#allocation2 + $0x3c] sm:$0xf]
      %v1956 = vld [vmem:[#allocation2 + $0x40] sm:$0xf]
      %v1957 = vld [vmem:[#allocation2 + $0x44] sm:$0xf]
      %v1958 = vld [vmem:[#allocation2 + $0x48] sm:$0xf]
      %v1959 = vld [vmem:[#allocation2 + $0x4c] sm:$0xf]
      %v1960 = vld [vmem:[#allocation2 + $0x50] sm:$0xf]
      %v1961 = vld [vmem:[#allocation2 + $0x54] sm:$0xf]
      %v1962 = vld [vmem:[#allocation2 + $0x58] sm:$0xf]
      %v1963 = vld [vmem:[#allocation2 + $0x5c] sm:$0xf]
      %v1964 = vld [vmem:[#allocation2 + $0x60] sm:$0xf]
      %v1965 = vld [vmem:[#allocation2 + $0x64] sm:$0xf]
      %v1966 = vld [vmem:[#allocation2 + $0x68] sm:$0xf]
      %v1967 = vld [vmem:[#allocation2 + $0x6c] sm:$0xf]
      %v1968 = vld [vmem:[#allocation2 + $0x70] sm:$0xf]
      %v1969 = vld [vmem:[#allocation2 + $0x74] sm:$0xf]
      %v1970 = vld [vmem:[#allocation2 + $0x78] sm:$0xf]
      %v1971 = vld [vmem:[#allocation2 + $0x7c] sm:$0xf]
      %v1972 = vld [vmem:[#allocation2 + $0x80] sm:$0xf]
      %v1973 = vld [vmem:[#allocation2 + $0x84] sm:$0xf]
      %v1974 = vld [vmem:[#allocation2 + $0x88] sm:$0xf]
      %v1975 = vld [vmem:[#allocation2 + $0x8c] sm:$0xf]
      %v1976 = vld [vmem:[#allocation2 + $0x90] sm:$0x1]
      %v1977 = vld [vmem:[#allocation2 + $0x18] sm:$0xe]
      %v2008 = vunpack.c.l.b16 %v1916
      %v2009 = vunpack.c.l.b16 %v1917
      %v2010 = vunpack.c.l.b16 %v1918
      %v2011 = vunpack.c.l.b16 %v1919
      %v2012 = vunpack.c.l.b16 %v1920
      %v2013 = vunpack.c.l.b16 %v1921
      %v2014 = vunpack.c.l.b16 %v1922
      %v2015 = vunpack.c.l.b16 %v1923
      %v2016 = vunpack.c.l.b16 %v1924
      %v2017 = vunpack.c.l.b16 %v1925
      %v2018 = vunpack.c.l.b16 %v1926
      %v2019 = vunpack.c.l.b16 %v1927
      %v2020 = vunpack.c.l.b16 %v1928
      %v2021 = vunpack.c.l.b16 %v1929
      %v2022 = vunpack.c.l.b16 %v1930
      %v2023 = vunpack.c.l.b16 %v1931
      %v2024 = vunpack.c.l.b16 %v1932
      %v2025 = vunpack.c.l.b16 %v1933
      %v2026 = vunpack.c.l.b16 %v1934
      %v2027 = vunpack.c.l.b16 %v1935
      %v2028 = vunpack.c.l.b16 %v1936
      %v2029 = vunpack.c.l.b16 %v1937
      %v2030 = vunpack.c.l.b16 %v1938
      %v2031 = vunpack.c.l.b16 %v1939
      %v2032 = vunpack.c.l.b16 %v1940
      %v2033 = vunpack.c.l.b16 %v1941
      %v2034 = vunpack.c.l.b16 %v1942
      %v2035 = vunpack.c.l.b16 %v1943
      %v2036 = vunpack.c.l.b16 %v1944
      %v2037 = vunpack.c.l.b16 %v1945
      %v2038 = vpack.c.b16 %v2009, %v2008
      %v2039 = vpack.c.b16 %v2011, %v2010
      %v2040 = vpack.c.b16 %v2013, %v2012
      %v2041 = vpack.c.b16 %v2015, %v2014
      %v2042 = vpack.c.b16 %v2017, %v2016
      %v2043 = vpack.c.b16 %v2019, %v2018
      %v2044 = vpack.c.b16 %v2021, %v2020
      %v2045 = vpack.c.b16 %v2023, %v2022
      %v2046 = vpack.c.b16 %v2025, %v2024
      %v2047 = vpack.c.b16 %v2027, %v2026
      %v2048 = vpack.c.b16 %v2029, %v2028
      %v2049 = vpack.c.b16 %v2031, %v2030
      %v2050 = vpack.c.b16 %v2033, %v2032
      %v2051 = vpack.c.b16 %v2035, %v2034
      %v2052 = vpack.c.b16 %v2037, %v2036
      %v2099 = vunpack.c.l.b16 %v1946
      %v2100 = vunpack.c.l.b16 %v1947
      %v2101 = vunpack.c.l.b16 %v1948
      %v2102 = vunpack.c.l.b16 %v1949
      %v2103 = vunpack.c.l.b16 %v1950
      %v2104 = vunpack.c.l.b16 %v1951
      %v2105 = vunpack.c.l.b16 %v1952
      %v2106 = vunpack.c.l.b16 %v1953
      %v2107 = vunpack.c.l.b16 %v1954
      %v2108 = vunpack.c.l.b16 %v1955
      %v2109 = vunpack.c.l.b16 %v1956
      %v2110 = vunpack.c.l.b16 %v1957
      %v2111 = vunpack.c.l.b16 %v1958
      %v2112 = vunpack.c.l.b16 %v1959
      %v2113 = vunpack.c.l.b16 %v1960
      %v2114 = vunpack.c.l.b16 %v1961
      %v2115 = vunpack.c.l.b16 %v1962
      %v2116 = vunpack.c.l.b16 %v1963
      %v2117 = vunpack.c.l.b16 %v1964
      %v2118 = vunpack.c.l.b16 %v1965
      %v2119 = vunpack.c.l.b16 %v1966
      %v2120 = vunpack.c.l.b16 %v1967
      %v2121 = vunpack.c.l.b16 %v1968
      %v2122 = vunpack.c.l.b16 %v1969
      %v2123 = vunpack.c.l.b16 %v1970
      %v2124 = vunpack.c.l.b16 %v1971
      %v2125 = vunpack.c.l.b16 %v1972
      %v2126 = vunpack.c.l.b16 %v1973
      %v2127 = vunpack.c.l.b16 %v1974
      %v2128 = vunpack.c.l.b16 %v1975
      %v2129 = vunpack.c.l.b16 %v1976
      %v2130 = vpack.c.b16 %v2100, %v2099
      %v2131 = vpack.c.b16 %v2102, %v2101
      %v2132 = vpack.c.b16 %v2104, %v2103
      %v2133 = vpack.c.b16 %v2106, %v2105
      %v2134 = vpack.c.b16 %v2108, %v2107
      %v2135 = vpack.c.b16 %v2110, %v2109
      %v2136 = vpack.c.b16 %v2112, %v2111
      %v2137 = vpack.c.b16 %v2114, %v2113
      %v2138 = vpack.c.b16 %v2116, %v2115
      %v2139 = vpack.c.b16 %v2118, %v2117
      %v2140 = vpack.c.b16 %v2120, %v2119
      %v2141 = vpack.c.b16 %v2122, %v2121
      %v2142 = vpack.c.b16 %v2124, %v2123
      %v2143 = vpack.c.b16 %v2126, %v2125
      %v2144 = vpack.c.b16 %v2128, %v2127
      %v2145 = vpack.c.b16 %v2129, %v2129
      %v2147 = vshrl.u32 %v2130, 16
      %v2149 = vshll.u32 %v2130, 16
      %v2151 = vrot.slane %v2149, 1
      %v2152 = vor.u32 %v2147, %v2151
      %v2154 = vshll.u32 %v2131, 16
      %v2156 = vrot.slane %v2154, 1
      %v2157 = vsel %vm497, %v2152, %v2156
      %v2158 = vshrl.u32 %v2131, 16
      %v2160 = vor.u32 %v2158, %v2156
      %v2162 = vshll.u32 %v2132, 16
      %v2164 = vrot.slane %v2162, 1
      %v2165 = vsel %vm497, %v2160, %v2164
      %v2166 = vshrl.u32 %v2132, 16
      %v2168 = vor.u32 %v2166, %v2164
      %v2170 = vshll.u32 %v2133, 16
      %v2172 = vrot.slane %v2170, 1
      %v2173 = vsel %vm497, %v2168, %v2172
      %v2174 = vshrl.u32 %v2133, 16
      %v2176 = vor.u32 %v2174, %v2172
      %v2178 = vshll.u32 %v2134, 16
      %v2180 = vrot.slane %v2178, 1
      %v2181 = vsel %vm497, %v2176, %v2180
      %v2182 = vshrl.u32 %v2134, 16
      %v2184 = vor.u32 %v2182, %v2180
      %v2186 = vshll.u32 %v2135, 16
      %v2188 = vrot.slane %v2186, 1
      %v2189 = vsel %vm497, %v2184, %v2188
      %v2190 = vshrl.u32 %v2135, 16
      %v2192 = vor.u32 %v2190, %v2188
      %v2194 = vshll.u32 %v2136, 16
      %v2196 = vrot.slane %v2194, 1
      %v2197 = vsel %vm497, %v2192, %v2196
      %v2198 = vshrl.u32 %v2136, 16
      %v2200 = vor.u32 %v2198, %v2196
      %v2202 = vshll.u32 %v2137, 16
      %v2204 = vrot.slane %v2202, 1
      %v2205 = vsel %vm497, %v2200, %v2204
      %v2206 = vshrl.u32 %v2137, 16
      %v2208 = vor.u32 %v2206, %v2204
      %v2210 = vshll.u32 %v2138, 16
      %v2212 = vrot.slane %v2210, 1
      %v2213 = vsel %vm497, %v2208, %v2212
      %v2214 = vshrl.u32 %v2138, 16
      %v2216 = vor.u32 %v2214, %v2212
      %v2218 = vshll.u32 %v2139, 16
      %v2220 = vrot.slane %v2218, 1
      %v2221 = vsel %vm497, %v2216, %v2220
      %v2222 = vshrl.u32 %v2139, 16
      %v2224 = vor.u32 %v2222, %v2220
      %v2226 = vshll.u32 %v2140, 16
      %v2228 = vrot.slane %v2226, 1
      %v2229 = vsel %vm497, %v2224, %v2228
      %v2230 = vshrl.u32 %v2140, 16
      %v2232 = vor.u32 %v2230, %v2228
      %v2234 = vshll.u32 %v2141, 16
      %v2236 = vrot.slane %v2234, 1
      %v2237 = vsel %vm497, %v2232, %v2236
      %v2238 = vshrl.u32 %v2141, 16
      %v2240 = vor.u32 %v2238, %v2236
      %v2242 = vshll.u32 %v2142, 16
      %v2244 = vrot.slane %v2242, 1
      %v2245 = vsel %vm497, %v2240, %v2244
      %v2246 = vshrl.u32 %v2142, 16
      %v2248 = vor.u32 %v2246, %v2244
      %v2250 = vshll.u32 %v2143, 16
      %v2252 = vrot.slane %v2250, 1
      %v2253 = vsel %vm497, %v2248, %v2252
      %v2254 = vshrl.u32 %v2143, 16
      %v2256 = vor.u32 %v2254, %v2252
      %v2258 = vshll.u32 %v2144, 16
      %v2260 = vrot.slane %v2258, 1
      %v2261 = vsel %vm497, %v2256, %v2260
      %v2262 = vshrl.u32 %v2144, 16
      %v2264 = vor.u32 %v2262, %v2260
      %v2266 = vshll.u32 %v2145, 16
      %v2268 = vrot.slane %v2266, 1
      %v2269 = vsel %vm497, %v2264, %v2268
      %v2286 = vunpack.c.l.b16 %v1977
      %v2287 = vpack.c.b16 %v2100, %v2286
      %v2288 = vrot.slane %v2287, 1
      %v2289 = vrot.slane %v2131, 1
      %v2290 = vsel %vm640, %v2288, %v2289
      %v2291 = vrot.slane %v2132, 1
      %v2292 = vsel %vm640, %v2289, %v2291
      %v2293 = vrot.slane %v2133, 1
      %v2294 = vsel %vm640, %v2291, %v2293
      %v2295 = vrot.slane %v2134, 1
      %v2296 = vsel %vm640, %v2293, %v2295
      %v2297 = vrot.slane %v2135, 1
      %v2298 = vsel %vm640, %v2295, %v2297
      %v2299 = vrot.slane %v2136, 1
      %v2300 = vsel %vm640, %v2297, %v2299
      %v2301 = vrot.slane %v2137, 1
      %v2302 = vsel %vm640, %v2299, %v2301
      %v2303 = vrot.slane %v2138, 1
      %v2304 = vsel %vm640, %v2301, %v2303
      %v2305 = vrot.slane %v2139, 1
      %v2306 = vsel %vm640, %v2303, %v2305
      %v2307 = vrot.slane %v2140, 1
      %v2308 = vsel %vm640, %v2305, %v2307
      %v2309 = vrot.slane %v2141, 1
      %v2310 = vsel %vm640, %v2307, %v2309
      %v2311 = vrot.slane %v2142, 1
      %v2312 = vsel %vm640, %v2309, %v2311
      %v2313 = vrot.slane %v2143, 1
      %v2314 = vsel %vm640, %v2311, %v2313
      %v2315 = vrot.slane %v2144, 1
      %v2316 = vsel %vm640, %v2313, %v2315
      %v2317 = vrot.slane %v2145, 1
      %v2318 = vsel %vm640, %v2315, %v2317
      %s2334 = scalar_lea.vmem %s1, 384
      %v2335 = vld [vmem:[%s2334] sm:$0xf]
      %v2336 = vld [vmem:[%s2334 + $0x4] sm:$0xf]
      %v2337 = vld [vmem:[%s2334 + $0x8] sm:$0xf]
      %v2338 = vld [vmem:[%s2334 + $0xc] sm:$0xf]
      %v2339 = vld [vmem:[%s2334 + $0x10] sm:$0xf]
      %v2340 = vld [vmem:[%s2334 + $0x14] sm:$0xf]
      %v2341 = vld [vmem:[%s2334 + $0x18] sm:$0xf]
      %v2342 = vld [vmem:[%s2334 + $0x1c] sm:$0xf]
      %v2343 = vld [vmem:[%s2334 + $0x20] sm:$0xf]
      %v2344 = vld [vmem:[%s2334 + $0x24] sm:$0xf]
      %v2345 = vld [vmem:[%s2334 + $0x28] sm:$0xf]
      %v2346 = vld [vmem:[%s2334 + $0x2c] sm:$0xf]
      %v2347 = vld [vmem:[%s2334 + $0x30] sm:$0xf]
      %v2348 = vld [vmem:[%s2334 + $0x34] sm:$0xf]
      %v2349 = vld [vmem:[%s2334 + $0x38] sm:$0xf]
      %v2350 = vld [vmem:[%s2334 + $0x3c] sm:$0xf]
      %v2351 = vld [vmem:[%s2334 + $0x40] sm:$0xf]
      %v2352 = vld [vmem:[%s2334 + $0x44] sm:$0xf]
      %v2353 = vld [vmem:[%s2334 + $0x48] sm:$0xf]
      %v2354 = vld [vmem:[%s2334 + $0x4c] sm:$0xf]
      %v2355 = vld [vmem:[%s2334 + $0x50] sm:$0xf]
      %v2356 = vld [vmem:[%s2334 + $0x54] sm:$0xf]
      %v2357 = vld [vmem:[%s2334 + $0x58] sm:$0xf]
      %v2358 = vld [vmem:[%s2334 + $0x5c] sm:$0xf]
      %v2359 = vld [vmem:[%s2334 + $0x60] sm:$0xf]
      %v2360 = vld [vmem:[%s2334 + $0x64] sm:$0xf]
      %v2361 = vld [vmem:[%s2334 + $0x68] sm:$0xf]
      %v2362 = vld [vmem:[%s2334 + $0x6c] sm:$0xf]
      %v2363 = vld [vmem:[%s2334 + $0x70] sm:$0xf]
      %v2364 = vld [vmem:[%s2334 + $0x74] sm:$0xf]
      %v2365 = vld [vmem:[%s2334 + $0x78] sm:$0xf]
      %v2366 = vld [vmem:[%s2334 + $0x7c] sm:$0xf]
      %v2367 = vld [vmem:[%s2334 + $0x80] sm:$0xf]
      %v2368 = vld [vmem:[%s2334 + $0x84] sm:$0xf]
      %v2369 = vld [vmem:[%s2334 + $0x88] sm:$0xf]
      %v2370 = vld [vmem:[%s2334 + $0x8c] sm:$0xf]
      %v2371 = vld [vmem:[%s2334 + $0x90] sm:$0xf]
      %v2372 = vld [vmem:[%s2334 + $0x94] sm:$0xf]
      %v2373 = vld [vmem:[%s2334 + $0x98] sm:$0xf]
      %v2374 = vld [vmem:[%s2334 + $0x9c] sm:$0xf]
      %v2375 = vld [vmem:[%s2334 + $0xa0] sm:$0xf]
      %v2376 = vld [vmem:[%s2334 + $0xa4] sm:$0xf]
      %v2377 = vld [vmem:[%s2334 + $0xa8] sm:$0xf]
      %v2378 = vld [vmem:[%s2334 + $0xac] sm:$0xf]
      %v2379 = vld [vmem:[%s2334 + $0xb0] sm:$0xf]
      %v2380 = vld [vmem:[%s2334 + $0xb4] sm:$0xf]
      %v2381 = vld [vmem:[%s2334 + $0xb8] sm:$0xf]
      %v2382 = vld [vmem:[%s2334 + $0xbc] sm:$0xf]
      %v2431 = vunpack.c.l.b16 %v2335
      %v2432 = vunpack.c.l.b16 %v2336
      %v2433 = vunpack.c.l.b16 %v2337
      %v2434 = vunpack.c.l.b16 %v2338
      %v2435 = vunpack.c.l.b16 %v2339
      %v2436 = vunpack.c.l.b16 %v2340
      %v2437 = vunpack.c.l.b16 %v2341
      %v2438 = vunpack.c.l.b16 %v2342
      %v2439 = vunpack.c.l.b16 %v2343
      %v2440 = vunpack.c.l.b16 %v2344
      %v2441 = vunpack.c.l.b16 %v2345
      %v2442 = vunpack.c.l.b16 %v2346
      %v2443 = vunpack.c.l.b16 %v2347
      %v2444 = vunpack.c.l.b16 %v2348
      %v2445 = vunpack.c.l.b16 %v2349
      %v2446 = vunpack.c.l.b16 %v2350
      %v2447 = vunpack.c.l.b16 %v2351
      %v2448 = vunpack.c.l.b16 %v2352
      %v2449 = vunpack.c.l.b16 %v2353
      %v2450 = vunpack.c.l.b16 %v2354
      %v2451 = vunpack.c.l.b16 %v2355
      %v2452 = vunpack.c.l.b16 %v2356
      %v2453 = vunpack.c.l.b16 %v2357
      %v2454 = vunpack.c.l.b16 %v2358
      %v2455 = vunpack.c.l.b16 %v2359
      %v2456 = vunpack.c.l.b16 %v2360
      %v2457 = vunpack.c.l.b16 %v2361
      %v2458 = vunpack.c.l.b16 %v2362
      %v2459 = vunpack.c.l.b16 %v2363
      %v2460 = vunpack.c.l.b16 %v2364
      %v2461 = vunpack.c.l.b16 %v2365
      %v2462 = vunpack.c.l.b16 %v2366
      %v2463 = vunpack.c.l.b16 %v2367
      %v2464 = vunpack.c.l.b16 %v2368
      %v2465 = vunpack.c.l.b16 %v2369
      %v2466 = vunpack.c.l.b16 %v2370
      %v2467 = vunpack.c.l.b16 %v2371
      %v2468 = vunpack.c.l.b16 %v2372
      %v2469 = vunpack.c.l.b16 %v2373
      %v2470 = vunpack.c.l.b16 %v2374
      %v2471 = vunpack.c.l.b16 %v2375
      %v2472 = vunpack.c.l.b16 %v2376
      %v2473 = vunpack.c.l.b16 %v2377
      %v2474 = vunpack.c.l.b16 %v2378
      %v2475 = vunpack.c.l.b16 %v2379
      %v2476 = vunpack.c.l.b16 %v2380
      %v2477 = vunpack.c.l.b16 %v2381
      %v2478 = vunpack.c.l.b16 %v2382
      %v2479 = vpack.c.b16 %v2432, %v2431
      %v2480 = vpack.c.b16 %v2434, %v2433
      %v2481 = vpack.c.b16 %v2436, %v2435
      %v2482 = vpack.c.b16 %v2438, %v2437
      %v2483 = vpack.c.b16 %v2440, %v2439
      %v2484 = vpack.c.b16 %v2442, %v2441
      %v2485 = vpack.c.b16 %v2444, %v2443
      %v2486 = vpack.c.b16 %v2446, %v2445
      %v2487 = vpack.c.b16 %v2448, %v2447
      %v2488 = vpack.c.b16 %v2450, %v2449
      %v2489 = vpack.c.b16 %v2452, %v2451
      %v2490 = vpack.c.b16 %v2454, %v2453
      %v2491 = vpack.c.b16 %v2456, %v2455
      %v2492 = vpack.c.b16 %v2458, %v2457
      %v2493 = vpack.c.b16 %v2460, %v2459
      %v2494 = vpack.c.b16 %v2462, %v2461
      %v2495 = vpack.c.b16 %v2464, %v2463
      %v2496 = vpack.c.b16 %v2466, %v2465
      %v2497 = vpack.c.b16 %v2468, %v2467
      %v2498 = vpack.c.b16 %v2470, %v2469
      %v2499 = vpack.c.b16 %v2472, %v2471
      %v2500 = vpack.c.b16 %v2474, %v2473
      %v2501 = vpack.c.b16 %v2476, %v2475
      %v2502 = vpack.c.b16 %v2478, %v2477
      %2527 = vmatprep.subr.bf16.mxu0 0
      %2528 = vmatpush1.bf16.msra.mxu0 %v2479
      %2529 = vmatprep.subr.bf16.mxu0 0
      %2530 = vmatpush1.bf16.msra.mxu0 %v2480
      %2531 = vmatprep.subr.bf16.mxu0 0
      %2532 = vmatpush1.bf16.msra.mxu0 %v2481
      %2533 = vmatprep.subr.bf16.mxu0 0
      %2534 = vmatpush1.bf16.msra.mxu0 %v2482
      %2535 = vmatprep.subr.bf16.mxu0 0
      %2536 = vmatpush1.bf16.msra.mxu0 %v2483
      %2537 = vmatprep.subr.bf16.mxu0 0
      %2538 = vmatpush1.bf16.msra.mxu0 %v2484
      %2539 = vmatprep.subr.bf16.mxu0 0
      %2540 = vmatpush1.bf16.msra.mxu0 %v2485
      %2541 = vmatprep.subr.bf16.mxu0 0
      %2542 = vmatpush1.bf16.msra.mxu0 %v2486
      %2543 = vmatprep.subr.bf16.mxu0 0
      %2544 = vmatpush1.bf16.msra.mxu0 %v2487
      %2545 = vmatprep.subr.bf16.mxu0 0
      %2546 = vmatpush1.bf16.msra.mxu0 %v2488
      %2547 = vmatprep.subr.bf16.mxu0 0
      %2548 = vmatpush1.bf16.msra.mxu0 %v2489
      %2549 = vmatprep.subr.bf16.mxu0 0
      %2550 = vmatpush1.bf16.msra.mxu0 %v2490
      %2551 = vmatprep.subr.bf16.mxu0 0
      %2552 = vmatpush1.bf16.msra.mxu0 %v2491
      %2553 = vmatprep.subr.bf16.mxu0 0
      %2554 = vmatpush1.bf16.msra.mxu0 %v2492
      %2555 = vmatprep.subr.bf16.mxu0 0
      %2556 = vmatpush1.bf16.msra.mxu0 %v2493
      %2557 = vmatprep.subr.bf16.mxu0 0
      %2558 = vmatpush1.bf16.msra.mxu0 %v2494
      %2559 = vmatprep.mubr.bf16.mxu0 %v2157
      %2560 = vmatmul.mubr.bf16.gmra.mrb[0].mxu0 %v2038
      %v2561 = vpop.f32.mrb[0].mxu0
      %v2562 = vadd.f32 0.0, %v2561
      %v2563 = vpop.f32.mrb[0].mxu0
      %v2564 = vpop.f32.mrb[0].mxu0
      %v2565 = vadd.f32 0.0, %v2564
      %v2566 = vpop.f32.mrb[0].mxu0
      %2567 = vmatprep.mubr.bf16.mxu0 %v2165
      %2568 = vmatmul.mubr.bf16.gmra.mrb[0].mxu0 %v2039
      %v2569 = vpop.f32.mrb[0].mxu0
      %v2570 = vadd.f32 0.0, %v2569
      %v2571 = vpop.f32.mrb[0].mxu0
      %v2572 = vpop.f32.mrb[0].mxu0
      %v2573 = vadd.f32 0.0, %v2572
      %v2574 = vpop.f32.mrb[0].mxu0
      %2575 = vmatprep.mubr.bf16.mxu0 %v2173
      %2576 = vmatmul.mubr.bf16.gmra.mrb[0].mxu0 %v2040
      %v2577 = vpop.f32.mrb[0].mxu0
      %v2578 = vadd.f32 0.0, %v2577
      %v2579 = vpop.f32.mrb[0].mxu0
      %v2580 = vpop.f32.mrb[0].mxu0
      %v2581 = vadd.f32 0.0, %v2580
      %v2582 = vpop.f32.mrb[0].mxu0
      %2583 = vmatprep.mubr.bf16.mxu0 %v2181
      %2584 = vmatmul.mubr.bf16.gmra.mrb[0].mxu0 %v2041
      %v2585 = vpop.f32.mrb[0].mxu0
      %v2586 = vadd.f32 0.0, %v2585
      %v2587 = vpop.f32.mrb[0].mxu0
      %v2588 = vpop.f32.mrb[0].mxu0
      %v2589 = vadd.f32 0.0, %v2588
      %v2590 = vpop.f32.mrb[0].mxu0
      %2591 = vmatprep.mubr.bf16.mxu0 %v2189
      %2592 = vmatmul.mubr.bf16.gmra.mrb[0].mxu0 %v2042
      %v2593 = vpop.f32.mrb[0].mxu0
      %v2594 = vadd.f32 0.0, %v2593
      %v2595 = vpop.f32.mrb[0].mxu0
      %v2596 = vpop.f32.mrb[0].mxu0
      %v2597 = vadd.f32 0.0, %v2596
      %v2598 = vpop.f32.mrb[0].mxu0
      %2599 = vmatprep.mubr.bf16.mxu0 %v2197
      %2600 = vmatmul.mubr.bf16.gmra.mrb[0].mxu0 %v2043
      %v2601 = vpop.f32.mrb[0].mxu0
      %v2602 = vadd.f32 0.0, %v2601
      %v2603 = vpop.f32.mrb[0].mxu0
      %v2604 = vpop.f32.mrb[0].mxu0
      %v2605 = vadd.f32 0.0, %v2604
      %v2606 = vpop.f32.mrb[0].mxu0
      %2607 = vmatprep.mubr.bf16.mxu0 %v2205
      %2608 = vmatmul.mubr.bf16.gmra.mrb[0].mxu0 %v2044
      %v2609 = vpop.f32.mrb[0].mxu0
      %v2610 = vadd.f32 0.0, %v2609
      %v2611 = vpop.f32.mrb[0].mxu0
      %v2612 = vpop.f32.mrb[0].mxu0
      %v2613 = vadd.f32 0.0, %v2612
      %v2614 = vpop.f32.mrb[0].mxu0
      %2615 = vmatprep.mubr.bf16.mxu0 %v2213
      %2616 = vmatmul.mubr.bf16.gmra.mrb[0].mxu0 %v2045
      %v2617 = vpop.f32.mrb[0].mxu0
      %v2618 = vadd.f32 0.0, %v2617
      %v2619 = vpop.f32.mrb[0].mxu0
      %v2620 = vpop.f32.mrb[0].mxu0
      %v2621 = vadd.f32 0.0, %v2620
      %v2622 = vpop.f32.mrb[0].mxu0
      %2623 = vmatprep.mubr.bf16.mxu0 %v2221
      %2624 = vmatmul.mubr.bf16.gmra.mrb[0].mxu0 %v2046
      %v2625 = vpop.f32.mrb[0].mxu0
      %v2626 = vadd.f32 0.0, %v2625
      %v2627 = vpop.f32.mrb[0].mxu0
      %v2628 = vpop.f32.mrb[0].mxu0
      %v2629 = vadd.f32 0.0, %v2628
      %v2630 = vpop.f32.mrb[0].mxu0
      %2631 = vmatprep.mubr.bf16.mxu0 %v2229
      %2632 = vmatmul.mubr.bf16.gmra.mrb[0].mxu0 %v2047
      %v2633 = vpop.f32.mrb[0].mxu0
      %v2634 = vadd.f32 0.0, %v2633
      %v2635 = vpop.f32.mrb[0].mxu0
      %v2636 = vpop.f32.mrb[0].mxu0
      %v2637 = vadd.f32 0.0, %v2636
      %v2638 = vpop.f32.mrb[0].mxu0
      %2639 = vmatprep.mubr.bf16.mxu0 %v2237
      %2640 = vmatmul.mubr.bf16.gmra.mrb[0].mxu0 %v2048
      %v2641 = vpop.f32.mrb[0].mxu0
      %v2642 = vadd.f32 0.0, %v2641
      %v2643 = vpop.f32.mrb[0].mxu0
      %v2644 = vpop.f32.mrb[0].mxu0
      %v2645 = vadd.f32 0.0, %v2644
      %v2646 = vpop.f32.mrb[0].mxu0
      %2647 = vmatprep.mubr.bf16.mxu0 %v2245
      %2648 = vmatmul.mubr.bf16.gmra.mrb[0].mxu0 %v2049
      %v2649 = vpop.f32.mrb[0].mxu0
      %v2650 = vadd.f32 0.0, %v2649
      %v2651 = vpop.f32.mrb[0].mxu0
      %v2652 = vpop.f32.mrb[0].mxu0
      %v2653 = vadd.f32 0.0, %v2652
      %v2654 = vpop.f32.mrb[0].mxu0
      %2655 = vmatprep.mubr.bf16.mxu0 %v2253
      %2656 = vmatmul.mubr.bf16.gmra.mrb[0].mxu0 %v2050
      %v2657 = vpop.f32.mrb[0].mxu0
      %v2658 = vadd.f32 0.0, %v2657
      %v2659 = vpop.f32.mrb[0].mxu0
      %v2660 = vpop.f32.mrb[0].mxu0
      %v2661 = vadd.f32 0.0, %v2660
      %v2662 = vpop.f32.mrb[0].mxu0
      %2663 = vmatprep.mubr.bf16.mxu0 %v2261
      %2664 = vmatmul.mubr.bf16.gmra.mrb[0].mxu0 %v2051
      %v2665 = vpop.f32.mrb[0].mxu0
      %v2666 = vadd.f32 0.0, %v2665
      %v2667 = vpop.f32.mrb[0].mxu0
      %v2668 = vpop.f32.mrb[0].mxu0
      %v2669 = vadd.f32 0.0, %v2668
      %v2670 = vpop.f32.mrb[0].mxu0
      %2671 = vmatprep.mubr.bf16.mxu0 %v2269
      %2672 = vmatmul.mubr.bf16.gmra.mrb[0].mxu0 %v2052
      %v2673 = vpop.f32.mrb[0].mxu0
      %v2674 = vadd.f32 0.0, %v2673
      %v2675 = vpop.f32.mrb[0].mxu0
      %v2676 = vpop.f32.mrb[0].mxu0
      %v2677 = vadd.f32 0.0, %v2676
      %v2678 = vpop.f32.mrb[0].mxu0
      %2679 = vdwg.mxu0
      %2680 = vmatprep.subr.bf16.mxu0 0
      %2681 = vmatpush1.bf16.msra.mxu0 %v2495
      %2682 = vmatprep.subr.bf16.mxu0 0
      %2683 = vmatpush1.bf16.msra.mxu0 %v2496
      %2684 = vmatprep.subr.bf16.mxu0 0
      %2685 = vmatpush1.bf16.msra.mxu0 %v2497
      %2686 = vmatprep.subr.bf16.mxu0 0
      %2687 = vmatpush1.bf16.msra.mxu0 %v2498
      %2688 = vmatprep.subr.bf16.mxu0 0
      %2689 = vmatpush1.bf16.msra.mxu0 %v2499
      %2690 = vmatprep.subr.bf16.mxu0 0
      %2691 = vmatpush1.bf16.msra.mxu0 %v2500
      %2692 = vmatprep.subr.bf16.mxu0 0
      %2693 = vmatpush1.bf16.msra.mxu0 %v2501
      %2694 = vmatprep.subr.bf16.mxu0 0
      %2695 = vmatpush1.bf16.msra.mxu0 %v2502
      %2696 = vmatprep.subr.bf16.mxu0 0
      %2697 = vmatpush1.bf16.msra.mxu0 0
      %2698 = vmatprep.subr.bf16.mxu0 0
      %2699 = vmatpush1.bf16.msra.mxu0 0
      %2700 = vmatprep.subr.bf16.mxu0 0
      %2701 = vmatpush1.bf16.msra.mxu0 0
      %2702 = vmatprep.subr.bf16.mxu0 0
      %2703 = vmatpush1.bf16.msra.mxu0 0
      %2704 = vmatprep.subr.bf16.mxu0 0
      %2705 = vmatpush1.bf16.msra.mxu0 0
      %2706 = vmatprep.subr.bf16.mxu0 0
      %2707 = vmatpush1.bf16.msra.mxu0 0
      %2708 = vmatprep.subr.bf16.mxu0 0
      %2709 = vmatpush1.bf16.msra.mxu0 0
      %2710 = vmatprep.subr.bf16.mxu0 0
      %2711 = vmatpush1.bf16.msra.mxu0 0
      %2712 = vmatprep.mubr.bf16.mxu0 0
      %2713 = vmatmul.mubr.bf16.gmra.mrb[0].mxu0 %v2290
      %v2714 = vpop.f32.mrb[0].mxu0
      %v2715 = vadd.f32 %v2562, %v2714
      %v2716 = vpop.f32.mrb[0].mxu0
      %v2717 = vpop.f32.mrb[0].mxu0
      %v2718 = vadd.f32 %v2565, %v2717
      %v2719 = vpop.f32.mrb[0].mxu0
      %2720 = vmatprep.mubr.bf16.mxu0 0
      %2721 = vmatmul.mubr.bf16.gmra.mrb[0].mxu0 %v2292
      %v2722 = vpop.f32.mrb[0].mxu0
      %v2723 = vadd.f32 %v2570, %v2722
      %v2724 = vpop.f32.mrb[0].mxu0
      %v2725 = vpop.f32.mrb[0].mxu0
      %v2726 = vadd.f32 %v2573, %v2725
      %v2727 = vpop.f32.mrb[0].mxu0
      %2728 = vmatprep.mubr.bf16.mxu0 0
      %2729 = vmatmul.mubr.bf16.gmra.mrb[0].mxu0 %v2294
      %v2730 = vpop.f32.mrb[0].mxu0
      %v2731 = vadd.f32 %v2578, %v2730
      %v2732 = vpop.f32.mrb[0].mxu0
      %v2733 = vpop.f32.mrb[0].mxu0
      %v2734 = vadd.f32 %v2581, %v2733
      %v2735 = vpop.f32.mrb[0].mxu0
      %2736 = vmatprep.mubr.bf16.mxu0 0
      %2737 = vmatmul.mubr.bf16.gmra.mrb[0].mxu0 %v2296
      %v2738 = vpop.f32.mrb[0].mxu0
      %v2739 = vadd.f32 %v2586, %v2738
      %v2740 = vpop.f32.mrb[0].mxu0
      %v2741 = vpop.f32.mrb[0].mxu0
      %v2742 = vadd.f32 %v2589, %v2741
      %v2743 = vpop.f32.mrb[0].mxu0
      %2744 = vmatprep.mubr.bf16.mxu0 0
      %2745 = vmatmul.mubr.bf16.gmra.mrb[0].mxu0 %v2298
      %v2746 = vpop.f32.mrb[0].mxu0
      %v2747 = vadd.f32 %v2594, %v2746
      %v2748 = vpop.f32.mrb[0].mxu0
      %v2749 = vpop.f32.mrb[0].mxu0
      %v2750 = vadd.f32 %v2597, %v2749
      %v2751 = vpop.f32.mrb[0].mxu0
      %2752 = vmatprep.mubr.bf16.mxu0 0
      %2753 = vmatmul.mubr.bf16.gmra.mrb[0].mxu0 %v2300
      %v2754 = vpop.f32.mrb[0].mxu0
      %v2755 = vadd.f32 %v2602, %v2754
      %v2756 = vpop.f32.mrb[0].mxu0
      %v2757 = vpop.f32.mrb[0].mxu0
      %v2758 = vadd.f32 %v2605, %v2757
      %v2759 = vpop.f32.mrb[0].mxu0
      %2760 = vmatprep.mubr.bf16.mxu0 0
      %2761 = vmatmul.mubr.bf16.gmra.mrb[0].mxu0 %v2302
      %v2762 = vpop.f32.mrb[0].mxu0
      %v2763 = vadd.f32 %v2610, %v2762
      %v2764 = vpop.f32.mrb[0].mxu0
      %v2765 = vpop.f32.mrb[0].mxu0
      %v2766 = vadd.f32 %v2613, %v2765
      %v2767 = vpop.f32.mrb[0].mxu0
      %2768 = vmatprep.mubr.bf16.mxu0 0
      %2769 = vmatmul.mubr.bf16.gmra.mrb[0].mxu0 %v2304
      %v2770 = vpop.f32.mrb[0].mxu0
      %v2771 = vadd.f32 %v2618, %v2770
      %v2772 = vpop.f32.mrb[0].mxu0
      %v2773 = vpop.f32.mrb[0].mxu0
      %v2774 = vadd.f32 %v2621, %v2773
      %v2775 = vpop.f32.mrb[0].mxu0
      %2776 = vmatprep.mubr.bf16.mxu0 0
      %2777 = vmatmul.mubr.bf16.gmra.mrb[0].mxu0 %v2306
      %v2778 = vpop.f32.mrb[0].mxu0
      %v2779 = vadd.f32 %v2626, %v2778
      %v2780 = vpop.f32.mrb[0].mxu0
      %v2781 = vpop.f32.mrb[0].mxu0
      %v2782 = vadd.f32 %v2629, %v2781
      %v2783 = vpop.f32.mrb[0].mxu0
      %2784 = vmatprep.mubr.bf16.mxu0 0
      %2785 = vmatmul.mubr.bf16.gmra.mrb[0].mxu0 %v2308
      %v2786 = vpop.f32.mrb[0].mxu0
      %v2787 = vadd.f32 %v2634, %v2786
      %v2788 = vpop.f32.mrb[0].mxu0
      %v2789 = vpop.f32.mrb[0].mxu0
      %v2790 = vadd.f32 %v2637, %v2789
      %v2791 = vpop.f32.mrb[0].mxu0
      %2792 = vmatprep.mubr.bf16.mxu0 0
      %2793 = vmatmul.mubr.bf16.gmra.mrb[0].mxu0 %v2310
      %v2794 = vpop.f32.mrb[0].mxu0
      %v2795 = vadd.f32 %v2642, %v2794
      %v2796 = vpop.f32.mrb[0].mxu0
      %v2797 = vpop.f32.mrb[0].mxu0
      %v2798 = vadd.f32 %v2645, %v2797
      %v2799 = vpop.f32.mrb[0].mxu0
      %2800 = vmatprep.mubr.bf16.mxu0 0
      %2801 = vmatmul.mubr.bf16.gmra.mrb[0].mxu0 %v2312
      %v2802 = vpop.f32.mrb[0].mxu0
      %v2803 = vadd.f32 %v2650, %v2802
      %v2804 = vpop.f32.mrb[0].mxu0
      %v2805 = vpop.f32.mrb[0].mxu0
      %v2806 = vadd.f32 %v2653, %v2805
      %v2807 = vpop.f32.mrb[0].mxu0
      %2808 = vmatprep.mubr.bf16.mxu0 0
      %2809 = vmatmul.mubr.bf16.gmra.mrb[0].mxu0 %v2314
      %v2810 = vpop.f32.mrb[0].mxu0
      %v2811 = vadd.f32 %v2658, %v2810
      %v2812 = vpop.f32.mrb[0].mxu0
      %v2813 = vpop.f32.mrb[0].mxu0
      %v2814 = vadd.f32 %v2661, %v2813
      %v2815 = vpop.f32.mrb[0].mxu0
      %2816 = vmatprep.mubr.bf16.mxu0 0
      %2817 = vmatmul.mubr.bf16.gmra.mrb[0].mxu0 %v2316
      %v2818 = vpop.f32.mrb[0].mxu0
      %v2819 = vadd.f32 %v2666, %v2818
      %v2820 = vpop.f32.mrb[0].mxu0
      %v2821 = vpop.f32.mrb[0].mxu0
      %v2822 = vadd.f32 %v2669, %v2821
      %v2823 = vpop.f32.mrb[0].mxu0
      %2824 = vmatprep.mubr.bf16.mxu0 0
      %2825 = vmatmul.mubr.bf16.gmra.mrb[0].mxu0 %v2318
      %v2826 = vpop.f32.mrb[0].mxu0
      %v2827 = vadd.f32 %v2674, %v2826
      %v2828 = vpop.f32.mrb[0].mxu0
      %v2829 = vpop.f32.mrb[0].mxu0
      %v2830 = vadd.f32 %v2677, %v2829
      %v2831 = vpop.f32.mrb[0].mxu0
      %2832 = vdwg.mxu0
      %v2833 = vadd.f32 %v1798, %v2715
      %v2834 = vadd.f32 %v1801, %v2718
      %v2835 = vadd.f32 %v1806, %v2723
      %v2836 = vadd.f32 %v1809, %v2726
      %v2837 = vadd.f32 %v1814, %v2731
      %v2838 = vadd.f32 %v1817, %v2734
      %v2839 = vadd.f32 %v1822, %v2739
      %v2840 = vadd.f32 %v1825, %v2742
      %v2841 = vadd.f32 %v1830, %v2747
      %v2842 = vadd.f32 %v1833, %v2750
      %v2843 = vadd.f32 %v1838, %v2755
      %v2844 = vadd.f32 %v1841, %v2758
      %v2845 = vadd.f32 %v1846, %v2763
      %v2846 = vadd.f32 %v1849, %v2766
      %v2847 = vadd.f32 %v1854, %v2771
      %v2848 = vadd.f32 %v1857, %v2774
      %v2849 = vadd.f32 %v1862, %v2779
      %v2850 = vadd.f32 %v1865, %v2782
      %v2851 = vadd.f32 %v1870, %v2787
      %v2852 = vadd.f32 %v1873, %v2790
      %v2853 = vadd.f32 %v1878, %v2795
      %v2854 = vadd.f32 %v1881, %v2798
      %v2855 = vadd.f32 %v1886, %v2803
      %v2856 = vadd.f32 %v1889, %v2806
      %v2857 = vadd.f32 %v1894, %v2811
      %v2858 = vadd.f32 %v1897, %v2814
      %v2859 = vadd.f32 %v1902, %v2819
      %v2860 = vadd.f32 %v1905, %v2822
      %v2861 = vadd.f32 %v1910, %v2827
      %v2862 = vadd.f32 %v1913, %v2830
      %v2863 = vld [vmem:[%s2] sm:$0x1]
      %v2865 = vlaneseq
      %v2866 = vshrl.u32 %v2865, 7
      %v2867 = vsub.s32 0, %v2866
      %v2868 = vrot.slane %v2863, %v2867
      %v2870 = vadd.f32 %v2833, %v2868
      %v2871 = vadd.f32 %v2834, %v2868
      %v2872 = vadd.f32 %v2835, %v2868
      %v2873 = vadd.f32 %v2836, %v2868
      %v2874 = vadd.f32 %v2837, %v2868
      %v2875 = vadd.f32 %v2838, %v2868
      %v2876 = vadd.f32 %v2839, %v2868
      %v2877 = vadd.f32 %v2840, %v2868
      %v2878 = vadd.f32 %v2841, %v2868
      %v2879 = vadd.f32 %v2842, %v2868
      %v2880 = vadd.f32 %v2843, %v2868
      %v2881 = vadd.f32 %v2844, %v2868
      %v2882 = vadd.f32 %v2845, %v2868
      %v2883 = vadd.f32 %v2846, %v2868
      %v2884 = vadd.f32 %v2847, %v2868
      %v2885 = vadd.f32 %v2848, %v2868
      %v2886 = vadd.f32 %v2849, %v2868
      %v2887 = vadd.f32 %v2850, %v2868
      %v2888 = vadd.f32 %v2851, %v2868
      %v2889 = vadd.f32 %v2852, %v2868
      %v2890 = vadd.f32 %v2853, %v2868
      %v2891 = vadd.f32 %v2854, %v2868
      %v2892 = vadd.f32 %v2855, %v2868
      %v2893 = vadd.f32 %v2856, %v2868
      %v2894 = vadd.f32 %v2857, %v2868
      %v2895 = vadd.f32 %v2858, %v2868
      %v2896 = vadd.f32 %v2859, %v2868
      %v2897 = vadd.f32 %v2860, %v2868
      %v2898 = vadd.f32 %v2861, %v2868
      %v2899 = vadd.f32 %v2862, %v2868
      %v2900 = vmax.f32 %v2870, 0.0
      %v2901 = vmax.f32 %v2871, 0.0
      %v2902 = vmax.f32 %v2872, 0.0
      %v2903 = vmax.f32 %v2873, 0.0
      %v2904 = vmax.f32 %v2874, 0.0
      %v2905 = vmax.f32 %v2875, 0.0
      %v2906 = vmax.f32 %v2876, 0.0
      %v2907 = vmax.f32 %v2877, 0.0
      %v2908 = vmax.f32 %v2878, 0.0
      %v2909 = vmax.f32 %v2879, 0.0
      %v2910 = vmax.f32 %v2880, 0.0
      %v2911 = vmax.f32 %v2881, 0.0
      %v2912 = vmax.f32 %v2882, 0.0
      %v2913 = vmax.f32 %v2883, 0.0
      %v2914 = vmax.f32 %v2884, 0.0
      %v2915 = vmax.f32 %v2885, 0.0
      %v2916 = vmax.f32 %v2886, 0.0
      %v2917 = vmax.f32 %v2887, 0.0
      %v2918 = vmax.f32 %v2888, 0.0
      %v2919 = vmax.f32 %v2889, 0.0
      %v2920 = vmax.f32 %v2890, 0.0
      %v2921 = vmax.f32 %v2891, 0.0
      %v2922 = vmax.f32 %v2892, 0.0
      %v2923 = vmax.f32 %v2893, 0.0
      %v2924 = vmax.f32 %v2894, 0.0
      %v2925 = vmax.f32 %v2895, 0.0
      %v2926 = vmax.f32 %v2896, 0.0
      %v2927 = vmax.f32 %v2897, 0.0
      %v2928 = vmax.f32 %v2898, 0.0
      %v2929 = vmax.f32 %v2899, 0.0
      %v2930 = vld [vmem:[%s5] sm:$0xff]
      %v2931 = vld [vmem:[%s5 + $0x8] sm:$0xff]
      %v2932 = vld [vmem:[%s5 + $0x10] sm:$0xff]
      %v2933 = vld [vmem:[%s5 + $0x18] sm:$0xff]
      %v2934 = vld [vmem:[%s5 + $0x20] sm:$0xff]
      %v2935 = vld [vmem:[%s5 + $0x28] sm:$0xff]
      %v2936 = vld [vmem:[%s5 + $0x30] sm:$0xff]
      %v2937 = vld [vmem:[%s5 + $0x38] sm:$0xff]
      %v2938 = vld [vmem:[%s5 + $0x40] sm:$0xff]
      %v2939 = vld [vmem:[%s5 + $0x48] sm:$0xff]
      %v2940 = vld [vmem:[%s5 + $0x50] sm:$0xff]
      %v2941 = vld [vmem:[%s5 + $0x58] sm:$0xff]
      %v2942 = vld [vmem:[%s5 + $0x60] sm:$0xff]
      %v2943 = vld [vmem:[%s5 + $0x68] sm:$0xff]
      %v2944 = vld [vmem:[%s5 + $0x70] sm:$0xff]
      %v2945 = vld [vmem:[%s5 + $0x78] sm:$0xff]
      %v2946 = vld [vmem:[%s5 + $0x80] sm:$0xff]
      %v2947 = vld [vmem:[%s5 + $0x88] sm:$0xff]
      %v2948 = vld [vmem:[%s5 + $0x90] sm:$0xff]
      %v2949 = vld [vmem:[%s5 + $0x98] sm:$0xff]
      %v2950 = vld [vmem:[%s5 + $0xa0] sm:$0xff]
      %v2951 = vld [vmem:[%s5 + $0xa8] sm:$0xff]
      %v2952 = vld [vmem:[%s5 + $0xb0] sm:$0xff]
      %v2953 = vld [vmem:[%s5 + $0xb8] sm:$0xff]
      %v2954 = vld [vmem:[%s5 + $0xc0] sm:$0xff]
      %v2955 = vld [vmem:[%s5 + $0xc8] sm:$0xff]
      %v2956 = vld [vmem:[%s5 + $0xd0] sm:$0xff]
      %v2957 = vld [vmem:[%s5 + $0xd8] sm:$0xff]
      %v2958 = vld [vmem:[%s5 + $0xe0] sm:$0xff]
      %v2959 = vld [vmem:[%s5 + $0xe8] sm:$0xff]
      %vm2960 = vcmp.gt.f32.partialorder %v2930, 0.5
      %vm2961 = vcmp.gt.f32.partialorder %v2931, 0.5
      %vm2962 = vcmp.gt.f32.partialorder %v2932, 0.5
      %vm2963 = vcmp.gt.f32.partialorder %v2933, 0.5
      %vm2964 = vcmp.gt.f32.partialorder %v2934, 0.5
      %vm2965 = vcmp.gt.f32.partialorder %v2935, 0.5
      %vm2966 = vcmp.gt.f32.partialorder %v2936, 0.5
      %vm2967 = vcmp.gt.f32.partialorder %v2937, 0.5
      %vm2968 = vcmp.gt.f32.partialorder %v2938, 0.5
      %vm2969 = vcmp.gt.f32.partialorder %v2939, 0.5
      %vm2970 = vcmp.gt.f32.partialorder %v2940, 0.5
      %vm2971 = vcmp.gt.f32.partialorder %v2941, 0.5
      %vm2972 = vcmp.gt.f32.partialorder %v2942, 0.5
      %vm2973 = vcmp.gt.f32.partialorder %v2943, 0.5
      %vm2974 = vcmp.gt.f32.partialorder %v2944, 0.5
      %vm2975 = vcmp.gt.f32.partialorder %v2945, 0.5
      %vm2976 = vcmp.gt.f32.partialorder %v2946, 0.5
      %vm2977 = vcmp.gt.f32.partialorder %v2947, 0.5
      %vm2978 = vcmp.gt.f32.partialorder %v2948, 0.5
      %vm2979 = vcmp.gt.f32.partialorder %v2949, 0.5
      %vm2980 = vcmp.gt.f32.partialorder %v2950, 0.5
      %vm2981 = vcmp.gt.f32.partialorder %v2951, 0.5
      %vm2982 = vcmp.gt.f32.partialorder %v2952, 0.5
      %vm2983 = vcmp.gt.f32.partialorder %v2953, 0.5
      %vm2984 = vcmp.gt.f32.partialorder %v2954, 0.5
      %vm2985 = vcmp.gt.f32.partialorder %v2955, 0.5
      %vm2986 = vcmp.gt.f32.partialorder %v2956, 0.5
      %vm2987 = vcmp.gt.f32.partialorder %v2957, 0.5
      %vm2988 = vcmp.gt.f32.partialorder %v2958, 0.5
      %vm2989 = vcmp.gt.f32.partialorder %v2959, 0.5
      %v2990 = vsel %vm2960, 1, 0
      %v2991 = vsel %vm2961, 1, 0
      %v2992 = vsel %vm2962, 1, 0
      %v2993 = vsel %vm2963, 1, 0
      %v2994 = vsel %vm2964, 1, 0
      %v2995 = vsel %vm2965, 1, 0
      %v2996 = vsel %vm2966, 1, 0
      %v2997 = vsel %vm2967, 1, 0
      %v2998 = vsel %vm2968, 1, 0
      %v2999 = vsel %vm2969, 1, 0
      %v3000 = vsel %vm2970, 1, 0
      %v3001 = vsel %vm2971, 1, 0
      %v3002 = vsel %vm2972, 1, 0
      %v3003 = vsel %vm2973, 1, 0
      %v3004 = vsel %vm2974, 1, 0
      %v3005 = vsel %vm2975, 1, 0
      %v3006 = vsel %vm2976, 1, 0
      %v3007 = vsel %vm2977, 1, 0
      %v3008 = vsel %vm2978, 1, 0
      %v3009 = vsel %vm2979, 1, 0
      %v3010 = vsel %vm2980, 1, 0
      %v3011 = vsel %vm2981, 1, 0
      %v3012 = vsel %vm2982, 1, 0
      %v3013 = vsel %vm2983, 1, 0
      %v3014 = vsel %vm2984, 1, 0
      %v3015 = vsel %vm2985, 1, 0
      %v3016 = vsel %vm2986, 1, 0
      %v3017 = vsel %vm2987, 1, 0
      %v3018 = vsel %vm2988, 1, 0
      %v3019 = vsel %vm2989, 1, 0
      %3020 = vset.pattern.permute.xlu0 0
      %3021 = vperm.xlu0 %3020, %v2990
      %v3022 = vpop.permute.xlu0 %3021
      %3023 = vset.pattern.permute.xlu0 0
      %3024 = vperm.xlu0 %3023, %v2991
      %v3025 = vpop.permute.xlu0 %3024
      %3026 = vset.pattern.permute.xlu0 0
      %3027 = vperm.xlu0 %3026, %v2992
      %v3028 = vpop.permute.xlu0 %3027
      %3029 = vset.pattern.permute.xlu0 0
      %3030 = vperm.xlu0 %3029, %v2993
      %v3031 = vpop.permute.xlu0 %3030
      %3032 = vset.pattern.permute.xlu0 0
      %3033 = vperm.xlu0 %3032, %v2994
      %v3034 = vpop.permute.xlu0 %3033
      %3035 = vset.pattern.permute.xlu0 0
      %3036 = vperm.xlu0 %3035, %v2995
      %v3037 = vpop.permute.xlu0 %3036
      %3038 = vset.pattern.permute.xlu0 0
      %3039 = vperm.xlu0 %3038, %v2996
      %v3040 = vpop.permute.xlu0 %3039
      %3041 = vset.pattern.permute.xlu0 0
      %3042 = vperm.xlu0 %3041, %v2997
      %v3043 = vpop.permute.xlu0 %3042
      %3044 = vset.pattern.permute.xlu0 0
      %3045 = vperm.xlu0 %3044, %v2998
      %v3046 = vpop.permute.xlu0 %3045
      %3047 = vset.pattern.permute.xlu0 0
      %3048 = vperm.xlu0 %3047, %v2999
      %v3049 = vpop.permute.xlu0 %3048
      %3050 = vset.pattern.permute.xlu0 0
      %3051 = vperm.xlu0 %3050, %v3000
      %v3052 = vpop.permute.xlu0 %3051
      %3053 = vset.pattern.permute.xlu0 0
      %3054 = vperm.xlu0 %3053, %v3001
      %v3055 = vpop.permute.xlu0 %3054
      %3056 = vset.pattern.permute.xlu0 0
      %3057 = vperm.xlu0 %3056, %v3002
      %v3058 = vpop.permute.xlu0 %3057
      %3059 = vset.pattern.permute.xlu0 0
      %3060 = vperm.xlu0 %3059, %v3003
      %v3061 = vpop.permute.xlu0 %3060
      %3062 = vset.pattern.permute.xlu0 0
      %3063 = vperm.xlu0 %3062, %v3004
      %v3064 = vpop.permute.xlu0 %3063
      %3065 = vset.pattern.permute.xlu0 0
      %3066 = vperm.xlu0 %3065, %v3005
      %v3067 = vpop.permute.xlu0 %3066
      %3068 = vset.pattern.permute.xlu0 0
      %3069 = vperm.xlu0 %3068, %v3006
      %v3070 = vpop.permute.xlu0 %3069
      %3071 = vset.pattern.permute.xlu0 0
      %3072 = vperm.xlu0 %3071, %v3007
      %v3073 = vpop.permute.xlu0 %3072
      %3074 = vset.pattern.permute.xlu0 0
      %3075 = vperm.xlu0 %3074, %v3008
      %v3076 = vpop.permute.xlu0 %3075
      %3077 = vset.pattern.permute.xlu0 0
      %3078 = vperm.xlu0 %3077, %v3009
      %v3079 = vpop.permute.xlu0 %3078
      %3080 = vset.pattern.permute.xlu0 0
      %3081 = vperm.xlu0 %3080, %v3010
      %v3082 = vpop.permute.xlu0 %3081
      %3083 = vset.pattern.permute.xlu0 0
      %3084 = vperm.xlu0 %3083, %v3011
      %v3085 = vpop.permute.xlu0 %3084
      %3086 = vset.pattern.permute.xlu0 0
      %3087 = vperm.xlu0 %3086, %v3012
      %v3088 = vpop.permute.xlu0 %3087
      %3089 = vset.pattern.permute.xlu0 0
      %3090 = vperm.xlu0 %3089, %v3013
      %v3091 = vpop.permute.xlu0 %3090
      %3092 = vset.pattern.permute.xlu0 0
      %3093 = vperm.xlu0 %3092, %v3014
      %v3094 = vpop.permute.xlu0 %3093
      %3095 = vset.pattern.permute.xlu0 0
      %3096 = vperm.xlu0 %3095, %v3015
      %v3097 = vpop.permute.xlu0 %3096
      %3098 = vset.pattern.permute.xlu0 0
      %3099 = vperm.xlu0 %3098, %v3016
      %v3100 = vpop.permute.xlu0 %3099
      %3101 = vset.pattern.permute.xlu0 0
      %3102 = vperm.xlu0 %3101, %v3017
      %v3103 = vpop.permute.xlu0 %3102
      %3104 = vset.pattern.permute.xlu0 0
      %3105 = vperm.xlu0 %3104, %v3018
      %v3106 = vpop.permute.xlu0 %3105
      %3107 = vset.pattern.permute.xlu0 0
      %3108 = vperm.xlu0 %3107, %v3019
      %v3109 = vpop.permute.xlu0 %3108
      %vm3110 = vcmp.eq.s32.totalorder %v3022, 1
      %vm3111 = vcmp.eq.s32.totalorder %v3025, 1
      %vm3112 = vcmp.eq.s32.totalorder %v3028, 1
      %vm3113 = vcmp.eq.s32.totalorder %v3031, 1
      %vm3114 = vcmp.eq.s32.totalorder %v3034, 1
      %vm3115 = vcmp.eq.s32.totalorder %v3037, 1
      %vm3116 = vcmp.eq.s32.totalorder %v3040, 1
      %vm3117 = vcmp.eq.s32.totalorder %v3043, 1
      %vm3118 = vcmp.eq.s32.totalorder %v3046, 1
      %vm3119 = vcmp.eq.s32.totalorder %v3049, 1
      %vm3120 = vcmp.eq.s32.totalorder %v3052, 1
      %vm3121 = vcmp.eq.s32.totalorder %v3055, 1
      %vm3122 = vcmp.eq.s32.totalorder %v3058, 1
      %vm3123 = vcmp.eq.s32.totalorder %v3061, 1
      %vm3124 = vcmp.eq.s32.totalorder %v3064, 1
      %vm3125 = vcmp.eq.s32.totalorder %v3067, 1
      %vm3126 = vcmp.eq.s32.totalorder %v3070, 1
      %vm3127 = vcmp.eq.s32.totalorder %v3073, 1
      %vm3128 = vcmp.eq.s32.totalorder %v3076, 1
      %vm3129 = vcmp.eq.s32.totalorder %v3079, 1
      %vm3130 = vcmp.eq.s32.totalorder %v3082, 1
      %vm3131 = vcmp.eq.s32.totalorder %v3085, 1
      %vm3132 = vcmp.eq.s32.totalorder %v3088, 1
      %vm3133 = vcmp.eq.s32.totalorder %v3091, 1
      %vm3134 = vcmp.eq.s32.totalorder %v3094, 1
      %vm3135 = vcmp.eq.s32.totalorder %v3097, 1
      %vm3136 = vcmp.eq.s32.totalorder %v3100, 1
      %vm3137 = vcmp.eq.s32.totalorder %v3103, 1
      %vm3138 = vcmp.eq.s32.totalorder %v3106, 1
      %vm3139 = vcmp.eq.s32.totalorder %v3109, 1
      %v3140 = vsel %vm3110, %v2900, 0.0
      %v3141 = vsel %vm3111, %v2901, 0.0
      %v3142 = vsel %vm3112, %v2902, 0.0
      %v3143 = vsel %vm3113, %v2903, 0.0
      %v3144 = vsel %vm3114, %v2904, 0.0
      %v3145 = vsel %vm3115, %v2905, 0.0
      %v3146 = vsel %vm3116, %v2906, 0.0
      %v3147 = vsel %vm3117, %v2907, 0.0
      %v3148 = vsel %vm3118, %v2908, 0.0
      %v3149 = vsel %vm3119, %v2909, 0.0
      %v3150 = vsel %vm3120, %v2910, 0.0
      %v3151 = vsel %vm3121, %v2911, 0.0
      %v3152 = vsel %vm3122, %v2912, 0.0
      %v3153 = vsel %vm3123, %v2913, 0.0
      %v3154 = vsel %vm3124, %v2914, 0.0
      %v3155 = vsel %vm3125, %v2915, 0.0
      %v3156 = vsel %vm3126, %v2916, 0.0
      %v3157 = vsel %vm3127, %v2917, 0.0
      %v3158 = vsel %vm3128, %v2918, 0.0
      %v3159 = vsel %vm3129, %v2919, 0.0
      %v3160 = vsel %vm3130, %v2920, 0.0
      %v3161 = vsel %vm3131, %v2921, 0.0
      %v3162 = vsel %vm3132, %v2922, 0.0
      %v3163 = vsel %vm3133, %v2923, 0.0
      %v3164 = vsel %vm3134, %v2924, 0.0
      %v3165 = vsel %vm3135, %v2925, 0.0
      %v3166 = vsel %vm3136, %v2926, 0.0
      %v3167 = vsel %vm3137, %v2927, 0.0
      %v3168 = vsel %vm3138, %v2928, 0.0
      %v3169 = vsel %vm3139, %v2929, 0.0
      %v3170 = vpack.c.bf16 %v3141, %v3140
      %v3171 = vpack.c.bf16 %v3143, %v3142
      %v3172 = vpack.c.bf16 %v3145, %v3144
      %v3173 = vpack.c.bf16 %v3147, %v3146
      %v3174 = vpack.c.bf16 %v3149, %v3148
      %v3175 = vpack.c.bf16 %v3151, %v3150
      %v3176 = vpack.c.bf16 %v3153, %v3152
      %v3177 = vpack.c.bf16 %v3155, %v3154
      %v3178 = vpack.c.bf16 %v3157, %v3156
      %v3179 = vpack.c.bf16 %v3159, %v3158
      %v3180 = vpack.c.bf16 %v3161, %v3160
      %v3181 = vpack.c.bf16 %v3163, %v3162
      %v3182 = vpack.c.bf16 %v3165, %v3164
      %v3183 = vpack.c.bf16 %v3167, %v3166
      %v3184 = vpack.c.bf16 %v3169, %v3168
      %v3200 = vunpack.c.l.b16 %v3170
      %v3201 = vunpack.c.h.b16 %v3170
      %v3202 = vunpack.c.l.b16 %v3171
      %v3203 = vunpack.c.h.b16 %v3171
      %v3204 = vunpack.c.l.b16 %v3172
      %v3205 = vunpack.c.h.b16 %v3172
      %v3206 = vunpack.c.l.b16 %v3173
      %v3207 = vunpack.c.h.b16 %v3173
      %v3208 = vunpack.c.l.b16 %v3174
      %v3209 = vunpack.c.h.b16 %v3174
      %v3210 = vunpack.c.l.b16 %v3175
      %v3211 = vunpack.c.h.b16 %v3175
      %v3212 = vunpack.c.l.b16 %v3176
      %v3213 = vunpack.c.h.b16 %v3176
      %v3214 = vunpack.c.l.b16 %v3177
      %v3215 = vunpack.c.h.b16 %v3177
      %v3216 = vunpack.c.l.b16 %v3178
      %v3217 = vunpack.c.h.b16 %v3178
      %v3218 = vunpack.c.l.b16 %v3179
      %v3219 = vunpack.c.h.b16 %v3179
      %v3220 = vunpack.c.l.b16 %v3180
      %v3221 = vunpack.c.h.b16 %v3180
      %v3222 = vunpack.c.l.b16 %v3181
      %v3223 = vunpack.c.h.b16 %v3181
      %v3224 = vunpack.c.l.b16 %v3182
      %v3225 = vunpack.c.h.b16 %v3182
      %v3226 = vunpack.c.l.b16 %v3183
      %v3227 = vunpack.c.h.b16 %v3183
      %v3228 = vunpack.c.l.b16 %v3184
      %v3229 = vunpack.c.h.b16 %v3184
      %v3230 = vpack.c.b16 %v3200, %v3200
      %v3231 = vpack.c.b16 %v3201, %v3201
      %v3232 = vpack.c.b16 %v3202, %v3202
      %v3233 = vpack.c.b16 %v3203, %v3203
      %v3234 = vpack.c.b16 %v3204, %v3204
      %v3235 = vpack.c.b16 %v3205, %v3205
      %v3236 = vpack.c.b16 %v3206, %v3206
      %v3237 = vpack.c.b16 %v3207, %v3207
      %v3238 = vpack.c.b16 %v3208, %v3208
      %v3239 = vpack.c.b16 %v3209, %v3209
      %v3240 = vpack.c.b16 %v3210, %v3210
      %v3241 = vpack.c.b16 %v3211, %v3211
      %v3242 = vpack.c.b16 %v3212, %v3212
      %v3243 = vpack.c.b16 %v3213, %v3213
      %v3244 = vpack.c.b16 %v3214, %v3214
      %v3245 = vpack.c.b16 %v3215, %v3215
      %v3246 = vpack.c.b16 %v3216, %v3216
      %v3247 = vpack.c.b16 %v3217, %v3217
      %v3248 = vpack.c.b16 %v3218, %v3218
      %v3249 = vpack.c.b16 %v3219, %v3219
      %v3250 = vpack.c.b16 %v3220, %v3220
      %v3251 = vpack.c.b16 %v3221, %v3221
      %v3252 = vpack.c.b16 %v3222, %v3222
      %v3253 = vpack.c.b16 %v3223, %v3223
      %v3254 = vpack.c.b16 %v3224, %v3224
      %v3255 = vpack.c.b16 %v3225, %v3225
      %v3256 = vpack.c.b16 %v3226, %v3226
      %v3257 = vpack.c.b16 %v3227, %v3227
      %v3258 = vpack.c.b16 %v3228, %v3228
      %v3259 = vpack.c.b16 %v3229, %v3229
      %3290 = vst [vmem:[#allocation3] sm:$0xf] %v3230
      %3291 = vst [vmem:[#allocation3 + $0x4] sm:$0xf] %v3231
      %3292 = vst [vmem:[#allocation3 + $0x8] sm:$0xf] %v3232
      %3293 = vst [vmem:[#allocation3 + $0xc] sm:$0xf] %v3233
      %3294 = vst [vmem:[#allocation3 + $0x10] sm:$0xf] %v3234
      %3295 = vst [vmem:[#allocation3 + $0x14] sm:$0xf] %v3235
      %3296 = vst [vmem:[#allocation3 + $0x18] sm:$0xf] %v3236
      %3297 = vst [vmem:[#allocation3 + $0x1c] sm:$0xf] %v3237
      %3298 = vst [vmem:[#allocation3 + $0x20] sm:$0xf] %v3238
      %3299 = vst [vmem:[#allocation3 + $0x24] sm:$0xf] %v3239
      %3300 = vst [vmem:[#allocation3 + $0x28] sm:$0xf] %v3240
      %3301 = vst [vmem:[#allocation3 + $0x2c] sm:$0xf] %v3241
      %3302 = vst [vmem:[#allocation3 + $0x30] sm:$0xf] %v3242
      %3303 = vst [vmem:[#allocation3 + $0x34] sm:$0xf] %v3243
      %3304 = vst [vmem:[#allocation3 + $0x38] sm:$0xf] %v3244
      %3305 = vst [vmem:[#allocation3 + $0x3c] sm:$0xf] %v3245
      %3306 = vst [vmem:[#allocation3 + $0x40] sm:$0xf] %v3246
      %3307 = vst [vmem:[#allocation3 + $0x44] sm:$0xf] %v3247
      %3308 = vst [vmem:[#allocation3 + $0x48] sm:$0xf] %v3248
      %3309 = vst [vmem:[#allocation3 + $0x4c] sm:$0xf] %v3249
      %3310 = vst [vmem:[#allocation3 + $0x50] sm:$0xf] %v3250
      %3311 = vst [vmem:[#allocation3 + $0x54] sm:$0xf] %v3251
      %3312 = vst [vmem:[#allocation3 + $0x58] sm:$0xf] %v3252
      %3313 = vst [vmem:[#allocation3 + $0x5c] sm:$0xf] %v3253
      %3314 = vst [vmem:[#allocation3 + $0x60] sm:$0xf] %v3254
      %3315 = vst [vmem:[#allocation3 + $0x64] sm:$0xf] %v3255
      %3316 = vst [vmem:[#allocation3 + $0x68] sm:$0xf] %v3256
      %3317 = vst [vmem:[#allocation3 + $0x6c] sm:$0xf] %v3257
      %3318 = vst [vmem:[#allocation3 + $0x70] sm:$0xf] %v3258
      %3319 = vst [vmem:[#allocation3 + $0x74] sm:$0xf] %v3259
      %p3320 = scmp.eq.s32.totalorder %s24, 0
      // Predicated region
      $region75: #{down_sample.1} parent=39 // pred_check
        %p3321 = pneg %p3320
      $region76: #{down_sample.1} parent=39 // pred_check_branch
        %3323 = sbr.rel (%p3321) target = $region78
      $region77: #{down_sample.1} parent=39 // pred_region
        %3324 = vst [vmem:[#allocation3] sm:$0xf] 0
        %3325 = vst [vmem:[#allocation3 + $0x4] sm:$0xf] 0
        %3326 = vst [vmem:[#allocation3 + $0x8] sm:$0xf] 0
      $region78: #{down_sample.1} parent=39 // pred_fallthru
        _
      %p3327 = scmp.eq.s32.totalorder %s24, 1
      // Predicated region
      $region79: #{down_sample.1} parent=39 // pred_check
        %p3328 = pneg %p3327
      $region80: #{down_sample.1} parent=39 // pred_check_branch
        %3330 = sbr.rel (%p3328) target = $region82
      $region81: #{down_sample.1} parent=39 // pred_region
        %3331 = vst [vmem:[#allocation3 + $0x6c] sm:$0xf] 0
        %3332 = vst [vmem:[#allocation3 + $0x70] sm:$0xf] 0
        %3333 = vst [vmem:[#allocation3 + $0x74] sm:$0xf] 0
      $region82: #{down_sample.1} parent=39 // pred_fallthru
        _
      %v3334 = vld [vmem:[#allocation3] sm:$0xf]
      %v3335 = vld [vmem:[#allocation3 + $0x4] sm:$0xf]
      %v3336 = vld [vmem:[#allocation3 + $0x8] sm:$0xf]
      %v3337 = vld [vmem:[#allocation3 + $0xc] sm:$0xf]
      %v3338 = vld [vmem:[#allocation3 + $0x10] sm:$0xf]
      %v3339 = vld [vmem:[#allocation3 + $0x14] sm:$0xf]
      %v3340 = vld [vmem:[#allocation3 + $0x18] sm:$0xf]
      %v3341 = vld [vmem:[#allocation3 + $0x1c] sm:$0xf]
      %v3342 = vld [vmem:[#allocation3 + $0x20] sm:$0xf]
      %v3343 = vld [vmem:[#allocation3 + $0x24] sm:$0xf]
      %v3344 = vld [vmem:[#allocation3 + $0x28] sm:$0xf]
      %v3345 = vld [vmem:[#allocation3 + $0x2c] sm:$0xf]
      %v3346 = vld [vmem:[#allocation3 + $0x30] sm:$0xf]
      %v3347 = vld [vmem:[#allocation3 + $0x34] sm:$0xf]
      %v3348 = vld [vmem:[#allocation3 + $0x38] sm:$0xf]
      %v3349 = vld [vmem:[#allocation3 + $0x3c] sm:$0xf]
      %v3350 = vld [vmem:[#allocation3 + $0x40] sm:$0xf]
      %v3351 = vld [vmem:[#allocation3 + $0x44] sm:$0xf]
      %v3352 = vld [vmem:[#allocation3 + $0x48] sm:$0xf]
      %v3353 = vld [vmem:[#allocation3 + $0x4c] sm:$0xf]
      %v3354 = vld [vmem:[#allocation3 + $0x50] sm:$0xf]
      %v3355 = vld [vmem:[#allocation3 + $0x54] sm:$0xf]
      %v3356 = vld [vmem:[#allocation3 + $0x58] sm:$0xf]
      %v3357 = vld [vmem:[#allocation3 + $0x5c] sm:$0xf]
      %v3358 = vld [vmem:[#allocation3 + $0x60] sm:$0x1]
      %v3359 = vld [vmem:[#allocation3] sm:$0xe]
      %v3384 = vunpack.c.l.b16 %v3334
      %v3385 = vunpack.c.l.b16 %v3335
      %v3386 = vunpack.c.l.b16 %v3336
      %v3387 = vunpack.c.l.b16 %v3337
      %v3388 = vunpack.c.l.b16 %v3338
      %v3389 = vunpack.c.l.b16 %v3339
      %v3390 = vunpack.c.l.b16 %v3340
      %v3391 = vunpack.c.l.b16 %v3341
      %v3392 = vunpack.c.l.b16 %v3342
      %v3393 = vunpack.c.l.b16 %v3343
      %v3394 = vunpack.c.l.b16 %v3344
      %v3395 = vunpack.c.l.b16 %v3345
      %v3396 = vunpack.c.l.b16 %v3346
      %v3397 = vunpack.c.l.b16 %v3347
      %v3398 = vunpack.c.l.b16 %v3348
      %v3399 = vunpack.c.l.b16 %v3349
      %v3400 = vunpack.c.l.b16 %v3350
      %v3401 = vunpack.c.l.b16 %v3351
      %v3402 = vunpack.c.l.b16 %v3352
      %v3403 = vunpack.c.l.b16 %v3353
      %v3404 = vunpack.c.l.b16 %v3354
      %v3405 = vunpack.c.l.b16 %v3355
      %v3406 = vunpack.c.l.b16 %v3356
      %v3407 = vunpack.c.l.b16 %v3357
      %v3408 = vpack.c.b16 %v3385, %v3384
      %v3409 = vpack.c.b16 %v3387, %v3386
      %v3410 = vpack.c.b16 %v3389, %v3388
      %v3411 = vpack.c.b16 %v3391, %v3390
      %v3412 = vpack.c.b16 %v3393, %v3392
      %v3413 = vpack.c.b16 %v3395, %v3394
      %v3414 = vpack.c.b16 %v3397, %v3396
      %v3415 = vpack.c.b16 %v3399, %v3398
      %v3416 = vpack.c.b16 %v3401, %v3400
      %v3417 = vpack.c.b16 %v3403, %v3402
      %v3418 = vpack.c.b16 %v3405, %v3404
      %v3419 = vpack.c.b16 %v3407, %v3406
      %v3433 = vunpack.c.l.b16 %v3358
      %v3434 = vpack.c.b16 %v3433, %v3433
      %v3436 = vshrl.u32 %v3408, 16
      %v3438 = vshll.u32 %v3408, 16
      %v3440 = vrot.slane %v3438, 1
      %v3441 = vor.u32 %v3436, %v3440
      %v3443 = vshll.u32 %v3409, 16
      %v3445 = vrot.slane %v3443, 1
      %v3446 = vsel %vm497, %v3441, %v3445
      %v3447 = vshrl.u32 %v3409, 16
      %v3449 = vor.u32 %v3447, %v3445
      %v3451 = vshll.u32 %v3410, 16
      %v3453 = vrot.slane %v3451, 1
      %v3454 = vsel %vm497, %v3449, %v3453
      %v3455 = vshrl.u32 %v3410, 16
      %v3457 = vor.u32 %v3455, %v3453
      %v3459 = vshll.u32 %v3411, 16
      %v3461 = vrot.slane %v3459, 1
      %v3462 = vsel %vm497, %v3457, %v3461
      %v3463 = vshrl.u32 %v3411, 16
      %v3465 = vor.u32 %v3463, %v3461
      %v3467 = vshll.u32 %v3412, 16
      %v3469 = vrot.slane %v3467, 1
      %v3470 = vsel %vm497, %v3465, %v3469
      %v3471 = vshrl.u32 %v3412, 16
      %v3473 = vor.u32 %v3471, %v3469
      %v3475 = vshll.u32 %v3413, 16
      %v3477 = vrot.slane %v3475, 1
      %v3478 = vsel %vm497, %v3473, %v3477
      %v3479 = vshrl.u32 %v3413, 16
      %v3481 = vor.u32 %v3479, %v3477
      %v3483 = vshll.u32 %v3414, 16
      %v3485 = vrot.slane %v3483, 1
      %v3486 = vsel %vm497, %v3481, %v3485
      %v3487 = vshrl.u32 %v3414, 16
      %v3489 = vor.u32 %v3487, %v3485
      %v3491 = vshll.u32 %v3415, 16
      %v3493 = vrot.slane %v3491, 1
      %v3494 = vsel %vm497, %v3489, %v3493
      %v3495 = vshrl.u32 %v3415, 16
      %v3497 = vor.u32 %v3495, %v3493
      %v3499 = vshll.u32 %v3416, 16
      %v3501 = vrot.slane %v3499, 1
      %v3502 = vsel %vm497, %v3497, %v3501
      %v3503 = vshrl.u32 %v3416, 16
      %v3505 = vor.u32 %v3503, %v3501
      %v3507 = vshll.u32 %v3417, 16
      %v3509 = vrot.slane %v3507, 1
      %v3510 = vsel %vm497, %v3505, %v3509
      %v3511 = vshrl.u32 %v3417, 16
      %v3513 = vor.u32 %v3511, %v3509
      %v3515 = vshll.u32 %v3418, 16
      %v3517 = vrot.slane %v3515, 1
      %v3518 = vsel %vm497, %v3513, %v3517
      %v3519 = vshrl.u32 %v3418, 16
      %v3521 = vor.u32 %v3519, %v3517
      %v3523 = vshll.u32 %v3419, 16
      %v3525 = vrot.slane %v3523, 1
      %v3526 = vsel %vm497, %v3521, %v3525
      %v3527 = vshrl.u32 %v3419, 16
      %v3529 = vor.u32 %v3527, %v3525
      %v3531 = vshll.u32 %v3434, 16
      %v3533 = vrot.slane %v3531, 1
      %v3534 = vsel %vm497, %v3529, %v3533
      %v3548 = vunpack.c.l.b16 %v3359
      %v3549 = vpack.c.b16 %v3385, %v3548
      %v3550 = vrot.slane %v3549, 1
      %v3551 = vrot.slane %v3409, 1
      %v3552 = vsel %vm640, %v3550, %v3551
      %v3553 = vrot.slane %v3410, 1
      %v3554 = vsel %vm640, %v3551, %v3553
      %v3555 = vrot.slane %v3411, 1
      %v3556 = vsel %vm640, %v3553, %v3555
      %v3557 = vrot.slane %v3412, 1
      %v3558 = vsel %vm640, %v3555, %v3557
      %v3559 = vrot.slane %v3413, 1
      %v3560 = vsel %vm640, %v3557, %v3559
      %v3561 = vrot.slane %v3414, 1
      %v3562 = vsel %vm640, %v3559, %v3561
      %v3563 = vrot.slane %v3415, 1
      %v3564 = vsel %vm640, %v3561, %v3563
      %v3565 = vrot.slane %v3416, 1
      %v3566 = vsel %vm640, %v3563, %v3565
      %v3567 = vrot.slane %v3417, 1
      %v3568 = vsel %vm640, %v3565, %v3567
      %v3569 = vrot.slane %v3418, 1
      %v3570 = vsel %vm640, %v3567, %v3569
      %v3571 = vrot.slane %v3419, 1
      %v3572 = vsel %vm640, %v3569, %v3571
      %v3573 = vrot.slane %v3434, 1
      %v3574 = vsel %vm640, %v3571, %v3573
      %v3587 = vld [vmem:[%s3] sm:$0xf]
      %v3588 = vld [vmem:[%s3 + $0x4] sm:$0xf]
      %v3589 = vld [vmem:[%s3 + $0x8] sm:$0xf]
      %v3590 = vld [vmem:[%s3 + $0xc] sm:$0xf]
      %v3591 = vld [vmem:[%s3 + $0x10] sm:$0xf]
      %v3592 = vld [vmem:[%s3 + $0x14] sm:$0xf]
      %v3593 = vld [vmem:[%s3 + $0x18] sm:$0xf]
      %v3594 = vld [vmem:[%s3 + $0x1c] sm:$0xf]
      %v3595 = vld [vmem:[%s3 + $0x20] sm:$0xf]
      %v3596 = vld [vmem:[%s3 + $0x24] sm:$0xf]
      %v3597 = vld [vmem:[%s3 + $0x28] sm:$0xf]
      %v3598 = vld [vmem:[%s3 + $0x2c] sm:$0xf]
      %v3599 = vld [vmem:[%s3 + $0x30] sm:$0xf]
      %v3600 = vld [vmem:[%s3 + $0x34] sm:$0xf]
      %v3601 = vld [vmem:[%s3 + $0x38] sm:$0xf]
      %v3602 = vld [vmem:[%s3 + $0x3c] sm:$0xf]
      %v3603 = vld [vmem:[%s3 + $0x40] sm:$0xf]
      %v3604 = vld [vmem:[%s3 + $0x44] sm:$0xf]
      %v3605 = vld [vmem:[%s3 + $0x48] sm:$0xf]
      %v3606 = vld [vmem:[%s3 + $0x4c] sm:$0xf]
      %v3607 = vld [vmem:[%s3 + $0x50] sm:$0xf]
      %v3608 = vld [vmem:[%s3 + $0x54] sm:$0xf]
      %v3609 = vld [vmem:[%s3 + $0x58] sm:$0xf]
      %v3610 = vld [vmem:[%s3 + $0x5c] sm:$0xf]
      %v3611 = vld [vmem:[%s3 + $0x60] sm:$0xf]
      %v3612 = vld [vmem:[%s3 + $0x64] sm:$0xf]
      %v3613 = vld [vmem:[%s3 + $0x68] sm:$0xf]
      %v3614 = vld [vmem:[%s3 + $0x6c] sm:$0xf]
      %v3615 = vld [vmem:[%s3 + $0x70] sm:$0xf]
      %v3616 = vld [vmem:[%s3 + $0x74] sm:$0xf]
      %v3617 = vld [vmem:[%s3 + $0x78] sm:$0xf]
      %v3618 = vld [vmem:[%s3 + $0x7c] sm:$0xf]
      %v3619 = vld [vmem:[%s3 + $0x80] sm:$0xf]
      %v3620 = vld [vmem:[%s3 + $0x84] sm:$0xf]
      %v3621 = vld [vmem:[%s3 + $0x88] sm:$0xf]
      %v3622 = vld [vmem:[%s3 + $0x8c] sm:$0xf]
      %v3623 = vld [vmem:[%s3 + $0x90] sm:$0xf]
      %v3624 = vld [vmem:[%s3 + $0x94] sm:$0xf]
      %v3625 = vld [vmem:[%s3 + $0x98] sm:$0xf]
      %v3626 = vld [vmem:[%s3 + $0x9c] sm:$0xf]
      %v3627 = vld [vmem:[%s3 + $0xa0] sm:$0xf]
      %v3628 = vld [vmem:[%s3 + $0xa4] sm:$0xf]
      %v3629 = vld [vmem:[%s3 + $0xa8] sm:$0xf]
      %v3630 = vld [vmem:[%s3 + $0xac] sm:$0xf]
      %v3631 = vld [vmem:[%s3 + $0xb0] sm:$0xf]
      %v3632 = vld [vmem:[%s3 + $0xb4] sm:$0xf]
      %v3633 = vld [vmem:[%s3 + $0xb8] sm:$0xf]
      %v3634 = vld [vmem:[%s3 + $0xbc] sm:$0xf]
      %v3635 = vld [vmem:[#allocation3 + $0x60] sm:$0xf]
      %v3636 = vld [vmem:[#allocation3 + $0x64] sm:$0xf]
      %v3637 = vld [vmem:[#allocation3 + $0x68] sm:$0xf]
      %v3638 = vld [vmem:[#allocation3 + $0x6c] sm:$0x1]
      %v3639 = vld [vmem:[#allocation3 + $0xc] sm:$0xe]
      %v3643 = vunpack.c.l.b16 %v3635
      %v3644 = vunpack.c.l.b16 %v3636
      %v3645 = vunpack.c.l.b16 %v3637
      %v3646 = vpack.c.b16 %v3388, %v3387
      %v3647 = vpack.c.b16 %v3390, %v3389
      %v3648 = vpack.c.b16 %v3392, %v3391
      %v3649 = vpack.c.b16 %v3394, %v3393
      %v3650 = vpack.c.b16 %v3396, %v3395
      %v3651 = vpack.c.b16 %v3398, %v3397
      %v3652 = vpack.c.b16 %v3400, %v3399
      %v3653 = vpack.c.b16 %v3402, %v3401
      %v3654 = vpack.c.b16 %v3404, %v3403
      %v3655 = vpack.c.b16 %v3406, %v3405
      %v3656 = vpack.c.b16 %v3643, %v3407
      %v3657 = vpack.c.b16 %v3645, %v3644
      %v3671 = vunpack.c.l.b16 %v3638
      %v3672 = vpack.c.b16 %v3671, %v3671
      %v3674 = vshrl.u32 %v3646, 16
      %v3676 = vshll.u32 %v3646, 16
      %v3678 = vrot.slane %v3676, 1
      %v3679 = vor.u32 %v3674, %v3678
      %v3681 = vshll.u32 %v3647, 16
      %v3683 = vrot.slane %v3681, 1
      %v3684 = vsel %vm497, %v3679, %v3683
      %v3685 = vshrl.u32 %v3647, 16
      %v3687 = vor.u32 %v3685, %v3683
      %v3689 = vshll.u32 %v3648, 16
      %v3691 = vrot.slane %v3689, 1
      %v3692 = vsel %vm497, %v3687, %v3691
      %v3693 = vshrl.u32 %v3648, 16
      %v3695 = vor.u32 %v3693, %v3691
      %v3697 = vshll.u32 %v3649, 16
      %v3699 = vrot.slane %v3697, 1
      %v3700 = vsel %vm497, %v3695, %v3699
      %v3701 = vshrl.u32 %v3649, 16
      %v3703 = vor.u32 %v3701, %v3699
      %v3705 = vshll.u32 %v3650, 16
      %v3707 = vrot.slane %v3705, 1
      %v3708 = vsel %vm497, %v3703, %v3707
      %v3709 = vshrl.u32 %v3650, 16
      %v3711 = vor.u32 %v3709, %v3707
      %v3713 = vshll.u32 %v3651, 16
      %v3715 = vrot.slane %v3713, 1
      %v3716 = vsel %vm497, %v3711, %v3715
      %v3717 = vshrl.u32 %v3651, 16
      %v3719 = vor.u32 %v3717, %v3715
      %v3721 = vshll.u32 %v3652, 16
      %v3723 = vrot.slane %v3721, 1
      %v3724 = vsel %vm497, %v3719, %v3723
      %v3725 = vshrl.u32 %v3652, 16
      %v3727 = vor.u32 %v3725, %v3723
      %v3729 = vshll.u32 %v3653, 16
      %v3731 = vrot.slane %v3729, 1
      %v3732 = vsel %vm497, %v3727, %v3731
      %v3733 = vshrl.u32 %v3653, 16
      %v3735 = vor.u32 %v3733, %v3731
      %v3737 = vshll.u32 %v3654, 16
      %v3739 = vrot.slane %v3737, 1
      %v3740 = vsel %vm497, %v3735, %v3739
      %v3741 = vshrl.u32 %v3654, 16
      %v3743 = vor.u32 %v3741, %v3739
      %v3745 = vshll.u32 %v3655, 16
      %v3747 = vrot.slane %v3745, 1
      %v3748 = vsel %vm497, %v3743, %v3747
      %v3749 = vshrl.u32 %v3655, 16
      %v3751 = vor.u32 %v3749, %v3747
      %v3753 = vshll.u32 %v3656, 16
      %v3755 = vrot.slane %v3753, 1
      %v3756 = vsel %vm497, %v3751, %v3755
      %v3757 = vshrl.u32 %v3656, 16
      %v3759 = vor.u32 %v3757, %v3755
      %v3761 = vshll.u32 %v3657, 16
      %v3763 = vrot.slane %v3761, 1
      %v3764 = vsel %vm497, %v3759, %v3763
      %v3765 = vshrl.u32 %v3657, 16
      %v3767 = vor.u32 %v3765, %v3763
      %v3769 = vshll.u32 %v3672, 16
      %v3771 = vrot.slane %v3769, 1
      %v3772 = vsel %vm497, %v3767, %v3771
      %v3786 = vunpack.c.l.b16 %v3639
      %v3787 = vpack.c.b16 %v3388, %v3786
      %v3788 = vrot.slane %v3787, 1
      %v3789 = vrot.slane %v3647, 1
      %v3790 = vsel %vm640, %v3788, %v3789
      %v3791 = vrot.slane %v3648, 1
      %v3792 = vsel %vm640, %v3789, %v3791
      %v3793 = vrot.slane %v3649, 1
      %v3794 = vsel %vm640, %v3791, %v3793
      %v3795 = vrot.slane %v3650, 1
      %v3796 = vsel %vm640, %v3793, %v3795
      %v3797 = vrot.slane %v3651, 1
      %v3798 = vsel %vm640, %v3795, %v3797
      %v3799 = vrot.slane %v3652, 1
      %v3800 = vsel %vm640, %v3797, %v3799
      %v3801 = vrot.slane %v3653, 1
      %v3802 = vsel %vm640, %v3799, %v3801
      %v3803 = vrot.slane %v3654, 1
      %v3804 = vsel %vm640, %v3801, %v3803
      %v3805 = vrot.slane %v3655, 1
      %v3806 = vsel %vm640, %v3803, %v3805
      %v3807 = vrot.slane %v3656, 1
      %v3808 = vsel %vm640, %v3805, %v3807
      %v3809 = vrot.slane %v3657, 1
      %v3810 = vsel %vm640, %v3807, %v3809
      %v3811 = vrot.slane %v3672, 1
      %v3812 = vsel %vm640, %v3809, %v3811
      %s3825 = scalar_lea.vmem %s3, 192
      %v3826 = vld [vmem:[%s3825] sm:$0xf]
      %v3827 = vld [vmem:[%s3825 + $0x4] sm:$0xf]
      %v3828 = vld [vmem:[%s3825 + $0x8] sm:$0xf]
      %v3829 = vld [vmem:[%s3825 + $0xc] sm:$0xf]
      %v3830 = vld [vmem:[%s3825 + $0x10] sm:$0xf]
      %v3831 = vld [vmem:[%s3825 + $0x14] sm:$0xf]
      %v3832 = vld [vmem:[%s3825 + $0x18] sm:$0xf]
      %v3833 = vld [vmem:[%s3825 + $0x1c] sm:$0xf]
      %v3834 = vld [vmem:[%s3825 + $0x20] sm:$0xf]
      %v3835 = vld [vmem:[%s3825 + $0x24] sm:$0xf]
      %v3836 = vld [vmem:[%s3825 + $0x28] sm:$0xf]
      %v3837 = vld [vmem:[%s3825 + $0x2c] sm:$0xf]
      %v3838 = vld [vmem:[%s3825 + $0x30] sm:$0xf]
      %v3839 = vld [vmem:[%s3825 + $0x34] sm:$0xf]
      %v3840 = vld [vmem:[%s3825 + $0x38] sm:$0xf]
      %v3841 = vld [vmem:[%s3825 + $0x3c] sm:$0xf]
      %v3842 = vld [vmem:[%s3825 + $0x40] sm:$0xf]
      %v3843 = vld [vmem:[%s3825 + $0x44] sm:$0xf]
      %v3844 = vld [vmem:[%s3825 + $0x48] sm:$0xf]
      %v3845 = vld [vmem:[%s3825 + $0x4c] sm:$0xf]
      %v3846 = vld [vmem:[%s3825 + $0x50] sm:$0xf]
      %v3847 = vld [vmem:[%s3825 + $0x54] sm:$0xf]
      %v3848 = vld [vmem:[%s3825 + $0x58] sm:$0xf]
      %v3849 = vld [vmem:[%s3825 + $0x5c] sm:$0xf]
      %v3850 = vld [vmem:[%s3825 + $0x60] sm:$0xf]
      %v3851 = vld [vmem:[%s3825 + $0x64] sm:$0xf]
      %v3852 = vld [vmem:[%s3825 + $0x68] sm:$0xf]
      %v3853 = vld [vmem:[%s3825 + $0x6c] sm:$0xf]
      %v3854 = vld [vmem:[%s3825 + $0x70] sm:$0xf]
      %v3855 = vld [vmem:[%s3825 + $0x74] sm:$0xf]
      %v3856 = vld [vmem:[%s3825 + $0x78] sm:$0xf]
      %v3857 = vld [vmem:[%s3825 + $0x7c] sm:$0xf]
      %v3858 = vld [vmem:[%s3825 + $0x80] sm:$0xf]
      %v3859 = vld [vmem:[%s3825 + $0x84] sm:$0xf]
      %v3860 = vld [vmem:[%s3825 + $0x88] sm:$0xf]
      %v3861 = vld [vmem:[%s3825 + $0x8c] sm:$0xf]
      %v3862 = vld [vmem:[%s3825 + $0x90] sm:$0xf]
      %v3863 = vld [vmem:[%s3825 + $0x94] sm:$0xf]
      %v3864 = vld [vmem:[%s3825 + $0x98] sm:$0xf]
      %v3865 = vld [vmem:[%s3825 + $0x9c] sm:$0xf]
      %v3866 = vld [vmem:[%s3825 + $0xa0] sm:$0xf]
      %v3867 = vld [vmem:[%s3825 + $0xa4] sm:$0xf]
      %v3868 = vld [vmem:[%s3825 + $0xa8] sm:$0xf]
      %v3869 = vld [vmem:[%s3825 + $0xac] sm:$0xf]
      %v3870 = vld [vmem:[%s3825 + $0xb0] sm:$0xf]
      %v3871 = vld [vmem:[%s3825 + $0xb4] sm:$0xf]
      %v3872 = vld [vmem:[%s3825 + $0xb8] sm:$0xf]
      %v3873 = vld [vmem:[%s3825 + $0xbc] sm:$0xf]
      %v3922 = vunpack.c.l.b16 %v3826
      %v3923 = vunpack.c.l.b16 %v3827
      %v3924 = vunpack.c.l.b16 %v3828
      %v3925 = vunpack.c.l.b16 %v3829
      %v3926 = vunpack.c.l.b16 %v3830
      %v3927 = vunpack.c.l.b16 %v3831
      %v3928 = vunpack.c.l.b16 %v3832
      %v3929 = vunpack.c.l.b16 %v3833
      %v3930 = vunpack.c.l.b16 %v3834
      %v3931 = vunpack.c.l.b16 %v3835
      %v3932 = vunpack.c.l.b16 %v3836
      %v3933 = vunpack.c.l.b16 %v3837
      %v3934 = vunpack.c.l.b16 %v3838
      %v3935 = vunpack.c.l.b16 %v3839
      %v3936 = vunpack.c.l.b16 %v3840
      %v3937 = vunpack.c.l.b16 %v3841
      %v3938 = vunpack.c.l.b16 %v3842
      %v3939 = vunpack.c.l.b16 %v3843
      %v3940 = vunpack.c.l.b16 %v3844
      %v3941 = vunpack.c.l.b16 %v3845
      %v3942 = vunpack.c.l.b16 %v3846
      %v3943 = vunpack.c.l.b16 %v3847
      %v3944 = vunpack.c.l.b16 %v3848
      %v3945 = vunpack.c.l.b16 %v3849
      %v3946 = vunpack.c.l.b16 %v3850
      %v3947 = vunpack.c.l.b16 %v3851
      %v3948 = vunpack.c.l.b16 %v3852
      %v3949 = vunpack.c.l.b16 %v3853
      %v3950 = vunpack.c.l.b16 %v3854
      %v3951 = vunpack.c.l.b16 %v3855
      %v3952 = vunpack.c.l.b16 %v3856
      %v3953 = vunpack.c.l.b16 %v3857
      %v3954 = vunpack.c.l.b16 %v3858
      %v3955 = vunpack.c.l.b16 %v3859
      %v3956 = vunpack.c.l.b16 %v3860
      %v3957 = vunpack.c.l.b16 %v3861
      %v3958 = vunpack.c.l.b16 %v3862
      %v3959 = vunpack.c.l.b16 %v3863
      %v3960 = vunpack.c.l.b16 %v3864
      %v3961 = vunpack.c.l.b16 %v3865
      %v3962 = vunpack.c.l.b16 %v3866
      %v3963 = vunpack.c.l.b16 %v3867
      %v3964 = vunpack.c.l.b16 %v3868
      %v3965 = vunpack.c.l.b16 %v3869
      %v3966 = vunpack.c.l.b16 %v3870
      %v3967 = vunpack.c.l.b16 %v3871
      %v3968 = vunpack.c.l.b16 %v3872
      %v3969 = vunpack.c.l.b16 %v3873
      %v3970 = vpack.c.b16 %v3923, %v3922
      %v3971 = vpack.c.b16 %v3925, %v3924
      %v3972 = vpack.c.b16 %v3927, %v3926
      %v3973 = vpack.c.b16 %v3929, %v3928
      %v3974 = vpack.c.b16 %v3931, %v3930
      %v3975 = vpack.c.b16 %v3933, %v3932
      %v3976 = vpack.c.b16 %v3935, %v3934
      %v3977 = vpack.c.b16 %v3937, %v3936
      %v3978 = vpack.c.b16 %v3939, %v3938
      %v3979 = vpack.c.b16 %v3941, %v3940
      %v3980 = vpack.c.b16 %v3943, %v3942
      %v3981 = vpack.c.b16 %v3945, %v3944
      %v3982 = vpack.c.b16 %v3947, %v3946
      %v3983 = vpack.c.b16 %v3949, %v3948
      %v3984 = vpack.c.b16 %v3951, %v3950
      %v3985 = vpack.c.b16 %v3953, %v3952
      %v3986 = vpack.c.b16 %v3955, %v3954
      %v3987 = vpack.c.b16 %v3957, %v3956
      %v3988 = vpack.c.b16 %v3959, %v3958
      %v3989 = vpack.c.b16 %v3961, %v3960
      %v3990 = vpack.c.b16 %v3963, %v3962
      %v3991 = vpack.c.b16 %v3965, %v3964
      %v3992 = vpack.c.b16 %v3967, %v3966
      %v3993 = vpack.c.b16 %v3969, %v3968
      %4018 = vmatprep.subr.bf16.mxu0 0
      %4019 = vmatpush1.bf16.msra.mxu0 %v3970
      %4020 = vmatprep.subr.bf16.mxu0 0
      %4021 = vmatpush1.bf16.msra.mxu0 %v3971
      %4022 = vmatprep.subr.bf16.mxu0 0
      %4023 = vmatpush1.bf16.msra.mxu0 %v3972
      %4024 = vmatprep.subr.bf16.mxu0 0
      %4025 = vmatpush1.bf16.msra.mxu0 %v3973
      %4026 = vmatprep.subr.bf16.mxu0 0
      %4027 = vmatpush1.bf16.msra.mxu0 %v3974
      %4028 = vmatprep.subr.bf16.mxu0 0
      %4029 = vmatpush1.bf16.msra.mxu0 %v3975
      %4030 = vmatprep.subr.bf16.mxu0 0
      %4031 = vmatpush1.bf16.msra.mxu0 %v3976
      %4032 = vmatprep.subr.bf16.mxu0 0
      %4033 = vmatpush1.bf16.msra.mxu0 %v3977
      %4034 = vmatprep.subr.bf16.mxu0 0
      %4035 = vmatpush1.bf16.msra.mxu0 %v3978
      %4036 = vmatprep.subr.bf16.mxu0 0
      %4037 = vmatpush1.bf16.msra.mxu0 %v3979
      %4038 = vmatprep.subr.bf16.mxu0 0
      %4039 = vmatpush1.bf16.msra.mxu0 %v3980
      %4040 = vmatprep.subr.bf16.mxu0 0
      %4041 = vmatpush1.bf16.msra.mxu0 %v3981
      %4042 = vmatprep.subr.bf16.mxu0 0
      %4043 = vmatpush1.bf16.msra.mxu0 %v3982
      %4044 = vmatprep.subr.bf16.mxu0 0
      %4045 = vmatpush1.bf16.msra.mxu0 %v3983
      %4046 = vmatprep.subr.bf16.mxu0 0
      %4047 = vmatpush1.bf16.msra.mxu0 %v3984
      %4048 = vmatprep.subr.bf16.mxu0 0
      %4049 = vmatpush1.bf16.msra.mxu0 %v3985
      %4050 = vmatprep.mubr.bf16.mxu0 %v3684
      %4051 = vmatmul.mubr.bf16.gmra.mrb[0].mxu0 %v3646
      %v4052 = vpop.f32.mrb[0].mxu0
      %v4053 = vadd.f32 0.0, %v4052
      %v4054 = vpop.f32.mrb[0].mxu0
      %v4055 = vpop.f32.mrb[0].mxu0
      %v4056 = vadd.f32 0.0, %v4055
      %v4057 = vpop.f32.mrb[0].mxu0
      %4058 = vmatprep.mubr.bf16.mxu0 %v3692
      %4059 = vmatmul.mubr.bf16.gmra.mrb[0].mxu0 %v3647
      %v4060 = vpop.f32.mrb[0].mxu0
      %v4061 = vpop.f32.mrb[0].mxu0
      %v4062 = vpop.f32.mrb[0].mxu0
      %v4063 = vadd.f32 0.0, %v4062
      %v4064 = vpop.f32.mrb[0].mxu0
      %4065 = vmatprep.mubr.bf16.mxu0 %v3700
      %4066 = vmatmul.mubr.bf16.gmra.mrb[0].mxu0 %v3648
      %v4067 = vpop.f32.mrb[0].mxu0
      %v4068 = vadd.f32 0.0, %v4067
      %v4069 = vpop.f32.mrb[0].mxu0
      %v4070 = vpop.f32.mrb[0].mxu0
      %v4071 = vpop.f32.mrb[0].mxu0
      %4072 = vmatprep.mubr.bf16.mxu0 %v3708
      %4073 = vmatmul.mubr.bf16.gmra.mrb[0].mxu0 %v3649
      %v4074 = vpop.f32.mrb[0].mxu0
      %v4075 = vadd.f32 0.0, %v4074
      %v4076 = vpop.f32.mrb[0].mxu0
      %v4077 = vpop.f32.mrb[0].mxu0
      %v4078 = vadd.f32 0.0, %v4077
      %v4079 = vpop.f32.mrb[0].mxu0
      %4080 = vmatprep.mubr.bf16.mxu0 %v3716
      %4081 = vmatmul.mubr.bf16.gmra.mrb[0].mxu0 %v3650
      %v4082 = vpop.f32.mrb[0].mxu0
      %v4083 = vpop.f32.mrb[0].mxu0
      %v4084 = vpop.f32.mrb[0].mxu0
      %v4085 = vadd.f32 0.0, %v4084
      %v4086 = vpop.f32.mrb[0].mxu0
      %4087 = vmatprep.mubr.bf16.mxu0 %v3724
      %4088 = vmatmul.mubr.bf16.gmra.mrb[0].mxu0 %v3651
      %v4089 = vpop.f32.mrb[0].mxu0
      %v4090 = vadd.f32 0.0, %v4089
      %v4091 = vpop.f32.mrb[0].mxu0
      %v4092 = vpop.f32.mrb[0].mxu0
      %v4093 = vpop.f32.mrb[0].mxu0
      %4094 = vmatprep.mubr.bf16.mxu0 %v3732
      %4095 = vmatmul.mubr.bf16.gmra.mrb[0].mxu0 %v3652
      %v4096 = vpop.f32.mrb[0].mxu0
      %v4097 = vadd.f32 0.0, %v4096
      %v4098 = vpop.f32.mrb[0].mxu0
      %v4099 = vpop.f32.mrb[0].mxu0
      %v4100 = vadd.f32 0.0, %v4099
      %v4101 = vpop.f32.mrb[0].mxu0
      %4102 = vmatprep.mubr.bf16.mxu0 %v3740
      %4103 = vmatmul.mubr.bf16.gmra.mrb[0].mxu0 %v3653
      %v4104 = vpop.f32.mrb[0].mxu0
      %v4105 = vpop.f32.mrb[0].mxu0
      %v4106 = vpop.f32.mrb[0].mxu0
      %v4107 = vadd.f32 0.0, %v4106
      %v4108 = vpop.f32.mrb[0].mxu0
      %4109 = vmatprep.mubr.bf16.mxu0 %v3748
      %4110 = vmatmul.mubr.bf16.gmra.mrb[0].mxu0 %v3654
      %v4111 = vpop.f32.mrb[0].mxu0
      %v4112 = vadd.f32 0.0, %v4111
      %v4113 = vpop.f32.mrb[0].mxu0
      %v4114 = vpop.f32.mrb[0].mxu0
      %v4115 = vpop.f32.mrb[0].mxu0
      %4116 = vmatprep.mubr.bf16.mxu0 %v3756
      %4117 = vmatmul.mubr.bf16.gmra.mrb[0].mxu0 %v3655
      %v4118 = vpop.f32.mrb[0].mxu0
      %v4119 = vadd.f32 0.0, %v4118
      %v4120 = vpop.f32.mrb[0].mxu0
      %v4121 = vpop.f32.mrb[0].mxu0
      %v4122 = vadd.f32 0.0, %v4121
      %v4123 = vpop.f32.mrb[0].mxu0
      %4124 = vmatprep.mubr.bf16.mxu0 %v3764
      %4125 = vmatmul.mubr.bf16.gmra.mrb[0].mxu0 %v3656
      %v4126 = vpop.f32.mrb[0].mxu0
      %v4127 = vpop.f32.mrb[0].mxu0
      %v4128 = vpop.f32.mrb[0].mxu0
      %v4129 = vadd.f32 0.0, %v4128
      %v4130 = vpop.f32.mrb[0].mxu0
      %4131 = vmatprep.mubr.bf16.mxu0 %v3772
      %4132 = vmatmul.mubr.bf16.gmra.mrb[0].mxu0 %v3657
      %v4133 = vpop.f32.mrb[0].mxu0
      %v4134 = vadd.f32 0.0, %v4133
      %v4135 = vpop.f32.mrb[0].mxu0
      %v4136 = vpop.f32.mrb[0].mxu0
      %v4137 = vpop.f32.mrb[0].mxu0
      %4138 = vdwg.mxu0
      %4139 = vmatprep.subr.bf16.mxu0 0
      %4140 = vmatpush1.bf16.msra.mxu0 %v3986
      %4141 = vmatprep.subr.bf16.mxu0 0
      %4142 = vmatpush1.bf16.msra.mxu0 %v3987
      %4143 = vmatprep.subr.bf16.mxu0 0
      %4144 = vmatpush1.bf16.msra.mxu0 %v3988
      %4145 = vmatprep.subr.bf16.mxu0 0
      %4146 = vmatpush1.bf16.msra.mxu0 %v3989
      %4147 = vmatprep.subr.bf16.mxu0 0
      %4148 = vmatpush1.bf16.msra.mxu0 %v3990
      %4149 = vmatprep.subr.bf16.mxu0 0
      %4150 = vmatpush1.bf16.msra.mxu0 %v3991
      %4151 = vmatprep.subr.bf16.mxu0 0
      %4152 = vmatpush1.bf16.msra.mxu0 %v3992
      %4153 = vmatprep.subr.bf16.mxu0 0
      %4154 = vmatpush1.bf16.msra.mxu0 %v3993
      %4155 = vmatprep.subr.bf16.mxu0 0
      %4156 = vmatpush1.bf16.msra.mxu0 0
      %4157 = vmatprep.subr.bf16.mxu0 0
      %4158 = vmatpush1.bf16.msra.mxu0 0
      %4159 = vmatprep.subr.bf16.mxu0 0
      %4160 = vmatpush1.bf16.msra.mxu0 0
      %4161 = vmatprep.subr.bf16.mxu0 0
      %4162 = vmatpush1.bf16.msra.mxu0 0
      %4163 = vmatprep.subr.bf16.mxu0 0
      %4164 = vmatpush1.bf16.msra.mxu0 0
      %4165 = vmatprep.subr.bf16.mxu0 0
      %4166 = vmatpush1.bf16.msra.mxu0 0
      %4167 = vmatprep.subr.bf16.mxu0 0
      %4168 = vmatpush1.bf16.msra.mxu0 0
      %4169 = vmatprep.subr.bf16.mxu0 0
      %4170 = vmatpush1.bf16.msra.mxu0 0
      %4171 = vmatprep.mubr.bf16.mxu0 0
      %4172 = vmatmul.mubr.bf16.gmra.mrb[0].mxu0 %v3790
      %v4173 = vpop.f32.mrb[0].mxu0
      %v4174 = vadd.f32 %v4053, %v4173
      %v4175 = vpop.f32.mrb[0].mxu0
      %v4176 = vpop.f32.mrb[0].mxu0
      %v4177 = vadd.f32 %v4056, %v4176
      %v4178 = vpop.f32.mrb[0].mxu0
      %4179 = vmatprep.mubr.bf16.mxu0 0
      %4180 = vmatmul.mubr.bf16.gmra.mrb[0].mxu0 %v3792
      %v4181 = vpop.f32.mrb[0].mxu0
      %v4182 = vpop.f32.mrb[0].mxu0
      %v4183 = vpop.f32.mrb[0].mxu0
      %v4184 = vadd.f32 %v4063, %v4183
      %v4185 = vpop.f32.mrb[0].mxu0
      %4186 = vmatprep.mubr.bf16.mxu0 0
      %4187 = vmatmul.mubr.bf16.gmra.mrb[0].mxu0 %v3794
      %v4188 = vpop.f32.mrb[0].mxu0
      %v4189 = vadd.f32 %v4068, %v4188
      %v4190 = vpop.f32.mrb[0].mxu0
      %v4191 = vpop.f32.mrb[0].mxu0
      %v4192 = vpop.f32.mrb[0].mxu0
      %4193 = vmatprep.mubr.bf16.mxu0 0
      %4194 = vmatmul.mubr.bf16.gmra.mrb[0].mxu0 %v3796
      %v4195 = vpop.f32.mrb[0].mxu0
      %v4196 = vadd.f32 %v4075, %v4195
      %v4197 = vpop.f32.mrb[0].mxu0
      %v4198 = vpop.f32.mrb[0].mxu0
      %v4199 = vadd.f32 %v4078, %v4198
      %v4200 = vpop.f32.mrb[0].mxu0
      %4201 = vmatprep.mubr.bf16.mxu0 0
      %4202 = vmatmul.mubr.bf16.gmra.mrb[0].mxu0 %v3798
      %v4203 = vpop.f32.mrb[0].mxu0
      %v4204 = vpop.f32.mrb[0].mxu0
      %v4205 = vpop.f32.mrb[0].mxu0
      %v4206 = vadd.f32 %v4085, %v4205
      %v4207 = vpop.f32.mrb[0].mxu0
      %4208 = vmatprep.mubr.bf16.mxu0 0
      %4209 = vmatmul.mubr.bf16.gmra.mrb[0].mxu0 %v3800
      %v4210 = vpop.f32.mrb[0].mxu0
      %v4211 = vadd.f32 %v4090, %v4210
      %v4212 = vpop.f32.mrb[0].mxu0
      %v4213 = vpop.f32.mrb[0].mxu0
      %v4214 = vpop.f32.mrb[0].mxu0
      %4215 = vmatprep.mubr.bf16.mxu0 0
      %4216 = vmatmul.mubr.bf16.gmra.mrb[0].mxu0 %v3802
      %v4217 = vpop.f32.mrb[0].mxu0
      %v4218 = vadd.f32 %v4097, %v4217
      %v4219 = vpop.f32.mrb[0].mxu0
      %v4220 = vpop.f32.mrb[0].mxu0
      %v4221 = vadd.f32 %v4100, %v4220
      %v4222 = vpop.f32.mrb[0].mxu0
      %4223 = vmatprep.mubr.bf16.mxu0 0
      %4224 = vmatmul.mubr.bf16.gmra.mrb[0].mxu0 %v3804
      %v4225 = vpop.f32.mrb[0].mxu0
      %v4226 = vpop.f32.mrb[0].mxu0
      %v4227 = vpop.f32.mrb[0].mxu0
      %v4228 = vadd.f32 %v4107, %v4227
      %v4229 = vpop.f32.mrb[0].mxu0
      %4230 = vmatprep.mubr.bf16.mxu0 0
      %4231 = vmatmul.mubr.bf16.gmra.mrb[0].mxu0 %v3806
      %v4232 = vpop.f32.mrb[0].mxu0
      %v4233 = vadd.f32 %v4112, %v4232
      %v4234 = vpop.f32.mrb[0].mxu0
      %v4235 = vpop.f32.mrb[0].mxu0
      %v4236 = vpop.f32.mrb[0].mxu0
      %4237 = vmatprep.mubr.bf16.mxu0 0
      %4238 = vmatmul.mubr.bf16.gmra.mrb[0].mxu0 %v3808
      %v4239 = vpop.f32.mrb[0].mxu0
      %v4240 = vadd.f32 %v4119, %v4239
      %v4241 = vpop.f32.mrb[0].mxu0
      %v4242 = vpop.f32.mrb[0].mxu0
      %v4243 = vadd.f32 %v4122, %v4242
      %v4244 = vpop.f32.mrb[0].mxu0
      %4245 = vmatprep.mubr.bf16.mxu0 0
      %4246 = vmatmul.mubr.bf16.gmra.mrb[0].mxu0 %v3810
      %v4247 = vpop.f32.mrb[0].mxu0
      %v4248 = vpop.f32.mrb[0].mxu0
      %v4249 = vpop.f32.mrb[0].mxu0
      %v4250 = vadd.f32 %v4129, %v4249
      %v4251 = vpop.f32.mrb[0].mxu0
      %4252 = vmatprep.mubr.bf16.mxu0 0
      %4253 = vmatmul.mubr.bf16.gmra.mrb[0].mxu0 %v3812
      %v4254 = vpop.f32.mrb[0].mxu0
      %v4255 = vadd.f32 %v4134, %v4254
      %v4256 = vpop.f32.mrb[0].mxu0
      %v4257 = vpop.f32.mrb[0].mxu0
      %v4258 = vpop.f32.mrb[0].mxu0
      %4259 = vdwg.mxu0
      %v4308 = vunpack.c.l.b16 %v3587
      %v4309 = vunpack.c.l.b16 %v3588
      %v4310 = vunpack.c.l.b16 %v3589
      %v4311 = vunpack.c.l.b16 %v3590
      %v4312 = vunpack.c.l.b16 %v3591
      %v4313 = vunpack.c.l.b16 %v3592
      %v4314 = vunpack.c.l.b16 %v3593
      %v4315 = vunpack.c.l.b16 %v3594
      %v4316 = vunpack.c.l.b16 %v3595
      %v4317 = vunpack.c.l.b16 %v3596
      %v4318 = vunpack.c.l.b16 %v3597
      %v4319 = vunpack.c.l.b16 %v3598
      %v4320 = vunpack.c.l.b16 %v3599
      %v4321 = vunpack.c.l.b16 %v3600
      %v4322 = vunpack.c.l.b16 %v3601
      %v4323 = vunpack.c.l.b16 %v3602
      %v4324 = vunpack.c.l.b16 %v3603
      %v4325 = vunpack.c.l.b16 %v3604
      %v4326 = vunpack.c.l.b16 %v3605
      %v4327 = vunpack.c.l.b16 %v3606
      %v4328 = vunpack.c.l.b16 %v3607
      %v4329 = vunpack.c.l.b16 %v3608
      %v4330 = vunpack.c.l.b16 %v3609
      %v4331 = vunpack.c.l.b16 %v3610
      %v4332 = vunpack.c.l.b16 %v3611
      %v4333 = vunpack.c.l.b16 %v3612
      %v4334 = vunpack.c.l.b16 %v3613
      %v4335 = vunpack.c.l.b16 %v3614
      %v4336 = vunpack.c.l.b16 %v3615
      %v4337 = vunpack.c.l.b16 %v3616
      %v4338 = vunpack.c.l.b16 %v3617
      %v4339 = vunpack.c.l.b16 %v3618
      %v4340 = vunpack.c.l.b16 %v3619
      %v4341 = vunpack.c.l.b16 %v3620
      %v4342 = vunpack.c.l.b16 %v3621
      %v4343 = vunpack.c.l.b16 %v3622
      %v4344 = vunpack.c.l.b16 %v3623
      %v4345 = vunpack.c.l.b16 %v3624
      %v4346 = vunpack.c.l.b16 %v3625
      %v4347 = vunpack.c.l.b16 %v3626
      %v4348 = vunpack.c.l.b16 %v3627
      %v4349 = vunpack.c.l.b16 %v3628
      %v4350 = vunpack.c.l.b16 %v3629
      %v4351 = vunpack.c.l.b16 %v3630
      %v4352 = vunpack.c.l.b16 %v3631
      %v4353 = vunpack.c.l.b16 %v3632
      %v4354 = vunpack.c.l.b16 %v3633
      %v4355 = vunpack.c.l.b16 %v3634
      %v4356 = vpack.c.b16 %v4309, %v4308
      %v4357 = vpack.c.b16 %v4311, %v4310
      %v4358 = vpack.c.b16 %v4313, %v4312
      %v4359 = vpack.c.b16 %v4315, %v4314
      %v4360 = vpack.c.b16 %v4317, %v4316
      %v4361 = vpack.c.b16 %v4319, %v4318
      %v4362 = vpack.c.b16 %v4321, %v4320
      %v4363 = vpack.c.b16 %v4323, %v4322
      %v4364 = vpack.c.b16 %v4325, %v4324
      %v4365 = vpack.c.b16 %v4327, %v4326
      %v4366 = vpack.c.b16 %v4329, %v4328
      %v4367 = vpack.c.b16 %v4331, %v4330
      %v4368 = vpack.c.b16 %v4333, %v4332
      %v4369 = vpack.c.b16 %v4335, %v4334
      %v4370 = vpack.c.b16 %v4337, %v4336
      %v4371 = vpack.c.b16 %v4339, %v4338
      %v4372 = vpack.c.b16 %v4341, %v4340
      %v4373 = vpack.c.b16 %v4343, %v4342
      %v4374 = vpack.c.b16 %v4345, %v4344
      %v4375 = vpack.c.b16 %v4347, %v4346
      %v4376 = vpack.c.b16 %v4349, %v4348
      %v4377 = vpack.c.b16 %v4351, %v4350
      %v4378 = vpack.c.b16 %v4353, %v4352
      %v4379 = vpack.c.b16 %v4355, %v4354
      %4404 = vmatprep.subr.bf16.mxu0 0
      %4405 = vmatpush1.bf16.msra.mxu0 %v4356
      %4406 = vmatprep.subr.bf16.mxu0 0
      %4407 = vmatpush1.bf16.msra.mxu0 %v4357
      %4408 = vmatprep.subr.bf16.mxu0 0
      %4409 = vmatpush1.bf16.msra.mxu0 %v4358
      %4410 = vmatprep.subr.bf16.mxu0 0
      %4411 = vmatpush1.bf16.msra.mxu0 %v4359
      %4412 = vmatprep.subr.bf16.mxu0 0
      %4413 = vmatpush1.bf16.msra.mxu0 %v4360
      %4414 = vmatprep.subr.bf16.mxu0 0
      %4415 = vmatpush1.bf16.msra.mxu0 %v4361
      %4416 = vmatprep.subr.bf16.mxu0 0
      %4417 = vmatpush1.bf16.msra.mxu0 %v4362
      %4418 = vmatprep.subr.bf16.mxu0 0
      %4419 = vmatpush1.bf16.msra.mxu0 %v4363
      %4420 = vmatprep.subr.bf16.mxu0 0
      %4421 = vmatpush1.bf16.msra.mxu0 %v4364
      %4422 = vmatprep.subr.bf16.mxu0 0
      %4423 = vmatpush1.bf16.msra.mxu0 %v4365
      %4424 = vmatprep.subr.bf16.mxu0 0
      %4425 = vmatpush1.bf16.msra.mxu0 %v4366
      %4426 = vmatprep.subr.bf16.mxu0 0
      %4427 = vmatpush1.bf16.msra.mxu0 %v4367
      %4428 = vmatprep.subr.bf16.mxu0 0
      %4429 = vmatpush1.bf16.msra.mxu0 %v4368
      %4430 = vmatprep.subr.bf16.mxu0 0
      %4431 = vmatpush1.bf16.msra.mxu0 %v4369
      %4432 = vmatprep.subr.bf16.mxu0 0
      %4433 = vmatpush1.bf16.msra.mxu0 %v4370
      %4434 = vmatprep.subr.bf16.mxu0 0
      %4435 = vmatpush1.bf16.msra.mxu0 %v4371
      %4436 = vmatprep.mubr.bf16.mxu0 %v3446
      %4437 = vmatmul.mubr.bf16.gmra.mrb[0].mxu0 %v3408
      %v4438 = vpop.f32.mrb[0].mxu0
      %v4439 = vadd.f32 %v4174, %v4438
      %v4440 = vpop.f32.mrb[0].mxu0
      %v4441 = vpop.f32.mrb[0].mxu0
      %v4442 = vadd.f32 %v4177, %v4441
      %v4443 = vpop.f32.mrb[0].mxu0
      %4444 = vmatprep.mubr.bf16.mxu0 %v3454
      %4445 = vmatmul.mubr.bf16.gmra.mrb[0].mxu0 %v3409
      %v4446 = vpop.f32.mrb[0].mxu0
      %v4447 = vpop.f32.mrb[0].mxu0
      %v4448 = vpop.f32.mrb[0].mxu0
      %v4449 = vadd.f32 %v4184, %v4448
      %v4450 = vpop.f32.mrb[0].mxu0
      %4451 = vmatprep.mubr.bf16.mxu0 %v3462
      %4452 = vmatmul.mubr.bf16.gmra.mrb[0].mxu0 %v3410
      %v4453 = vpop.f32.mrb[0].mxu0
      %v4454 = vadd.f32 %v4189, %v4453
      %v4455 = vpop.f32.mrb[0].mxu0
      %v4456 = vpop.f32.mrb[0].mxu0
      %v4457 = vpop.f32.mrb[0].mxu0
      %4458 = vmatprep.mubr.bf16.mxu0 %v3470
      %4459 = vmatmul.mubr.bf16.gmra.mrb[0].mxu0 %v3411
      %v4460 = vpop.f32.mrb[0].mxu0
      %v4461 = vadd.f32 %v4196, %v4460
      %v4462 = vpop.f32.mrb[0].mxu0
      %v4463 = vpop.f32.mrb[0].mxu0
      %v4464 = vadd.f32 %v4199, %v4463
      %v4465 = vpop.f32.mrb[0].mxu0
      %4466 = vmatprep.mubr.bf16.mxu0 %v3478
      %4467 = vmatmul.mubr.bf16.gmra.mrb[0].mxu0 %v3412
      %v4468 = vpop.f32.mrb[0].mxu0
      %v4469 = vpop.f32.mrb[0].mxu0
      %v4470 = vpop.f32.mrb[0].mxu0
      %v4471 = vadd.f32 %v4206, %v4470
      %v4472 = vpop.f32.mrb[0].mxu0
      %4473 = vmatprep.mubr.bf16.mxu0 %v3486
      %4474 = vmatmul.mubr.bf16.gmra.mrb[0].mxu0 %v3413
      %v4475 = vpop.f32.mrb[0].mxu0
      %v4476 = vadd.f32 %v4211, %v4475
      %v4477 = vpop.f32.mrb[0].mxu0
      %v4478 = vpop.f32.mrb[0].mxu0
      %v4479 = vpop.f32.mrb[0].mxu0
      %4480 = vmatprep.mubr.bf16.mxu0 %v3494
      %4481 = vmatmul.mubr.bf16.gmra.mrb[0].mxu0 %v3414
      %v4482 = vpop.f32.mrb[0].mxu0
      %v4483 = vadd.f32 %v4218, %v4482
      %v4484 = vpop.f32.mrb[0].mxu0
      %v4485 = vpop.f32.mrb[0].mxu0
      %v4486 = vadd.f32 %v4221, %v4485
      %v4487 = vpop.f32.mrb[0].mxu0
      %4488 = vmatprep.mubr.bf16.mxu0 %v3502
      %4489 = vmatmul.mubr.bf16.gmra.mrb[0].mxu0 %v3415
      %v4490 = vpop.f32.mrb[0].mxu0
      %v4491 = vpop.f32.mrb[0].mxu0
      %v4492 = vpop.f32.mrb[0].mxu0
      %v4493 = vadd.f32 %v4228, %v4492
      %v4494 = vpop.f32.mrb[0].mxu0
      %4495 = vmatprep.mubr.bf16.mxu0 %v3510
      %4496 = vmatmul.mubr.bf16.gmra.mrb[0].mxu0 %v3416
      %v4497 = vpop.f32.mrb[0].mxu0
      %v4498 = vadd.f32 %v4233, %v4497
      %v4499 = vpop.f32.mrb[0].mxu0
      %v4500 = vpop.f32.mrb[0].mxu0
      %v4501 = vpop.f32.mrb[0].mxu0
      %4502 = vmatprep.mubr.bf16.mxu0 %v3518
      %4503 = vmatmul.mubr.bf16.gmra.mrb[0].mxu0 %v3417
      %v4504 = vpop.f32.mrb[0].mxu0
      %v4505 = vadd.f32 %v4240, %v4504
      %v4506 = vpop.f32.mrb[0].mxu0
      %v4507 = vpop.f32.mrb[0].mxu0
      %v4508 = vadd.f32 %v4243, %v4507
      %v4509 = vpop.f32.mrb[0].mxu0
      %4510 = vmatprep.mubr.bf16.mxu0 %v3526
      %4511 = vmatmul.mubr.bf16.gmra.mrb[0].mxu0 %v3418
      %v4512 = vpop.f32.mrb[0].mxu0
      %v4513 = vpop.f32.mrb[0].mxu0
      %v4514 = vpop.f32.mrb[0].mxu0
      %v4515 = vadd.f32 %v4250, %v4514
      %v4516 = vpop.f32.mrb[0].mxu0
      %4517 = vmatprep.mubr.bf16.mxu0 %v3534
      %4518 = vmatmul.mubr.bf16.gmra.mrb[0].mxu0 %v3419
      %v4519 = vpop.f32.mrb[0].mxu0
      %v4520 = vadd.f32 %v4255, %v4519
      %v4521 = vpop.f32.mrb[0].mxu0
      %v4522 = vpop.f32.mrb[0].mxu0
      %v4523 = vpop.f32.mrb[0].mxu0
      %4524 = vdwg.mxu0
      %4525 = vmatprep.subr.bf16.mxu0 0
      %4526 = vmatpush1.bf16.msra.mxu0 %v4372
      %4527 = vmatprep.subr.bf16.mxu0 0
      %4528 = vmatpush1.bf16.msra.mxu0 %v4373
      %4529 = vmatprep.subr.bf16.mxu0 0
      %4530 = vmatpush1.bf16.msra.mxu0 %v4374
      %4531 = vmatprep.subr.bf16.mxu0 0
      %4532 = vmatpush1.bf16.msra.mxu0 %v4375
      %4533 = vmatprep.subr.bf16.mxu0 0
      %4534 = vmatpush1.bf16.msra.mxu0 %v4376
      %4535 = vmatprep.subr.bf16.mxu0 0
      %4536 = vmatpush1.bf16.msra.mxu0 %v4377
      %4537 = vmatprep.subr.bf16.mxu0 0
      %4538 = vmatpush1.bf16.msra.mxu0 %v4378
      %4539 = vmatprep.subr.bf16.mxu0 0
      %4540 = vmatpush1.bf16.msra.mxu0 %v4379
      %4541 = vmatprep.subr.bf16.mxu0 0
      %4542 = vmatpush1.bf16.msra.mxu0 0
      %4543 = vmatprep.subr.bf16.mxu0 0
      %4544 = vmatpush1.bf16.msra.mxu0 0
      %4545 = vmatprep.subr.bf16.mxu0 0
      %4546 = vmatpush1.bf16.msra.mxu0 0
      %4547 = vmatprep.subr.bf16.mxu0 0
      %4548 = vmatpush1.bf16.msra.mxu0 0
      %4549 = vmatprep.subr.bf16.mxu0 0
      %4550 = vmatpush1.bf16.msra.mxu0 0
      %4551 = vmatprep.subr.bf16.mxu0 0
      %4552 = vmatpush1.bf16.msra.mxu0 0
      %4553 = vmatprep.subr.bf16.mxu0 0
      %4554 = vmatpush1.bf16.msra.mxu0 0
      %4555 = vmatprep.subr.bf16.mxu0 0
      %4556 = vmatpush1.bf16.msra.mxu0 0
      %4557 = vmatprep.mubr.bf16.mxu0 0
      %4558 = vmatmul.mubr.bf16.gmra.mrb[0].mxu0 %v3552
      %v4559 = vpop.f32.mrb[0].mxu0
      %v4560 = vadd.f32 %v4439, %v4559
      %v4561 = vpop.f32.mrb[0].mxu0
      %v4562 = vpop.f32.mrb[0].mxu0
      %v4563 = vadd.f32 %v4442, %v4562
      %v4564 = vpop.f32.mrb[0].mxu0
      %4565 = vmatprep.mubr.bf16.mxu0 0
      %4566 = vmatmul.mubr.bf16.gmra.mrb[0].mxu0 %v3554
      %v4567 = vpop.f32.mrb[0].mxu0
      %v4568 = vpop.f32.mrb[0].mxu0
      %v4569 = vpop.f32.mrb[0].mxu0
      %v4570 = vadd.f32 %v4449, %v4569
      %v4571 = vpop.f32.mrb[0].mxu0
      %4572 = vmatprep.mubr.bf16.mxu0 0
      %4573 = vmatmul.mubr.bf16.gmra.mrb[0].mxu0 %v3556
      %v4574 = vpop.f32.mrb[0].mxu0
      %v4575 = vadd.f32 %v4454, %v4574
      %v4576 = vpop.f32.mrb[0].mxu0
      %v4577 = vpop.f32.mrb[0].mxu0
      %v4578 = vpop.f32.mrb[0].mxu0
      %4579 = vmatprep.mubr.bf16.mxu0 0
      %4580 = vmatmul.mubr.bf16.gmra.mrb[0].mxu0 %v3558
      %v4581 = vpop.f32.mrb[0].mxu0
      %v4582 = vadd.f32 %v4461, %v4581
      %v4583 = vpop.f32.mrb[0].mxu0
      %v4584 = vpop.f32.mrb[0].mxu0
      %v4585 = vadd.f32 %v4464, %v4584
      %v4586 = vpop.f32.mrb[0].mxu0
      %4587 = vmatprep.mubr.bf16.mxu0 0
      %4588 = vmatmul.mubr.bf16.gmra.mrb[0].mxu0 %v3560
      %v4589 = vpop.f32.mrb[0].mxu0
      %v4590 = vpop.f32.mrb[0].mxu0
      %v4591 = vpop.f32.mrb[0].mxu0
      %v4592 = vadd.f32 %v4471, %v4591
      %v4593 = vpop.f32.mrb[0].mxu0
      %4594 = vmatprep.mubr.bf16.mxu0 0
      %4595 = vmatmul.mubr.bf16.gmra.mrb[0].mxu0 %v3562
      %v4596 = vpop.f32.mrb[0].mxu0
      %v4597 = vadd.f32 %v4476, %v4596
      %v4598 = vpop.f32.mrb[0].mxu0
      %v4599 = vpop.f32.mrb[0].mxu0
      %v4600 = vpop.f32.mrb[0].mxu0
      %4601 = vmatprep.mubr.bf16.mxu0 0
      %4602 = vmatmul.mubr.bf16.gmra.mrb[0].mxu0 %v3564
      %v4603 = vpop.f32.mrb[0].mxu0
      %v4604 = vadd.f32 %v4483, %v4603
      %v4605 = vpop.f32.mrb[0].mxu0
      %v4606 = vpop.f32.mrb[0].mxu0
      %v4607 = vadd.f32 %v4486, %v4606
      %v4608 = vpop.f32.mrb[0].mxu0
      %4609 = vmatprep.mubr.bf16.mxu0 0
      %4610 = vmatmul.mubr.bf16.gmra.mrb[0].mxu0 %v3566
      %v4611 = vpop.f32.mrb[0].mxu0
      %v4612 = vpop.f32.mrb[0].mxu0
      %v4613 = vpop.f32.mrb[0].mxu0
      %v4614 = vadd.f32 %v4493, %v4613
      %v4615 = vpop.f32.mrb[0].mxu0
      %4616 = vmatprep.mubr.bf16.mxu0 0
      %4617 = vmatmul.mubr.bf16.gmra.mrb[0].mxu0 %v3568
      %v4618 = vpop.f32.mrb[0].mxu0
      %v4619 = vadd.f32 %v4498, %v4618
      %v4620 = vpop.f32.mrb[0].mxu0
      %v4621 = vpop.f32.mrb[0].mxu0
      %v4622 = vpop.f32.mrb[0].mxu0
      %4623 = vmatprep.mubr.bf16.mxu0 0
      %4624 = vmatmul.mubr.bf16.gmra.mrb[0].mxu0 %v3570
      %v4625 = vpop.f32.mrb[0].mxu0
      %v4626 = vadd.f32 %v4505, %v4625
      %v4627 = vpop.f32.mrb[0].mxu0
      %v4628 = vpop.f32.mrb[0].mxu0
      %v4629 = vadd.f32 %v4508, %v4628
      %v4630 = vpop.f32.mrb[0].mxu0
      %4631 = vmatprep.mubr.bf16.mxu0 0
      %4632 = vmatmul.mubr.bf16.gmra.mrb[0].mxu0 %v3572
      %v4633 = vpop.f32.mrb[0].mxu0
      %v4634 = vpop.f32.mrb[0].mxu0
      %v4635 = vpop.f32.mrb[0].mxu0
      %v4636 = vadd.f32 %v4515, %v4635
      %v4637 = vpop.f32.mrb[0].mxu0
      %4638 = vmatprep.mubr.bf16.mxu0 0
      %4639 = vmatmul.mubr.bf16.gmra.mrb[0].mxu0 %v3574
      %v4640 = vpop.f32.mrb[0].mxu0
      %v4641 = vadd.f32 %v4520, %v4640
      %v4642 = vpop.f32.mrb[0].mxu0
      %v4643 = vpop.f32.mrb[0].mxu0
      %v4644 = vpop.f32.mrb[0].mxu0
      %4645 = vdwg.mxu0
      %v4646 = vld [vmem:[#allocation3 + $0x18] sm:$0xf]
      %v4647 = vld [vmem:[#allocation3 + $0x1c] sm:$0xf]
      %v4648 = vld [vmem:[#allocation3 + $0x20] sm:$0xf]
      %v4649 = vld [vmem:[#allocation3 + $0x24] sm:$0xf]
      %v4650 = vld [vmem:[#allocation3 + $0x28] sm:$0xf]
      %v4651 = vld [vmem:[#allocation3 + $0x2c] sm:$0xf]
      %v4652 = vld [vmem:[#allocation3 + $0x30] sm:$0xf]
      %v4653 = vld [vmem:[#allocation3 + $0x34] sm:$0xf]
      %v4654 = vld [vmem:[#allocation3 + $0x38] sm:$0xf]
      %v4655 = vld [vmem:[#allocation3 + $0x3c] sm:$0xf]
      %v4656 = vld [vmem:[#allocation3 + $0x40] sm:$0xf]
      %v4657 = vld [vmem:[#allocation3 + $0x44] sm:$0xf]
      %v4658 = vld [vmem:[#allocation3 + $0x48] sm:$0xf]
      %v4659 = vld [vmem:[#allocation3 + $0x4c] sm:$0xf]
      %v4660 = vld [vmem:[#allocation3 + $0x50] sm:$0xf]
      %v4661 = vld [vmem:[#allocation3 + $0x54] sm:$0xf]
      %v4662 = vld [vmem:[#allocation3 + $0x58] sm:$0xf]
      %v4663 = vld [vmem:[#allocation3 + $0x5c] sm:$0xf]
      %v4664 = vld [vmem:[#allocation3 + $0x60] sm:$0xf]
      %v4665 = vld [vmem:[#allocation3 + $0x64] sm:$0xf]
      %v4666 = vld [vmem:[#allocation3 + $0x68] sm:$0xf]
      %v4667 = vld [vmem:[#allocation3 + $0x6c] sm:$0xf]
      %v4668 = vld [vmem:[#allocation3 + $0x70] sm:$0xf]
      %v4669 = vld [vmem:[#allocation3 + $0x74] sm:$0xf]
      %v4670 = vld [vmem:[#allocation3 + $0x18] sm:$0xf]
      %v4671 = vld [vmem:[#allocation3 + $0x1c] sm:$0xf]
      %v4672 = vld [vmem:[#allocation3 + $0x20] sm:$0xf]
      %v4673 = vld [vmem:[#allocation3 + $0x24] sm:$0xf]
      %v4674 = vld [vmem:[#allocation3 + $0x28] sm:$0xf]
      %v4675 = vld [vmem:[#allocation3 + $0x2c] sm:$0xf]
      %v4676 = vld [vmem:[#allocation3 + $0x30] sm:$0xf]
      %v4677 = vld [vmem:[#allocation3 + $0x34] sm:$0xf]
      %v4678 = vld [vmem:[#allocation3 + $0x38] sm:$0xf]
      %v4679 = vld [vmem:[#allocation3 + $0x3c] sm:$0xf]
      %v4680 = vld [vmem:[#allocation3 + $0x40] sm:$0xf]
      %v4681 = vld [vmem:[#allocation3 + $0x44] sm:$0xf]
      %v4682 = vld [vmem:[#allocation3 + $0x48] sm:$0xf]
      %v4683 = vld [vmem:[#allocation3 + $0x4c] sm:$0xf]
      %v4684 = vld [vmem:[#allocation3 + $0x50] sm:$0xf]
      %v4685 = vld [vmem:[#allocation3 + $0x54] sm:$0xf]
      %v4686 = vld [vmem:[#allocation3 + $0x58] sm:$0xf]
      %v4687 = vld [vmem:[#allocation3 + $0x5c] sm:$0xf]
      %v4688 = vld [vmem:[#allocation3 + $0x60] sm:$0xf]
      %v4689 = vld [vmem:[#allocation3 + $0x64] sm:$0xf]
      %v4690 = vld [vmem:[#allocation3 + $0x68] sm:$0xf]
      %v4691 = vld [vmem:[#allocation3 + $0x6c] sm:$0xf]
      %v4692 = vld [vmem:[#allocation3 + $0x70] sm:$0xf]
      %v4693 = vld [vmem:[#allocation3 + $0x74] sm:$0xf]
      %v4694 = vld [vmem:[#allocation3 + $0x78] sm:$0x1]
      %v4695 = vld [vmem:[#allocation3 + $0x18] sm:$0xe]
      %v4720 = vunpack.c.l.b16 %v4646
      %v4721 = vunpack.c.l.b16 %v4647
      %v4722 = vunpack.c.l.b16 %v4648
      %v4723 = vunpack.c.l.b16 %v4649
      %v4724 = vunpack.c.l.b16 %v4650
      %v4725 = vunpack.c.l.b16 %v4651
      %v4726 = vunpack.c.l.b16 %v4652
      %v4727 = vunpack.c.l.b16 %v4653
      %v4728 = vunpack.c.l.b16 %v4654
      %v4729 = vunpack.c.l.b16 %v4655
      %v4730 = vunpack.c.l.b16 %v4656
      %v4731 = vunpack.c.l.b16 %v4657
      %v4732 = vunpack.c.l.b16 %v4658
      %v4733 = vunpack.c.l.b16 %v4659
      %v4734 = vunpack.c.l.b16 %v4660
      %v4735 = vunpack.c.l.b16 %v4661
      %v4736 = vunpack.c.l.b16 %v4662
      %v4737 = vunpack.c.l.b16 %v4663
      %v4738 = vunpack.c.l.b16 %v4664
      %v4739 = vunpack.c.l.b16 %v4665
      %v4740 = vunpack.c.l.b16 %v4666
      %v4741 = vunpack.c.l.b16 %v4667
      %v4742 = vunpack.c.l.b16 %v4668
      %v4743 = vunpack.c.l.b16 %v4669
      %v4744 = vpack.c.b16 %v4721, %v4720
      %v4745 = vpack.c.b16 %v4723, %v4722
      %v4746 = vpack.c.b16 %v4725, %v4724
      %v4747 = vpack.c.b16 %v4727, %v4726
      %v4748 = vpack.c.b16 %v4729, %v4728
      %v4749 = vpack.c.b16 %v4731, %v4730
      %v4750 = vpack.c.b16 %v4733, %v4732
      %v4751 = vpack.c.b16 %v4735, %v4734
      %v4752 = vpack.c.b16 %v4737, %v4736
      %v4753 = vpack.c.b16 %v4739, %v4738
      %v4754 = vpack.c.b16 %v4741, %v4740
      %v4755 = vpack.c.b16 %v4743, %v4742
      %v4793 = vunpack.c.l.b16 %v4670
      %v4794 = vunpack.c.l.b16 %v4671
      %v4795 = vunpack.c.l.b16 %v4672
      %v4796 = vunpack.c.l.b16 %v4673
      %v4797 = vunpack.c.l.b16 %v4674
      %v4798 = vunpack.c.l.b16 %v4675
      %v4799 = vunpack.c.l.b16 %v4676
      %v4800 = vunpack.c.l.b16 %v4677
      %v4801 = vunpack.c.l.b16 %v4678
      %v4802 = vunpack.c.l.b16 %v4679
      %v4803 = vunpack.c.l.b16 %v4680
      %v4804 = vunpack.c.l.b16 %v4681
      %v4805 = vunpack.c.l.b16 %v4682
      %v4806 = vunpack.c.l.b16 %v4683
      %v4807 = vunpack.c.l.b16 %v4684
      %v4808 = vunpack.c.l.b16 %v4685
      %v4809 = vunpack.c.l.b16 %v4686
      %v4810 = vunpack.c.l.b16 %v4687
      %v4811 = vunpack.c.l.b16 %v4688
      %v4812 = vunpack.c.l.b16 %v4689
      %v4813 = vunpack.c.l.b16 %v4690
      %v4814 = vunpack.c.l.b16 %v4691
      %v4815 = vunpack.c.l.b16 %v4692
      %v4816 = vunpack.c.l.b16 %v4693
      %v4817 = vunpack.c.l.b16 %v4694
      %v4818 = vpack.c.b16 %v4794, %v4793
      %v4819 = vpack.c.b16 %v4796, %v4795
      %v4820 = vpack.c.b16 %v4798, %v4797
      %v4821 = vpack.c.b16 %v4800, %v4799
      %v4822 = vpack.c.b16 %v4802, %v4801
      %v4823 = vpack.c.b16 %v4804, %v4803
      %v4824 = vpack.c.b16 %v4806, %v4805
      %v4825 = vpack.c.b16 %v4808, %v4807
      %v4826 = vpack.c.b16 %v4810, %v4809
      %v4827 = vpack.c.b16 %v4812, %v4811
      %v4828 = vpack.c.b16 %v4814, %v4813
      %v4829 = vpack.c.b16 %v4816, %v4815
      %v4830 = vpack.c.b16 %v4817, %v4817
      %v4832 = vshrl.u32 %v4818, 16
      %v4834 = vshll.u32 %v4818, 16
      %v4836 = vrot.slane %v4834, 1
      %v4837 = vor.u32 %v4832, %v4836
      %v4839 = vshll.u32 %v4819, 16
      %v4841 = vrot.slane %v4839, 1
      %v4842 = vsel %vm497, %v4837, %v4841
      %v4843 = vshrl.u32 %v4819, 16
      %v4845 = vor.u32 %v4843, %v4841
      %v4847 = vshll.u32 %v4820, 16
      %v4849 = vrot.slane %v4847, 1
      %v4850 = vsel %vm497, %v4845, %v4849
      %v4851 = vshrl.u32 %v4820, 16
      %v4853 = vor.u32 %v4851, %v4849
      %v4855 = vshll.u32 %v4821, 16
      %v4857 = vrot.slane %v4855, 1
      %v4858 = vsel %vm497, %v4853, %v4857
      %v4859 = vshrl.u32 %v4821, 16
      %v4861 = vor.u32 %v4859, %v4857
      %v4863 = vshll.u32 %v4822, 16
      %v4865 = vrot.slane %v4863, 1
      %v4866 = vsel %vm497, %v4861, %v4865
      %v4867 = vshrl.u32 %v4822, 16
      %v4869 = vor.u32 %v4867, %v4865
      %v4871 = vshll.u32 %v4823, 16
      %v4873 = vrot.slane %v4871, 1
      %v4874 = vsel %vm497, %v4869, %v4873
      %v4875 = vshrl.u32 %v4823, 16
      %v4877 = vor.u32 %v4875, %v4873
      %v4879 = vshll.u32 %v4824, 16
      %v4881 = vrot.slane %v4879, 1
      %v4882 = vsel %vm497, %v4877, %v4881
      %v4883 = vshrl.u32 %v4824, 16
      %v4885 = vor.u32 %v4883, %v4881
      %v4887 = vshll.u32 %v4825, 16
      %v4889 = vrot.slane %v4887, 1
      %v4890 = vsel %vm497, %v4885, %v4889
      %v4891 = vshrl.u32 %v4825, 16
      %v4893 = vor.u32 %v4891, %v4889
      %v4895 = vshll.u32 %v4826, 16
      %v4897 = vrot.slane %v4895, 1
      %v4898 = vsel %vm497, %v4893, %v4897
      %v4899 = vshrl.u32 %v4826, 16
      %v4901 = vor.u32 %v4899, %v4897
      %v4903 = vshll.u32 %v4827, 16
      %v4905 = vrot.slane %v4903, 1
      %v4906 = vsel %vm497, %v4901, %v4905
      %v4907 = vshrl.u32 %v4827, 16
      %v4909 = vor.u32 %v4907, %v4905
      %v4911 = vshll.u32 %v4828, 16
      %v4913 = vrot.slane %v4911, 1
      %v4914 = vsel %vm497, %v4909, %v4913
      %v4915 = vshrl.u32 %v4828, 16
      %v4917 = vor.u32 %v4915, %v4913
      %v4919 = vshll.u32 %v4829, 16
      %v4921 = vrot.slane %v4919, 1
      %v4922 = vsel %vm497, %v4917, %v4921
      %v4923 = vshrl.u32 %v4829, 16
      %v4925 = vor.u32 %v4923, %v4921
      %v4927 = vshll.u32 %v4830, 16
      %v4929 = vrot.slane %v4927, 1
      %v4930 = vsel %vm497, %v4925, %v4929
      %v4944 = vunpack.c.l.b16 %v4695
      %v4945 = vpack.c.b16 %v4794, %v4944
      %v4946 = vrot.slane %v4945, 1
      %v4947 = vrot.slane %v4819, 1
      %v4948 = vsel %vm640, %v4946, %v4947
      %v4949 = vrot.slane %v4820, 1
      %v4950 = vsel %vm640, %v4947, %v4949
      %v4951 = vrot.slane %v4821, 1
      %v4952 = vsel %vm640, %v4949, %v4951
      %v4953 = vrot.slane %v4822, 1
      %v4954 = vsel %vm640, %v4951, %v4953
      %v4955 = vrot.slane %v4823, 1
      %v4956 = vsel %vm640, %v4953, %v4955
      %v4957 = vrot.slane %v4824, 1
      %v4958 = vsel %vm640, %v4955, %v4957
      %v4959 = vrot.slane %v4825, 1
      %v4960 = vsel %vm640, %v4957, %v4959
      %v4961 = vrot.slane %v4826, 1
      %v4962 = vsel %vm640, %v4959, %v4961
      %v4963 = vrot.slane %v4827, 1
      %v4964 = vsel %vm640, %v4961, %v4963
      %v4965 = vrot.slane %v4828, 1
      %v4966 = vsel %vm640, %v4963, %v4965
      %v4967 = vrot.slane %v4829, 1
      %v4968 = vsel %vm640, %v4965, %v4967
      %v4969 = vrot.slane %v4830, 1
      %v4970 = vsel %vm640, %v4967, %v4969
      %s4983 = scalar_lea.vmem %s3, 384
      %v4984 = vld [vmem:[%s4983] sm:$0xf]
      %v4985 = vld [vmem:[%s4983 + $0x4] sm:$0xf]
      %v4986 = vld [vmem:[%s4983 + $0x8] sm:$0xf]
      %v4987 = vld [vmem:[%s4983 + $0xc] sm:$0xf]
      %v4988 = vld [vmem:[%s4983 + $0x10] sm:$0xf]
      %v4989 = vld [vmem:[%s4983 + $0x14] sm:$0xf]
      %v4990 = vld [vmem:[%s4983 + $0x18] sm:$0xf]
      %v4991 = vld [vmem:[%s4983 + $0x1c] sm:$0xf]
      %v4992 = vld [vmem:[%s4983 + $0x20] sm:$0xf]
      %v4993 = vld [vmem:[%s4983 + $0x24] sm:$0xf]
      %v4994 = vld [vmem:[%s4983 + $0x28] sm:$0xf]
      %v4995 = vld [vmem:[%s4983 + $0x2c] sm:$0xf]
      %v4996 = vld [vmem:[%s4983 + $0x30] sm:$0xf]
      %v4997 = vld [vmem:[%s4983 + $0x34] sm:$0xf]
      %v4998 = vld [vmem:[%s4983 + $0x38] sm:$0xf]
      %v4999 = vld [vmem:[%s4983 + $0x3c] sm:$0xf]
      %v5000 = vld [vmem:[%s4983 + $0x40] sm:$0xf]
      %v5001 = vld [vmem:[%s4983 + $0x44] sm:$0xf]
      %v5002 = vld [vmem:[%s4983 + $0x48] sm:$0xf]
      %v5003 = vld [vmem:[%s4983 + $0x4c] sm:$0xf]
      %v5004 = vld [vmem:[%s4983 + $0x50] sm:$0xf]
      %v5005 = vld [vmem:[%s4983 + $0x54] sm:$0xf]
      %v5006 = vld [vmem:[%s4983 + $0x58] sm:$0xf]
      %v5007 = vld [vmem:[%s4983 + $0x5c] sm:$0xf]
      %v5008 = vld [vmem:[%s4983 + $0x60] sm:$0xf]
      %v5009 = vld [vmem:[%s4983 + $0x64] sm:$0xf]
      %v5010 = vld [vmem:[%s4983 + $0x68] sm:$0xf]
      %v5011 = vld [vmem:[%s4983 + $0x6c] sm:$0xf]
      %v5012 = vld [vmem:[%s4983 + $0x70] sm:$0xf]
      %v5013 = vld [vmem:[%s4983 + $0x74] sm:$0xf]
      %v5014 = vld [vmem:[%s4983 + $0x78] sm:$0xf]
      %v5015 = vld [vmem:[%s4983 + $0x7c] sm:$0xf]
      %v5016 = vld [vmem:[%s4983 + $0x80] sm:$0xf]
      %v5017 = vld [vmem:[%s4983 + $0x84] sm:$0xf]
      %v5018 = vld [vmem:[%s4983 + $0x88] sm:$0xf]
      %v5019 = vld [vmem:[%s4983 + $0x8c] sm:$0xf]
      %v5020 = vld [vmem:[%s4983 + $0x90] sm:$0xf]
      %v5021 = vld [vmem:[%s4983 + $0x94] sm:$0xf]
      %v5022 = vld [vmem:[%s4983 + $0x98] sm:$0xf]
      %v5023 = vld [vmem:[%s4983 + $0x9c] sm:$0xf]
      %v5024 = vld [vmem:[%s4983 + $0xa0] sm:$0xf]
      %v5025 = vld [vmem:[%s4983 + $0xa4] sm:$0xf]
      %v5026 = vld [vmem:[%s4983 + $0xa8] sm:$0xf]
      %v5027 = vld [vmem:[%s4983 + $0xac] sm:$0xf]
      %v5028 = vld [vmem:[%s4983 + $0xb0] sm:$0xf]
      %v5029 = vld [vmem:[%s4983 + $0xb4] sm:$0xf]
      %v5030 = vld [vmem:[%s4983 + $0xb8] sm:$0xf]
      %v5031 = vld [vmem:[%s4983 + $0xbc] sm:$0xf]
      %v5080 = vunpack.c.l.b16 %v4984
      %v5081 = vunpack.c.l.b16 %v4985
      %v5082 = vunpack.c.l.b16 %v4986
      %v5083 = vunpack.c.l.b16 %v4987
      %v5084 = vunpack.c.l.b16 %v4988
      %v5085 = vunpack.c.l.b16 %v4989
      %v5086 = vunpack.c.l.b16 %v4990
      %v5087 = vunpack.c.l.b16 %v4991
      %v5088 = vunpack.c.l.b16 %v4992
      %v5089 = vunpack.c.l.b16 %v4993
      %v5090 = vunpack.c.l.b16 %v4994
      %v5091 = vunpack.c.l.b16 %v4995
      %v5092 = vunpack.c.l.b16 %v4996
      %v5093 = vunpack.c.l.b16 %v4997
      %v5094 = vunpack.c.l.b16 %v4998
      %v5095 = vunpack.c.l.b16 %v4999
      %v5096 = vunpack.c.l.b16 %v5000
      %v5097 = vunpack.c.l.b16 %v5001
      %v5098 = vunpack.c.l.b16 %v5002
      %v5099 = vunpack.c.l.b16 %v5003
      %v5100 = vunpack.c.l.b16 %v5004
      %v5101 = vunpack.c.l.b16 %v5005
      %v5102 = vunpack.c.l.b16 %v5006
      %v5103 = vunpack.c.l.b16 %v5007
      %v5104 = vunpack.c.l.b16 %v5008
      %v5105 = vunpack.c.l.b16 %v5009
      %v5106 = vunpack.c.l.b16 %v5010
      %v5107 = vunpack.c.l.b16 %v5011
      %v5108 = vunpack.c.l.b16 %v5012
      %v5109 = vunpack.c.l.b16 %v5013
      %v5110 = vunpack.c.l.b16 %v5014
      %v5111 = vunpack.c.l.b16 %v5015
      %v5112 = vunpack.c.l.b16 %v5016
      %v5113 = vunpack.c.l.b16 %v5017
      %v5114 = vunpack.c.l.b16 %v5018
      %v5115 = vunpack.c.l.b16 %v5019
      %v5116 = vunpack.c.l.b16 %v5020
      %v5117 = vunpack.c.l.b16 %v5021
      %v5118 = vunpack.c.l.b16 %v5022
      %v5119 = vunpack.c.l.b16 %v5023
      %v5120 = vunpack.c.l.b16 %v5024
      %v5121 = vunpack.c.l.b16 %v5025
      %v5122 = vunpack.c.l.b16 %v5026
      %v5123 = vunpack.c.l.b16 %v5027
      %v5124 = vunpack.c.l.b16 %v5028
      %v5125 = vunpack.c.l.b16 %v5029
      %v5126 = vunpack.c.l.b16 %v5030
      %v5127 = vunpack.c.l.b16 %v5031
      %v5128 = vpack.c.b16 %v5081, %v5080
      %v5129 = vpack.c.b16 %v5083, %v5082
      %v5130 = vpack.c.b16 %v5085, %v5084
      %v5131 = vpack.c.b16 %v5087, %v5086
      %v5132 = vpack.c.b16 %v5089, %v5088
      %v5133 = vpack.c.b16 %v5091, %v5090
      %v5134 = vpack.c.b16 %v5093, %v5092
      %v5135 = vpack.c.b16 %v5095, %v5094
      %v5136 = vpack.c.b16 %v5097, %v5096
      %v5137 = vpack.c.b16 %v5099, %v5098
      %v5138 = vpack.c.b16 %v5101, %v5100
      %v5139 = vpack.c.b16 %v5103, %v5102
      %v5140 = vpack.c.b16 %v5105, %v5104
      %v5141 = vpack.c.b16 %v5107, %v5106
      %v5142 = vpack.c.b16 %v5109, %v5108
      %v5143 = vpack.c.b16 %v5111, %v5110
      %v5144 = vpack.c.b16 %v5113, %v5112
      %v5145 = vpack.c.b16 %v5115, %v5114
      %v5146 = vpack.c.b16 %v5117, %v5116
      %v5147 = vpack.c.b16 %v5119, %v5118
      %v5148 = vpack.c.b16 %v5121, %v5120
      %v5149 = vpack.c.b16 %v5123, %v5122
      %v5150 = vpack.c.b16 %v5125, %v5124
      %v5151 = vpack.c.b16 %v5127, %v5126
      %5176 = vmatprep.subr.bf16.mxu0 0
      %5177 = vmatpush1.bf16.msra.mxu0 %v5128
      %5178 = vmatprep.subr.bf16.mxu0 0
      %5179 = vmatpush1.bf16.msra.mxu0 %v5129
      %5180 = vmatprep.subr.bf16.mxu0 0
      %5181 = vmatpush1.bf16.msra.mxu0 %v5130
      %5182 = vmatprep.subr.bf16.mxu0 0
      %5183 = vmatpush1.bf16.msra.mxu0 %v5131
      %5184 = vmatprep.subr.bf16.mxu0 0
      %5185 = vmatpush1.bf16.msra.mxu0 %v5132
      %5186 = vmatprep.subr.bf16.mxu0 0
      %5187 = vmatpush1.bf16.msra.mxu0 %v5133
      %5188 = vmatprep.subr.bf16.mxu0 0
      %5189 = vmatpush1.bf16.msra.mxu0 %v5134
      %5190 = vmatprep.subr.bf16.mxu0 0
      %5191 = vmatpush1.bf16.msra.mxu0 %v5135
      %5192 = vmatprep.subr.bf16.mxu0 0
      %5193 = vmatpush1.bf16.msra.mxu0 %v5136
      %5194 = vmatprep.subr.bf16.mxu0 0
      %5195 = vmatpush1.bf16.msra.mxu0 %v5137
      %5196 = vmatprep.subr.bf16.mxu0 0
      %5197 = vmatpush1.bf16.msra.mxu0 %v5138
      %5198 = vmatprep.subr.bf16.mxu0 0
      %5199 = vmatpush1.bf16.msra.mxu0 %v5139
      %5200 = vmatprep.subr.bf16.mxu0 0
      %5201 = vmatpush1.bf16.msra.mxu0 %v5140
      %5202 = vmatprep.subr.bf16.mxu0 0
      %5203 = vmatpush1.bf16.msra.mxu0 %v5141
      %5204 = vmatprep.subr.bf16.mxu0 0
      %5205 = vmatpush1.bf16.msra.mxu0 %v5142
      %5206 = vmatprep.subr.bf16.mxu0 0
      %5207 = vmatpush1.bf16.msra.mxu0 %v5143
      %5208 = vmatprep.mubr.bf16.mxu0 %v4842
      %5209 = vmatmul.mubr.bf16.gmra.mrb[0].mxu0 %v4744
      %v5210 = vpop.f32.mrb[0].mxu0
      %v5211 = vadd.f32 0.0, %v5210
      %v5212 = vpop.f32.mrb[0].mxu0
      %v5213 = vpop.f32.mrb[0].mxu0
      %v5214 = vadd.f32 0.0, %v5213
      %v5215 = vpop.f32.mrb[0].mxu0
      %5216 = vmatprep.mubr.bf16.mxu0 %v4850
      %5217 = vmatmul.mubr.bf16.gmra.mrb[0].mxu0 %v4745
      %v5218 = vpop.f32.mrb[0].mxu0
      %v5219 = vpop.f32.mrb[0].mxu0
      %v5220 = vpop.f32.mrb[0].mxu0
      %v5221 = vadd.f32 0.0, %v5220
      %v5222 = vpop.f32.mrb[0].mxu0
      %5223 = vmatprep.mubr.bf16.mxu0 %v4858
      %5224 = vmatmul.mubr.bf16.gmra.mrb[0].mxu0 %v4746
      %v5225 = vpop.f32.mrb[0].mxu0
      %v5226 = vadd.f32 0.0, %v5225
      %v5227 = vpop.f32.mrb[0].mxu0
      %v5228 = vpop.f32.mrb[0].mxu0
      %v5229 = vpop.f32.mrb[0].mxu0
      %5230 = vmatprep.mubr.bf16.mxu0 %v4866
      %5231 = vmatmul.mubr.bf16.gmra.mrb[0].mxu0 %v4747
      %v5232 = vpop.f32.mrb[0].mxu0
      %v5233 = vadd.f32 0.0, %v5232
      %v5234 = vpop.f32.mrb[0].mxu0
      %v5235 = vpop.f32.mrb[0].mxu0
      %v5236 = vadd.f32 0.0, %v5235
      %v5237 = vpop.f32.mrb[0].mxu0
      %5238 = vmatprep.mubr.bf16.mxu0 %v4874
      %5239 = vmatmul.mubr.bf16.gmra.mrb[0].mxu0 %v4748
      %v5240 = vpop.f32.mrb[0].mxu0
      %v5241 = vpop.f32.mrb[0].mxu0
      %v5242 = vpop.f32.mrb[0].mxu0
      %v5243 = vadd.f32 0.0, %v5242
      %v5244 = vpop.f32.mrb[0].mxu0
      %5245 = vmatprep.mubr.bf16.mxu0 %v4882
      %5246 = vmatmul.mubr.bf16.gmra.mrb[0].mxu0 %v4749
      %v5247 = vpop.f32.mrb[0].mxu0
      %v5248 = vadd.f32 0.0, %v5247
      %v5249 = vpop.f32.mrb[0].mxu0
      %v5250 = vpop.f32.mrb[0].mxu0
      %v5251 = vpop.f32.mrb[0].mxu0
      %5252 = vmatprep.mubr.bf16.mxu0 %v4890
      %5253 = vmatmul.mubr.bf16.gmra.mrb[0].mxu0 %v4750
      %v5254 = vpop.f32.mrb[0].mxu0
      %v5255 = vadd.f32 0.0, %v5254
      %v5256 = vpop.f32.mrb[0].mxu0
      %v5257 = vpop.f32.mrb[0].mxu0
      %v5258 = vadd.f32 0.0, %v5257
      %v5259 = vpop.f32.mrb[0].mxu0
      %5260 = vmatprep.mubr.bf16.mxu0 %v4898
      %5261 = vmatmul.mubr.bf16.gmra.mrb[0].mxu0 %v4751
      %v5262 = vpop.f32.mrb[0].mxu0
      %v5263 = vpop.f32.mrb[0].mxu0
      %v5264 = vpop.f32.mrb[0].mxu0
      %v5265 = vadd.f32 0.0, %v5264
      %v5266 = vpop.f32.mrb[0].mxu0
      %5267 = vmatprep.mubr.bf16.mxu0 %v4906
      %5268 = vmatmul.mubr.bf16.gmra.mrb[0].mxu0 %v4752
      %v5269 = vpop.f32.mrb[0].mxu0
      %v5270 = vadd.f32 0.0, %v5269
      %v5271 = vpop.f32.mrb[0].mxu0
      %v5272 = vpop.f32.mrb[0].mxu0
      %v5273 = vpop.f32.mrb[0].mxu0
      %5274 = vmatprep.mubr.bf16.mxu0 %v4914
      %5275 = vmatmul.mubr.bf16.gmra.mrb[0].mxu0 %v4753
      %v5276 = vpop.f32.mrb[0].mxu0
      %v5277 = vadd.f32 0.0, %v5276
      %v5278 = vpop.f32.mrb[0].mxu0
      %v5279 = vpop.f32.mrb[0].mxu0
      %v5280 = vadd.f32 0.0, %v5279
      %v5281 = vpop.f32.mrb[0].mxu0
      %5282 = vmatprep.mubr.bf16.mxu0 %v4922
      %5283 = vmatmul.mubr.bf16.gmra.mrb[0].mxu0 %v4754
      %v5284 = vpop.f32.mrb[0].mxu0
      %v5285 = vpop.f32.mrb[0].mxu0
      %v5286 = vpop.f32.mrb[0].mxu0
      %v5287 = vadd.f32 0.0, %v5286
      %v5288 = vpop.f32.mrb[0].mxu0
      %5289 = vmatprep.mubr.bf16.mxu0 %v4930
      %5290 = vmatmul.mubr.bf16.gmra.mrb[0].mxu0 %v4755
      %v5291 = vpop.f32.mrb[0].mxu0
      %v5292 = vadd.f32 0.0, %v5291
      %v5293 = vpop.f32.mrb[0].mxu0
      %v5294 = vpop.f32.mrb[0].mxu0
      %v5295 = vpop.f32.mrb[0].mxu0
      %5296 = vdwg.mxu0
      %5297 = vmatprep.subr.bf16.mxu0 0
      %5298 = vmatpush1.bf16.msra.mxu0 %v5144
      %5299 = vmatprep.subr.bf16.mxu0 0
      %5300 = vmatpush1.bf16.msra.mxu0 %v5145
      %5301 = vmatprep.subr.bf16.mxu0 0
      %5302 = vmatpush1.bf16.msra.mxu0 %v5146
      %5303 = vmatprep.subr.bf16.mxu0 0
      %5304 = vmatpush1.bf16.msra.mxu0 %v5147
      %5305 = vmatprep.subr.bf16.mxu0 0
      %5306 = vmatpush1.bf16.msra.mxu0 %v5148
      %5307 = vmatprep.subr.bf16.mxu0 0
      %5308 = vmatpush1.bf16.msra.mxu0 %v5149
      %5309 = vmatprep.subr.bf16.mxu0 0
      %5310 = vmatpush1.bf16.msra.mxu0 %v5150
      %5311 = vmatprep.subr.bf16.mxu0 0
      %5312 = vmatpush1.bf16.msra.mxu0 %v5151
      %5313 = vmatprep.subr.bf16.mxu0 0
      %5314 = vmatpush1.bf16.msra.mxu0 0
      %5315 = vmatprep.subr.bf16.mxu0 0
      %5316 = vmatpush1.bf16.msra.mxu0 0
      %5317 = vmatprep.subr.bf16.mxu0 0
      %5318 = vmatpush1.bf16.msra.mxu0 0
      %5319 = vmatprep.subr.bf16.mxu0 0
      %5320 = vmatpush1.bf16.msra.mxu0 0
      %5321 = vmatprep.subr.bf16.mxu0 0
      %5322 = vmatpush1.bf16.msra.mxu0 0
      %5323 = vmatprep.subr.bf16.mxu0 0
      %5324 = vmatpush1.bf16.msra.mxu0 0
      %5325 = vmatprep.subr.bf16.mxu0 0
      %5326 = vmatpush1.bf16.msra.mxu0 0
      %5327 = vmatprep.subr.bf16.mxu0 0
      %5328 = vmatpush1.bf16.msra.mxu0 0
      %5329 = vmatprep.mubr.bf16.mxu0 0
      %5330 = vmatmul.mubr.bf16.gmra.mrb[0].mxu0 %v4948
      %v5331 = vpop.f32.mrb[0].mxu0
      %v5332 = vadd.f32 %v5211, %v5331
      %v5333 = vpop.f32.mrb[0].mxu0
      %v5334 = vpop.f32.mrb[0].mxu0
      %v5335 = vadd.f32 %v5214, %v5334
      %v5336 = vpop.f32.mrb[0].mxu0
      %5337 = vmatprep.mubr.bf16.mxu0 0
      %5338 = vmatmul.mubr.bf16.gmra.mrb[0].mxu0 %v4950
      %v5339 = vpop.f32.mrb[0].mxu0
      %v5340 = vpop.f32.mrb[0].mxu0
      %v5341 = vpop.f32.mrb[0].mxu0
      %v5342 = vadd.f32 %v5221, %v5341
      %v5343 = vpop.f32.mrb[0].mxu0
      %5344 = vmatprep.mubr.bf16.mxu0 0
      %5345 = vmatmul.mubr.bf16.gmra.mrb[0].mxu0 %v4952
      %v5346 = vpop.f32.mrb[0].mxu0
      %v5347 = vadd.f32 %v5226, %v5346
      %v5348 = vpop.f32.mrb[0].mxu0
      %v5349 = vpop.f32.mrb[0].mxu0
      %v5350 = vpop.f32.mrb[0].mxu0
      %5351 = vmatprep.mubr.bf16.mxu0 0
      %5352 = vmatmul.mubr.bf16.gmra.mrb[0].mxu0 %v4954
      %v5353 = vpop.f32.mrb[0].mxu0
      %v5354 = vadd.f32 %v5233, %v5353
      %v5355 = vpop.f32.mrb[0].mxu0
      %v5356 = vpop.f32.mrb[0].mxu0
      %v5357 = vadd.f32 %v5236, %v5356
      %v5358 = vpop.f32.mrb[0].mxu0
      %5359 = vmatprep.mubr.bf16.mxu0 0
      %5360 = vmatmul.mubr.bf16.gmra.mrb[0].mxu0 %v4956
      %v5361 = vpop.f32.mrb[0].mxu0
      %v5362 = vpop.f32.mrb[0].mxu0
      %v5363 = vpop.f32.mrb[0].mxu0
      %v5364 = vadd.f32 %v5243, %v5363
      %v5365 = vpop.f32.mrb[0].mxu0
      %5366 = vmatprep.mubr.bf16.mxu0 0
      %5367 = vmatmul.mubr.bf16.gmra.mrb[0].mxu0 %v4958
      %v5368 = vpop.f32.mrb[0].mxu0
      %v5369 = vadd.f32 %v5248, %v5368
      %v5370 = vpop.f32.mrb[0].mxu0
      %v5371 = vpop.f32.mrb[0].mxu0
      %v5372 = vpop.f32.mrb[0].mxu0
      %5373 = vmatprep.mubr.bf16.mxu0 0
      %5374 = vmatmul.mubr.bf16.gmra.mrb[0].mxu0 %v4960
      %v5375 = vpop.f32.mrb[0].mxu0
      %v5376 = vadd.f32 %v5255, %v5375
      %v5377 = vpop.f32.mrb[0].mxu0
      %v5378 = vpop.f32.mrb[0].mxu0
      %v5379 = vadd.f32 %v5258, %v5378
      %v5380 = vpop.f32.mrb[0].mxu0
      %5381 = vmatprep.mubr.bf16.mxu0 0
      %5382 = vmatmul.mubr.bf16.gmra.mrb[0].mxu0 %v4962
      %v5383 = vpop.f32.mrb[0].mxu0
      %v5384 = vpop.f32.mrb[0].mxu0
      %v5385 = vpop.f32.mrb[0].mxu0
      %v5386 = vadd.f32 %v5265, %v5385
      %v5387 = vpop.f32.mrb[0].mxu0
      %5388 = vmatprep.mubr.bf16.mxu0 0
      %5389 = vmatmul.mubr.bf16.gmra.mrb[0].mxu0 %v4964
      %v5390 = vpop.f32.mrb[0].mxu0
      %v5391 = vadd.f32 %v5270, %v5390
      %v5392 = vpop.f32.mrb[0].mxu0
      %v5393 = vpop.f32.mrb[0].mxu0
      %v5394 = vpop.f32.mrb[0].mxu0
      %5395 = vmatprep.mubr.bf16.mxu0 0
      %5396 = vmatmul.mubr.bf16.gmra.mrb[0].mxu0 %v4966
      %v5397 = vpop.f32.mrb[0].mxu0
      %v5398 = vadd.f32 %v5277, %v5397
      %v5399 = vpop.f32.mrb[0].mxu0
      %v5400 = vpop.f32.mrb[0].mxu0
      %v5401 = vadd.f32 %v5280, %v5400
      %v5402 = vpop.f32.mrb[0].mxu0
      %5403 = vmatprep.mubr.bf16.mxu0 0
      %5404 = vmatmul.mubr.bf16.gmra.mrb[0].mxu0 %v4968
      %v5405 = vpop.f32.mrb[0].mxu0
      %v5406 = vpop.f32.mrb[0].mxu0
      %v5407 = vpop.f32.mrb[0].mxu0
      %v5408 = vadd.f32 %v5287, %v5407
      %v5409 = vpop.f32.mrb[0].mxu0
      %5410 = vmatprep.mubr.bf16.mxu0 0
      %5411 = vmatmul.mubr.bf16.gmra.mrb[0].mxu0 %v4970
      %v5412 = vpop.f32.mrb[0].mxu0
      %v5413 = vadd.f32 %v5292, %v5412
      %v5414 = vpop.f32.mrb[0].mxu0
      %v5415 = vpop.f32.mrb[0].mxu0
      %v5416 = vpop.f32.mrb[0].mxu0
      %5417 = vdwg.mxu0
      %v5418 = vadd.f32 %v4560, %v5332
      %v5419 = vadd.f32 %v4563, %v5335
      %v5420 = vadd.f32 %v4570, %v5342
      %v5421 = vadd.f32 %v4575, %v5347
      %v5422 = vadd.f32 %v4582, %v5354
      %v5423 = vadd.f32 %v4585, %v5357
      %v5424 = vadd.f32 %v4592, %v5364
      %v5425 = vadd.f32 %v4597, %v5369
      %v5426 = vadd.f32 %v4604, %v5376
      %v5427 = vadd.f32 %v4607, %v5379
      %v5428 = vadd.f32 %v4614, %v5386
      %v5429 = vadd.f32 %v4619, %v5391
      %v5430 = vadd.f32 %v4626, %v5398
      %v5431 = vadd.f32 %v4629, %v5401
      %v5432 = vadd.f32 %v4636, %v5408
      %v5433 = vadd.f32 %v4641, %v5413
      %v5434 = vld [vmem:[%s4] sm:$0x1]
      %v5436 = vlaneseq
      %v5437 = vshrl.u32 %v5436, 7
      %v5438 = vsub.s32 0, %v5437
      %v5439 = vrot.slane %v5434, %v5438
      %v5441 = vadd.f32 %v5418, %v5439
      %v5442 = vadd.f32 %v5419, %v5439
      %v5443 = vadd.f32 %v5420, %v5439
      %v5444 = vadd.f32 %v5421, %v5439
      %v5445 = vadd.f32 %v5422, %v5439
      %v5446 = vadd.f32 %v5423, %v5439
      %v5447 = vadd.f32 %v5424, %v5439
      %v5448 = vadd.f32 %v5425, %v5439
      %v5449 = vadd.f32 %v5426, %v5439
      %v5450 = vadd.f32 %v5427, %v5439
      %v5451 = vadd.f32 %v5428, %v5439
      %v5452 = vadd.f32 %v5429, %v5439
      %v5453 = vadd.f32 %v5430, %v5439
      %v5454 = vadd.f32 %v5431, %v5439
      %v5455 = vadd.f32 %v5432, %v5439
      %v5456 = vadd.f32 %v5433, %v5439
      %v5457 = vmax.f32 %v5441, 0.0
      %v5458 = vmax.f32 %v5442, 0.0
      %v5459 = vmax.f32 %v5443, 0.0
      %v5460 = vmax.f32 %v5444, 0.0
      %v5461 = vmax.f32 %v5445, 0.0
      %v5462 = vmax.f32 %v5446, 0.0
      %v5463 = vmax.f32 %v5447, 0.0
      %v5464 = vmax.f32 %v5448, 0.0
      %v5465 = vmax.f32 %v5449, 0.0
      %v5466 = vmax.f32 %v5450, 0.0
      %v5467 = vmax.f32 %v5451, 0.0
      %v5468 = vmax.f32 %v5452, 0.0
      %v5469 = vmax.f32 %v5453, 0.0
      %v5470 = vmax.f32 %v5454, 0.0
      %v5471 = vmax.f32 %v5455, 0.0
      %v5472 = vmax.f32 %v5456, 0.0
      %5473 = vst [vmem:[%s270] sm:$0xff] %v5457
      %5474 = vst [vmem:[%s270 + $0x8] sm:$0xff] %v5458
      %5475 = vst [vmem:[%s270 + $0x10] sm:$0xff] %v5459
      %5476 = vst [vmem:[%s270 + $0x18] sm:$0xff] %v5460
      %5477 = vst [vmem:[%s270 + $0x20] sm:$0xff] %v5461
      %5478 = vst [vmem:[%s270 + $0x28] sm:$0xff] %v5462
      %5479 = vst [vmem:[%s270 + $0x30] sm:$0xff] %v5463
      %5480 = vst [vmem:[%s270 + $0x38] sm:$0xff] %v5464
      %5481 = vst [vmem:[%s270 + $0x40] sm:$0xff] %v5465
      %5482 = vst [vmem:[%s270 + $0x48] sm:$0xff] %v5466
      %5483 = vst [vmem:[%s270 + $0x50] sm:$0xff] %v5467
      %5484 = vst [vmem:[%s270 + $0x58] sm:$0xff] %v5468
      %5485 = vst [vmem:[%s270 + $0x60] sm:$0xff] %v5469
      %5486 = vst [vmem:[%s270 + $0x68] sm:$0xff] %v5470
      %5487 = vst [vmem:[%s270 + $0x70] sm:$0xff] %v5471
      %5488 = vst [vmem:[%s270 + $0x78] sm:$0xff] %v5472
      %v5489 = vld [vmem:[%s270] ss:$2 sm:$0xff]
      %s5490 = scalar_lea.vmem %s270, 16
      %v5491 = vld [vmem:[%s5490] ss:$2 sm:$0xff]
      %s5492 = scalar_lea.vmem %s270, 32
      %v5493 = vld [vmem:[%s5492] ss:$2 sm:$0xff]
      %s5494 = scalar_lea.vmem %s270, 48
      %v5495 = vld [vmem:[%s5494] ss:$2 sm:$0xff]
      %s5496 = scalar_lea.vmem %s270, 64
      %v5497 = vld [vmem:[%s5496] ss:$2 sm:$0xff]
      %s5498 = scalar_lea.vmem %s270, 80
      %v5499 = vld [vmem:[%s5498] ss:$2 sm:$0xff]
      %s5500 = scalar_lea.vmem %s270, 96
      %v5501 = vld [vmem:[%s5500] ss:$2 sm:$0xff]
      %s5502 = scalar_lea.vmem %s270, 112
      %v5503 = vld [vmem:[%s5502] ss:$2 sm:$0xff]
      %s5504 = scalar_lea.vmem %s270, 1
      %v5505 = vld [vmem:[%s5504] ss:$2 sm:$0xff]
      %s5506 = scalar_lea.vmem %s270, 17
      %v5507 = vld [vmem:[%s5506] ss:$2 sm:$0xff]
      %s5508 = scalar_lea.vmem %s270, 33
      %v5509 = vld [vmem:[%s5508] ss:$2 sm:$0xff]
      %s5510 = scalar_lea.vmem %s270, 49
      %v5511 = vld [vmem:[%s5510] ss:$2 sm:$0xff]
      %s5512 = scalar_lea.vmem %s270, 65
      %v5513 = vld [vmem:[%s5512] ss:$2 sm:$0xff]
      %s5514 = scalar_lea.vmem %s270, 81
      %v5515 = vld [vmem:[%s5514] ss:$2 sm:$0xff]
      %s5516 = scalar_lea.vmem %s270, 97
      %v5517 = vld [vmem:[%s5516] ss:$2 sm:$0xff]
      %s5518 = scalar_lea.vmem %s270, 113
      %v5519 = vld [vmem:[%s5518] ss:$2 sm:$0xff]
      %v5520 = vmax.f32 %v5489, %v5505
      %v5521 = vmax.f32 %v5491, %v5507
      %v5522 = vmax.f32 %v5493, %v5509
      %v5523 = vmax.f32 %v5495, %v5511
      %v5524 = vmax.f32 %v5497, %v5513
      %v5525 = vmax.f32 %v5499, %v5515
      %v5526 = vmax.f32 %v5501, %v5517
      %v5527 = vmax.f32 %v5503, %v5519
      %v5528 = vmax.f32 %v5520, %v5521
      %v5529 = vmax.f32 %v5522, %v5523
      %v5530 = vmax.f32 %v5524, %v5525
      %v5531 = vmax.f32 %v5526, %v5527
      %5532 = vst [vmem:[%s280] sm:$0xff] %v5528
      %5533 = vst [vmem:[%s280 + $0x8] sm:$0xff] %v5529
      %5534 = vst [vmem:[%s280 + $0x10] sm:$0xff] %v5530
      %5535 = vst [vmem:[%s280 + $0x18] sm:$0xff] %v5531
      %s5536 = smul.u32 8, %s24
      %p5537 = scmp.lt.s32.totalorder %s23, 1
      %s5538 = scalar_select %p5537, %s23, 1
      %p5539 = scmp.lt.s32.totalorder %s5536, 15
      %s5540 = scalar_select %p5539, %s5536, 15
      %s5541 = smul.addr %s5540, 2
      %s5542 = smul.addr %s5538, 32
      %s5543 = sadd.s32 %s5541, %s5542
      %s5544 = smul.addr %s5543, 8
      %s5545 = scalar_lea.vmem %s6, %s5544
      %s5546 = smul.u32 4, %s24
      %p5547 = scmp.lt.s32.totalorder %s23, 1
      %s5548 = scalar_select %p5547, %s23, 1
      %p5549 = scmp.lt.s32.totalorder %s5546, 7
      %s5550 = scalar_select %p5549, %s5546, 7
      %s5551 = smul.addr %s5548, 8
      %s5552 = sadd.s32 %s5550, %s5551
      %s5553 = smul.addr %s5552, 8
      %s5554 = scalar_lea.vmem %s7, %s5553
      // Predicated region
      $region83: #{down_sample.1} parent=39 // pred_check
        %p5555 = pneg %p156
      $region84: #{down_sample.1} parent=39 // pred_check_branch
        %5557 = sbr.rel (%p5555) target = $region86
      $region85: #{down_sample.1} parent=39 // pred_region
        %s5558 = smul.u32 8, %s24
      $region86: #{down_sample.1} parent=39 // pred_fallthru
        _
      // Predicated region
      $region87: #{down_sample.1} parent=39 // pred_check
        %p5559 = pneg %p184
      $region88: #{down_sample.1} parent=39 // pred_check_branch
        %5561 = sbr.rel (%p5559) target = $region90
      $region89: #{down_sample.1} parent=39 // pred_region
        %s5562 = smul.u32 4, %s24
      $region90: #{down_sample.1} parent=39 // pred_fallthru
        _
    $region40: #{down_sample.1} parent=5 // pred_fallthru
      _
    %p5563 = scmp.le.s32.totalorder 2, %s14
    // Predicated region
    $region91: #{down_sample.1} parent=5 // pred_check
      %p5564 = pneg %p5563
    $region92: #{down_sample.1} parent=5 // pred_check_branch
      %5566 = sbr.rel (%p5564) target = $region94
    $region93: #{down_sample.1} parent=5 // pred_region
      %s5567 = ssub.s32 %s14, 2
      // Predicated region
      $region95: #{down_sample.1} parent=93 // pred_check
        %p5568 = pneg %p162
      $region96: #{down_sample.1} parent=93 // pred_check_branch
        %5570 = sbr.rel (%p5568) target = $region98
      $region97: #{down_sample.1} parent=93 // pred_region
        %s5571 = smul.u32 8, %s26
        %p5572 = scmp.lt.s32.totalorder %s25, 1
        %s5573 = scalar_select %p5572, %s25, 1
        %p5574 = scmp.lt.s32.totalorder %s5571, 15
        %s5575 = scalar_select %p5574, %s5571, 15
        %s5576 = smul.addr %s5575, 2
        %s5577 = smul.addr %s5573, 32
        %s5578 = sadd.s32 %s5576, %s5577
        %s5579 = smul.addr %s5578, 8
        %s5580 = scalar_lea.vmem %s6, %s5579
      $region98: #{down_sample.1} parent=93 // pred_fallthru
        _
      // Predicated region
      $region99: #{down_sample.1} parent=93 // pred_check
        %p5581 = pneg %p190
      $region100: #{down_sample.1} parent=93 // pred_check_branch
        %5583 = sbr.rel (%p5581) target = $region102
      $region101: #{down_sample.1} parent=93 // pred_region
        %s5584 = smul.u32 4, %s26
        %p5585 = scmp.lt.s32.totalorder %s25, 1
        %s5586 = scalar_select %p5585, %s25, 1
        %p5587 = scmp.lt.s32.totalorder %s5584, 7
        %s5588 = scalar_select %p5587, %s5584, 7
        %s5589 = smul.addr %s5586, 8
        %s5590 = sadd.s32 %s5588, %s5589
        %s5591 = smul.addr %s5590, 8
        %s5592 = scalar_lea.vmem %s7, %s5591
      $region102: #{down_sample.1} parent=93 // pred_fallthru
        _
    $region94: #{down_sample.1} parent=5 // pred_fallthru
      _
  $region6: #{down_sample.1} parent=0 // loop_footer
    %s18 = sadd.s32 1, %s14
  $region7: #{down_sample.1} parent=0 // loop_footer_branch
    %13 = sbr.rel target = $region3
  $region8: #{down_sample.1} parent=0 // loop_exit
    _
  %5593 = vsyncmov [#allocation4]
  %s5594 = vpop.sfrf %5593
  %p5595 = scmp.eq.s32.totalorder %s5594, 0
  %p5596 = pneg %p5595
  %5598 = shalt.err (%p5596)

</llo_original>
